<compile_context>
chip_gen: v7x
topology: tpu7x:2x2x1
jax: 0.10.0
libtpu: 0.0.40
codegen_flags: <defaults>
</compile_context>

<pallas_src>
import functools
import math
from math import ceil

import jax
import jax.numpy as jnp
from jax import lax
from jax.experimental import pallas as pl
from jax.experimental.pallas import tpu as pltpu


# ----------------------------------------------------------------------------
# Packed-slab layouts (shared by wrapper and kernel)
# ----------------------------------------------------------------------------

def _wh_layout(E, K1, K2, K3, H, OUT):
    off, c = {}, 0
    off["we"] = c; c += E
    off["mlp1"] = c; c += K1
    off["mlp2"] = c; c += K2
    off["mlp3"] = c; c += K3
    off["lin1"] = c; c += H
    off["ro"] = c; c += OUT
    return off, c


def _aux_layout(B, N, K1, K2, K3):
    BK1, BK2, BK3 = B * K1, B * K2, B * K3
    off, c = {}, 0
    off["cmask1"] = c; c += BK1
    off["cmask2"] = c; c += BK2
    off["cmask3"] = c; c += BK3
    off["agg1"] = c; c += BK1
    off["agg2"] = c; c += BK2
    off["mean"] = c; c += BK3
    off["bn2_g"] = c; c += 1
    off["bn2_b"] = c; c += 1
    off["bn3_g"] = c; c += 1
    off["bn3_b"] = c; c += 1
    return off, c


# ----------------------------------------------------------------------------
# Single fused Pallas kernel for the whole forward pass
# ----------------------------------------------------------------------------

def _make_fused_kernel(B, N, H, E, K1, K2, K3, OUT):
    scale = 1.0 / math.sqrt(H)
    BN, BK1, BK2, BK3 = B * N, B * K1, B * K2, B * K3
    whoff, _ = _wh_layout(E, K1, K2, K3, H, OUT)
    auxoff, _ = _aux_layout(B, N, K1, K2, K3)

    def kernel(x_ref, ef_ref, mask_ref, p_ref, adj_ref,
               wqkvs_ref, wh_ref, wc_ref, bias_ref, aux_ref, o_ref):
        f32 = jnp.float32

        # ------------- unpack packed slabs (static slices) ------------------
        wh = wh_ref[...]
        we     = wh[:, whoff["we"]:whoff["we"] + E]              # [H, E]
        mlp1_w = wh[:, whoff["mlp1"]:whoff["mlp1"] + K1]
        mlp2_w = wh[:, whoff["mlp2"]:whoff["mlp2"] + K2]
        mlp3_w = wh[:, whoff["mlp3"]:whoff["mlp3"] + K3]
        lin1_w = wh[:, whoff["lin1"]:whoff["lin1"] + H]
        ro_w   = wh[:, whoff["ro"]:whoff["ro"] + OUT]

        wc = wc_ref[...]
        wc2 = wc[:, 0:H]             # vstack([c2_rel_w, c2_root_w])  [2H, H]
        wc3 = wc[:, H:2 * H]

        bias = bias_ref[...]
        bqkvs    = bias[0:1, 0:4 * H]
        bn1_g    = bias[1:2, 0:H]
        bn1_b    = bias[2:3, 0:H]
        mlp1_b   = bias[3:4, 0:K1]
        mlp2_b   = bias[4:5, 0:K2]
        mlp3_b   = bias[5:6, 0:K3]
        c2_rel_b = bias[6:7, 0:H]
        c3_rel_b = bias[7:8, 0:H]
        lin1_b   = bias[8:9, 0:H]
        ro_b     = bias[9:10, 0:OUT]

        aux = aux_ref[...]
        cmask1 = aux[0:BN,  auxoff["cmask1"]:auxoff["cmask1"] + BK1]
        cmask2 = aux[0:BK1, auxoff["cmask2"]:auxoff["cmask2"] + BK2]
        cmask3 = aux[0:BK2, auxoff["cmask3"]:auxoff["cmask3"] + BK3]
        agg1   = aux[0:BK1, auxoff["agg1"]:auxoff["agg1"] + BK1]
        agg2   = aux[0:BK2, auxoff["agg2"]:auxoff["agg2"] + BK2]
        mean_m = aux[0:B,   auxoff["mean"]:auxoff["mean"] + BK3]
        bn2_g  = aux[0:BK1, auxoff["bn2_g"]:auxoff["bn2_g"] + 1]
        bn2_b  = aux[0:BK1, auxoff["bn2_b"]:auxoff["bn2_b"] + 1]
        bn3_g  = aux[0:BK2, auxoff["bn3_g"]:auxoff["bn3_g"] + 1]
        bn3_b  = aux[0:BK2, auxoff["bn3_b"]:auxoff["bn3_b"] + 1]

        # ------------- TransformerConv (heads=1, edge_dim=E), dense ---------
        x = x_ref[...]                                            # [Ntot, Fin]
        proj = (jnp.dot(x, wqkvs_ref[...], preferred_element_type=f32)
                + bqkvs)                                          # [Ntot, 4H]
        q = proj[:, 0 * H:1 * H]
        k = proj[:, 1 * H:2 * H]
        v = proj[:, 2 * H:3 * H]
        skip = proj[:, 3 * H:4 * H]

        mask = mask_ref[...]                                      # [Ntot, Ntot]
        ef = ef_ref[...]                                          # [Ntot, E, Ntot]

        # score[i, j] = (q_i . (k_j + W_e e_ij)) / sqrt(H)
        score = lax.dot_general(q, k, (((1,), (1,)), ((), ())),
                                preferred_element_type=f32)       # [Ntot, Ntot]
        qe = jnp.dot(q, we, preferred_element_type=f32)           # [Ntot, E]
        score = score + jnp.sum(ef * qe[:, :, None], axis=1)      # fused sweep
        score = score * scale
        score = jnp.where(mask > 0.0, score, -1e30)
        smax = jnp.max(score, axis=-1, keepdims=True)
        exs = jnp.exp(score - smax) * mask
        denom = jnp.sum(exs, axis=-1, keepdims=True)
        alpha = exs * pl.reciprocal(jnp.maximum(denom, 1e-16), approx=True)

        # out_i = sum_j alpha_ij (v_j + W_e e_ij) + lin_skip(x_i)
        out = jnp.dot(alpha, v, preferred_element_type=f32)       # [Ntot, H]
        aef = jnp.sum(ef * alpha[:, None, :], axis=2)             # [Ntot, E]
        out = out + lax.dot_general(aef, we, (((1,), (1,)), ((), ())),
                                    preferred_element_type=f32)   # [Ntot, H]
        out = out + skip

        # ------------- BatchNorm1d(H) (training stats) + ReLU ---------------
        mu = jnp.mean(out, axis=0, keepdims=True)
        var = jnp.mean((out - mu) ** 2, axis=0, keepdims=True)
        h1 = (out - mu) * lax.rsqrt(var + 1e-5)
        h1 = jnp.maximum(h1 * bn1_g + bn1_b, 0.0)

        # ------------- to_dense_batch (scatter expressed as a matmul) -------
        hd = lax.dot_general(p_ref[...], h1, (((0,), (0,)), ((), ())),
                             preferred_element_type=f32)          # [BN, H]
        adj = adj_ref[...]                                        # [BN, BN] blockdiag

        def softmax_rows(z):
            m = jnp.max(z, axis=-1, keepdims=True)
            ez = jnp.exp(z - m)
            return ez / jnp.sum(ez, axis=-1, keepdims=True)       # exact

        def mincut_pool(xall, aall, s_logits, cmask):
            # Batched (block-diagonal) dense_mincut_pool over all graphs.
            R = xall.shape[0]
            Kb = cmask.shape[1]
            s = softmax_rows(s_logits)                            # [R, K]
            s_bd = jnp.concatenate([s] * B, axis=1) * cmask       # [R, B*K]
            xa = jnp.concatenate([xall, aall], axis=1)            # [R, H+R]
            pooled = lax.dot_general(s_bd, xa, (((0,), (0,)), ((), ())),
                                     preferred_element_type=f32)  # [B*K, H+R]
            xp = pooled[:, 0:H]
            sta = pooled[:, H:H + R]                              # [B*K, R]
            ap = jnp.dot(sta, s_bd, preferred_element_type=f32)   # [B*K, B*K]
            ii = lax.broadcasted_iota(jnp.int32, (Kb, Kb), 0)
            jj = lax.broadcasted_iota(jnp.int32, (Kb, Kb), 1)
            ap = jnp.where(ii == jj, 0.0, ap)
            d = jnp.sqrt(jnp.sum(ap, axis=-1, keepdims=True)) + 1e-15
            ap = ap / d / jnp.transpose(d)                        # exact division
            return xp, ap

        def dgconv(xp, ap, wfused, brel):
            # lin_rel(adj @ x) + lin_root(x) as one matmul against [2H, H]
            agg = jnp.dot(ap, xp, preferred_element_type=f32)
            cat = jnp.concatenate([agg, xp], axis=1)              # [R, 2H]
            return jnp.dot(cat, wfused, preferred_element_type=f32) + brel

        def bn_relu_cluster(xall, aggm, g, beta):
            # BatchNorm1d over the cluster axis of [B, K, H]: per-cluster stats
            # over (batch, hidden), H kept lane-dense, batched over graphs via
            # the same-cluster indicator matrix `aggm` ([B*K, B*K]).
            inv_cnt = 1.0 / float(B * H)
            rs = jnp.sum(xall, axis=1, keepdims=True)             # [B*K, 1]
            mu_r = jnp.dot(aggm, rs, preferred_element_type=f32) * inv_cnt
            vs = jnp.sum((xall - mu_r) ** 2, axis=1, keepdims=True)
            var_r = jnp.dot(aggm, vs, preferred_element_type=f32) * inv_cnt
            xn = (xall - mu_r) * lax.rsqrt(var_r + 1e-5)
            return jnp.maximum(xn * g + beta, 0.0)

        # ------------- level 1: pool -> conv2 -> BN(K1) + ReLU --------------
        s1 = jnp.dot(hd, mlp1_w, preferred_element_type=f32) + mlp1_b
        xp1, ap1 = mincut_pool(hd, adj, s1, cmask1)               # [BK1, H/BK1]
        x1 = dgconv(xp1, ap1, wc2, c2_rel_b)
        x1 = bn_relu_cluster(x1, agg1, bn2_g, bn2_b)

        # ------------- level 2: pool -> conv3 -> BN(K2) + ReLU --------------
        s2 = jnp.dot(x1, mlp2_w, preferred_element_type=f32) + mlp2_b
        xp2, ap2 = mincut_pool(x1, ap1, s2, cmask2)               # [BK2, ...]
        x2 = dgconv(xp2, ap2, wc3, c3_rel_b)
        x2 = bn_relu_cluster(x2, agg2, bn3_g, bn3_b)

        # ------------- level 3 pool + mean + readout head --------------------
        s3 = softmax_rows(jnp.dot(x2, mlp3_w, preferred_element_type=f32)
                          + mlp3_b)                               # [BK2, K3]
        s3_bd = jnp.concatenate([s3] * B, axis=1) * cmask3        # [BK2, BK3]
        xp3 = lax.dot_general(s3_bd, x2, (((0,), (0,)), ((), ())),
                              preferred_element_type=f32)         # [BK3, H]
        xm = jnp.dot(mean_m, xp3, preferred_element_type=f32)     # [B, H]
        hh = jnp.maximum(
            jnp.dot(xm, lin1_w, preferred_element_type=f32) + lin1_b, 0.0)
        z = jnp.dot(hh, ro_w, preferred_element_type=f32) + ro_b  # [B, OUT]
        # exact sigmoid; single store of the whole [B, OUT] result
        o_ref[...] = 1.0 / (1.0 + jnp.exp(-z))

    return kernel


# ----------------------------------------------------------------------------
# Parameters (deterministic synthetic init) and forward glue
# ----------------------------------------------------------------------------

def init_params(key, fin, hidden, avg_nodes, out_ch, edge_dim=5):
    k1 = ceil(0.5 * avg_nodes)
    k2 = ceil(0.5 * k1)
    k3 = ceil(0.5 * k2)
    keys = jax.random.split(key, 16)

    def lin(k, i, o):
        kw, kb = jax.random.split(k)
        return (0.1 * jax.random.normal(kw, (i, o), jnp.float32),
                0.1 * jax.random.normal(kb, (1, o), jnp.float32))

    p = {}
    # TransformerConv (weights pre-transposed to [in, out]; edge weight [H, E])
    p["wq"], p["bq"] = lin(keys[0], fin, hidden)
    p["wk"], p["bk"] = lin(keys[1], fin, hidden)
    p["wv"], p["bv"] = lin(keys[2], fin, hidden)
    p["we"] = 0.1 * jax.random.normal(keys[3], (hidden, edge_dim), jnp.float32)
    p["wskip"], p["bskip"] = lin(keys[4], fin, hidden)
    # MLPs producing cluster assignments
    p["mlp1_w"], p["mlp1_b"] = lin(keys[5], hidden, k1)
    p["mlp2_w"], p["mlp2_b"] = lin(keys[6], hidden, k2)
    p["mlp3_w"], p["mlp3_b"] = lin(keys[7], hidden, k3)
    # DenseGraphConv layers (lin_rel has bias, lin_root has no bias)
    p["c2_rel_w"], p["c2_rel_b"] = lin(keys[8], hidden, hidden)
    p["c2_root_w"] = 0.1 * jax.random.normal(keys[9], (hidden, hidden), jnp.float32)
    p["c3_rel_w"], p["c3_rel_b"] = lin(keys[10], hidden, hidden)
    p["c3_root_w"] = 0.1 * jax.random.normal(keys[11], (hidden, hidden), jnp.float32)
    # Head
    p["lin1_w"], p["lin1_b"] = lin(keys[12], hidden, hidden)
    p["ro_w"], p["ro_b"] = lin(keys[13], hidden, out_ch)
    # BatchNorm affine params (PyTorch default: gamma=1, beta=0)
    p["bn1_g"], p["bn1_b"] = jnp.ones((1, hidden)), jnp.zeros((1, hidden))
    p["bn2_g"], p["bn2_b"] = jnp.ones((k1, 1)), jnp.zeros((k1, 1))
    p["bn3_g"], p["bn3_b"] = jnp.ones((k2, 1)), jnp.zeros((k2, 1))
    return p


def model_forward(params, x, edge_index, edge_attr, batch, *, num_graphs,
                  max_nodes):
    f32 = jnp.float32
    n_tot = x.shape[0]
    fin = x.shape[1]
    hidden = params["wq"].shape[1]
    edge_dim = params["we"].shape[1]
    out_ch = params["ro_w"].shape[1]
    k1 = params["mlp1_w"].shape[1]
    k2 = params["mlp2_w"].shape[1]
    k3 = params["mlp3_w"].shape[1]
    B, N, H, E = num_graphs, max_nodes, hidden, edge_dim
    BN, BK1, BK2, BK3 = B * N, B * k1, B * k2, B * k3
    src, dst = edge_index[0], edge_index[1]

    # ---- densification glue: one-hot matmuls instead of XLA scatters -------
    # TODO(synk): at scale, build these inside the kernel from edge_index via
    #             scalar prefetch and/or emit them in bf16.
    counts = jnp.bincount(batch, length=num_graphs)
    offsets = jnp.concatenate(
        [jnp.zeros((1,), counts.dtype), jnp.cumsum(counts)[:-1]])
    local = jnp.arange(n_tot) - offsets[batch]

    oh_src = jax.nn.one_hot(src, n_tot, dtype=f32)                # [Ne, Ntot]
    oh_dst = jax.nn.one_hot(dst, n_tot, dtype=f32)                # [Ne, Ntot]
    # mask[i, j] == 1 iff edge j -> i exists
    att_mask = jnp.minimum(oh_dst.T @ oh_src, 1.0)                # [Ntot, Ntot]
    # ef[i, e, j] = e-th edge feature of edge (source j -> target i)
    ef = jnp.einsum('ke,ki,kj->iej', edge_attr, oh_dst, oh_src)   # [Ntot, E, Ntot]

    # block-diagonal dense adjacency (src rows, dst cols) and scatter matrix
    dense_idx = batch * max_nodes + local
    oh_dsrc = jax.nn.one_hot(dense_idx[src], BN, dtype=f32)
    oh_ddst = jax.nn.one_hot(dense_idx[dst], BN, dtype=f32)
    adj_bd = oh_dsrc.T @ oh_ddst                                  # [BN, BN]
    p_scatter = jax.nn.one_hot(dense_idx, BN, dtype=f32)          # [Ntot, BN]

    # ---- packed weight / bias / structural slabs ----------------------------
    wqkvs = jnp.concatenate(
        [params["wq"], params["wk"], params["wv"], params["wskip"]], axis=1)
    bqkvs = jnp.concatenate(
        [params["bq"], params["bk"], params["bv"], params["bskip"]], axis=1)

    wh = jnp.concatenate([params["we"], params["mlp1_w"], params["mlp2_w"],
                          params["mlp3_w"], params["lin1_w"], params["ro_w"]],
                         axis=1)                                  # [H, *]
    wc = jnp.concatenate([
        jnp.concatenate([params["c2_rel_w"], params["c2_root_w"]], axis=0),
        jnp.concatenate([params["c3_rel_w"], params["c3_root_w"]], axis=0)],
        axis=1)                                                   # [2H, 2H]

    lanes = max(128, 4 * H)

    def row(v):
        v = jnp.reshape(v, (1, -1)).astype(f32)
        return jnp.pad(v, ((0, 0), (0, lanes - v.shape[1])))

    bias_slab = jnp.concatenate([
        row(bqkvs), row(params["bn1_g"]), row(params["bn1_b"]),
        row(params["mlp1_b"]), row(params["mlp2_b"]), row(params["mlp3_b"]),
        row(params["c2_rel_b"]), row(params["c3_rel_b"]),
        row(params["lin1_b"]), row(params["ro_b"])], axis=0)      # [10, lanes]

    auxoff, aux_cols = _aux_layout(B, N, k1, k2, k3)

    def block_mask(rows, rgrp, cols, cgrp):
        rg = jnp.arange(rows) // rgrp
        cg = jnp.arange(cols) // cgrp
        return (rg[:, None] == cg[None, :]).astype(f32)

    def same_cluster(nk, k):
        idx = jnp.arange(nk) % k
        return (idx[:, None] == idx[None, :]).astype(f32)

    cmask1 = block_mask(BN, N, BK1, k1)
    cmask2 = block_mask(BK1, k1, BK2, k2)
    cmask3 = block_mask(BK2, k2, BK3, k3)
    agg1 = same_cluster(BK1, k1)
    agg2 = same_cluster(BK2, k2)
    mean_m = block_mask(B, 1, BK3, k3) / float(k3)

    aux = jnp.zeros((BN, aux_cols), f32)

    def put(a, blk, c0):
        return a.at[0:blk.shape[0], c0:c0 + blk.shape[1]].set(blk)

    aux = put(aux, cmask1, auxoff["cmask1"])
    aux = put(aux, cmask2, auxoff["cmask2"])
    aux = put(aux, cmask3, auxoff["cmask3"])
    aux = put(aux, agg1, auxoff["agg1"])
    aux = put(aux, agg2, auxoff["agg2"])
    aux = put(aux, mean_m, auxoff["mean"])
    aux = put(aux, jnp.tile(params["bn2_g"], (B, 1)), auxoff["bn2_g"])
    aux = put(aux, jnp.tile(params["bn2_b"], (B, 1)), auxoff["bn2_b"])
    aux = put(aux, jnp.tile(params["bn3_g"], (B, 1)), auxoff["bn3_g"])
    aux = put(aux, jnp.tile(params["bn3_b"], (B, 1)), auxoff["bn3_b"])

    # ---- fused pallas_call ---------------------------------------------------
    kernel = _make_fused_kernel(B, N, H, E, k1, k2, k3, out_ch)
    operands = (x, ef, att_mask, p_scatter, adj_bd,
                wqkvs, wh, wc, bias_slab, aux)

    n2 = n_tot * n_tot
    flops = int(
        2 * n_tot * fin * 4 * H                       # qkv/skip projection
        + 4 * n2 * H                                  # q.k^T and alpha.v
        + 6 * E * n2                                  # edge score + value sweeps
        + 2 * n_tot * BN * H                          # to_dense_batch matmul
        + 2 * BN * (H + BN) * BK1 + 2 * BK1 * BK1 * BN      # level-1 pool
        + 2 * BK1 * BK1 * H + 4 * BK1 * H * H               # level-1 conv
        + 2 * BK1 * (H + BK1) * BK2 + 2 * BK2 * BK2 * BK1   # level-2 pool
        + 2 * BK2 * BK2 * H + 4 * BK2 * H * H               # level-2 conv
        + 2 * BK2 * H * BK3 + 2 * B * H * H + 2 * B * H * out_ch)
    transc = int(n2 + BN * k1 + BK1 * k2 + BK2 * k3 + B * out_ch)
    bytes_acc = int(sum(int(a.size) for a in operands) * 4 + B * out_ch * 4)

    out = pl.pallas_call(
        kernel,
        out_shape=jax.ShapeDtypeStruct((B, out_ch), f32),
        in_specs=[pl.BlockSpec(memory_space=pltpu.MemorySpace.VMEM)] * len(operands),
        out_specs=pl.BlockSpec(memory_space=pltpu.MemorySpace.VMEM),
        compiler_params=pltpu.CompilerParams(vmem_limit_bytes=32 * 1024 * 1024),
        cost_estimate=pl.CostEstimate(flops=flops, transcendentals=transc,
                                      bytes_accessed=bytes_acc),
    )(*operands)

    return jnp.squeeze(out, axis=-1) if out_ch == 1 else out


# ----------------------------------------------------------------------------
# Example run
# ----------------------------------------------------------------------------

if __name__ == "__main__":
    B = 2            # graphs in the batch
    n = 8            # nodes per graph (average_nodes)
    Fin = 6          # in_channels
    H = 32           # hidden_channels
    OUT = 1          # out_channels
    EDGE_DIM = 5

    key = jax.random.PRNGKey(0)
    kx, ke, kp = jax.random.split(key, 3)

    x = jax.random.normal(kx, (B * n, Fin), jnp.float32)
    batch = jnp.repeat(jnp.arange(B, dtype=jnp.int32), n)

    # bidirectional ring within each graph
    srcs, dsts = [], []
    for g in range(B):
        base = g * n
        for i in range(n):
            srcs += [base + i, base + (i + 1) % n]
            dsts += [base + (i + 1) % n, base + i]
    edge_index = jnp.array([srcs, dsts], dtype=jnp.int32)
    edge_attr = jax.random.normal(ke, (edge_index.shape[1], EDGE_DIM),
                                  jnp.float32)

    params = init_params(kp, Fin, H, n, OUT, EDGE_DIM)

    fwd = jax.jit(functools.partial(model_forward, num_graphs=B, max_nodes=n))
    out = fwd(params, x, edge_index, edge_attr, batch)
    out = jax.block_until_ready(out)

    assert out.shape == (B,), out.shape
    assert bool(jnp.all(jnp.isfinite(out)))
    assert bool(jnp.all((out >= 0.0) & (out <= 1.0)))
    print("KERNEL_OK")
</pallas_src>

<mosaic_0001>
module attributes {stable_mosaic.version = 11 : i64} {
  func.func private @main(%arg0: i32) attributes {dimension_semantics = [#tpu.dimension_semantics<core_parallel>], iteration_bounds = array<i64: 2>, tpu.core_type = #tpu.core_type<sc_scalar_subcore>, window_params = []} {
    return
  }
}

module attributes {stable_mosaic.version = 11 : i64} {
  func.func private @main(%arg0: i32) attributes {dimension_semantics = [#tpu.dimension_semantics<core_parallel>], iteration_bounds = array<i64: 2>, tpu.core_type = #tpu.core_type<sc_scalar_subcore>, window_params = []} {
    return
  }
}

module attributes {stable_mosaic.version = 11 : i64} {
  func.func @kernel(%arg0: memref<16x6xf32, #tpu.memory_space<vmem>>, %arg1: memref<16x5x16xf32, #tpu.memory_space<vmem>>, %arg2: memref<16x16xf32, #tpu.memory_space<vmem>>, %arg3: memref<16x16xf32, #tpu.memory_space<vmem>>, %arg4: memref<16x16xf32, #tpu.memory_space<vmem>>, %arg5: memref<6x128xf32, #tpu.memory_space<vmem>>, %arg6: memref<32x45xf32, #tpu.memory_space<vmem>>, %arg7: memref<64x64xf32, #tpu.memory_space<vmem>>, %arg8: memref<10x128xf32, #tpu.memory_space<vmem>>, %arg9: memref<16x32xf32, #tpu.memory_space<vmem>>, %arg10: memref<2x1xf32, #tpu.memory_space<vmem>>) attributes {dimension_semantics = [], scalar_prefetch = 0 : i64, scratch_operands = 0 : i64, tpu.core_type = #tpu.core_type<tc>} {
    %c0 = arith.constant 0 : index
    %c0_0 = arith.constant 0 : index
    %0 = vector.load %arg6[%c0, %c0_0] : memref<32x45xf32, #tpu.memory_space<vmem>>, vector<32x45xf32>
    %1 = vector.extract_strided_slice %0 {offsets = [0, 0], sizes = [32, 5], strides = [1, 1]} : vector<32x45xf32> to vector<32x5xf32>
    %2 = vector.extract_strided_slice %0 {offsets = [0, 5], sizes = [32, 4], strides = [1, 1]} : vector<32x45xf32> to vector<32x4xf32>
    %3 = vector.extract_strided_slice %0 {offsets = [0, 9], sizes = [32, 2], strides = [1, 1]} : vector<32x45xf32> to vector<32x2xf32>
    %4 = vector.extract_strided_slice %0 {offsets = [0, 11], sizes = [32, 1], strides = [1, 1]} : vector<32x45xf32> to vector<32x1xf32>
    %5 = vector.extract_strided_slice %0 {offsets = [0, 12], sizes = [32, 32], strides = [1, 1]} : vector<32x45xf32> to vector<32x32xf32>
    %6 = vector.extract_strided_slice %0 {offsets = [0, 44], sizes = [32, 1], strides = [1, 1]} : vector<32x45xf32> to vector<32x1xf32>
    %c0_1 = arith.constant 0 : index
    %c0_2 = arith.constant 0 : index
    %7 = vector.load %arg7[%c0_1, %c0_2] : memref<64x64xf32, #tpu.memory_space<vmem>>, vector<64x64xf32>
    %8 = vector.extract_strided_slice %7 {offsets = [0, 0], sizes = [64, 32], strides = [1, 1]} : vector<64x64xf32> to vector<64x32xf32>
    %9 = vector.extract_strided_slice %7 {offsets = [0, 32], sizes = [64, 32], strides = [1, 1]} : vector<64x64xf32> to vector<64x32xf32>
    %c0_3 = arith.constant 0 : index
    %c0_4 = arith.constant 0 : index
    %10 = vector.load %arg8[%c0_3, %c0_4] : memref<10x128xf32, #tpu.memory_space<vmem>>, vector<10x128xf32>
    %11 = vector.extract_strided_slice %10 {offsets = [0, 0], sizes = [1, 128], strides = [1, 1]} : vector<10x128xf32> to vector<1x128xf32>
    %12 = vector.extract_strided_slice %10 {offsets = [1, 0], sizes = [1, 32], strides = [1, 1]} : vector<10x128xf32> to vector<1x32xf32>
    %13 = vector.extract_strided_slice %10 {offsets = [2, 0], sizes = [1, 32], strides = [1, 1]} : vector<10x128xf32> to vector<1x32xf32>
    %14 = vector.extract_strided_slice %10 {offsets = [3, 0], sizes = [1, 4], strides = [1, 1]} : vector<10x128xf32> to vector<1x4xf32>
    %15 = vector.extract_strided_slice %10 {offsets = [4, 0], sizes = [1, 2], strides = [1, 1]} : vector<10x128xf32> to vector<1x2xf32>
    %16 = vector.extract_strided_slice %10 {offsets = [5, 0], sizes = [1, 1], strides = [1, 1]} : vector<10x128xf32> to vector<1x1xf32>
    %17 = vector.extract_strided_slice %10 {offsets = [6, 0], sizes = [1, 32], strides = [1, 1]} : vector<10x128xf32> to vector<1x32xf32>
    %18 = vector.extract_strided_slice %10 {offsets = [7, 0], sizes = [1, 32], strides = [1, 1]} : vector<10x128xf32> to vector<1x32xf32>
    %19 = vector.extract_strided_slice %10 {offsets = [8, 0], sizes = [1, 32], strides = [1, 1]} : vector<10x128xf32> to vector<1x32xf32>
    %20 = vector.extract_strided_slice %10 {offsets = [9, 0], sizes = [1, 1], strides = [1, 1]} : vector<10x128xf32> to vector<1x1xf32>
    %c0_5 = arith.constant 0 : index
    %c0_6 = arith.constant 0 : index
    %21 = vector.load %arg9[%c0_5, %c0_6] : memref<16x32xf32, #tpu.memory_space<vmem>>, vector<16x32xf32>
    %22 = vector.extract_strided_slice %21 {offsets = [0, 0], sizes = [16, 8], strides = [1, 1]} : vector<16x32xf32> to vector<16x8xf32>
    %23 = vector.extract_strided_slice %21 {offsets = [0, 8], sizes = [8, 4], strides = [1, 1]} : vector<16x32xf32> to vector<8x4xf32>
    %24 = vector.extract_strided_slice %21 {offsets = [0, 12], sizes = [4, 2], strides = [1, 1]} : vector<16x32xf32> to vector<4x2xf32>
    %25 = vector.extract_strided_slice %21 {offsets = [0, 14], sizes = [8, 8], strides = [1, 1]} : vector<16x32xf32> to vector<8x8xf32>
    %26 = vector.extract_strided_slice %21 {offsets = [0, 22], sizes = [4, 4], strides = [1, 1]} : vector<16x32xf32> to vector<4x4xf32>
    %27 = vector.extract_strided_slice %21 {offsets = [0, 26], sizes = [2, 2], strides = [1, 1]} : vector<16x32xf32> to vector<2x2xf32>
    %28 = vector.extract_strided_slice %21 {offsets = [0, 28], sizes = [8, 1], strides = [1, 1]} : vector<16x32xf32> to vector<8x1xf32>
    %29 = vector.extract_strided_slice %21 {offsets = [0, 29], sizes = [8, 1], strides = [1, 1]} : vector<16x32xf32> to vector<8x1xf32>
    %30 = vector.extract_strided_slice %21 {offsets = [0, 30], sizes = [4, 1], strides = [1, 1]} : vector<16x32xf32> to vector<4x1xf32>
    %31 = vector.extract_strided_slice %21 {offsets = [0, 31], sizes = [4, 1], strides = [1, 1]} : vector<16x32xf32> to vector<4x1xf32>
    %c0_7 = arith.constant 0 : index
    %c0_8 = arith.constant 0 : index
    %32 = vector.load %arg0[%c0_7, %c0_8] : memref<16x6xf32, #tpu.memory_space<vmem>>, vector<16x6xf32>
    %c0_9 = arith.constant 0 : index
    %c0_10 = arith.constant 0 : index
    %33 = vector.load %arg5[%c0_9, %c0_10] : memref<6x128xf32, #tpu.memory_space<vmem>>, vector<6x128xf32>
    %cst = arith.constant dense<0.000000e+00> : vector<16x128xf32>
    %34 = tpu.matmul %32, %33, %cst {dimension_numbers = #tpu.dot_dimension_numbers<[1], [0], [0], [1], [0, 0, 1, 1], [], []>} : vector<16x6xf32>, vector<6x128xf32>, vector<16x128xf32> -> vector<16x128xf32>
    %35 = vector.broadcast %11 : vector<1x128xf32> to vector<16x128xf32>
    %36 = arith.addf %34, %35 : vector<16x128xf32>
    %37 = vector.extract_strided_slice %36 {offsets = [0, 0], sizes = [16, 32], strides = [1, 1]} : vector<16x128xf32> to vector<16x32xf32>
    %38 = vector.extract_strided_slice %36 {offsets = [0, 32], sizes = [16, 32], strides = [1, 1]} : vector<16x128xf32> to vector<16x32xf32>
    %39 = vector.extract_strided_slice %36 {offsets = [0, 64], sizes = [16, 32], strides = [1, 1]} : vector<16x128xf32> to vector<16x32xf32>
    %40 = vector.extract_strided_slice %36 {offsets = [0, 96], sizes = [16, 32], strides = [1, 1]} : vector<16x128xf32> to vector<16x32xf32>
    %c0_11 = arith.constant 0 : index
    %c0_12 = arith.constant 0 : index
    %41 = vector.load %arg2[%c0_11, %c0_12] : memref<16x16xf32, #tpu.memory_space<vmem>>, vector<16x16xf32>
    %c0_13 = arith.constant 0 : index
    %c0_14 = arith.constant 0 : index
    %c0_15 = arith.constant 0 : index
    %42 = vector.load %arg1[%c0_13, %c0_14, %c0_15] : memref<16x5x16xf32, #tpu.memory_space<vmem>>, vector<16x5x16xf32>
    %cst_16 = arith.constant dense<0.000000e+00> : vector<16x16xf32>
    %43 = tpu.matmul %37, %38, %cst_16 {dimension_numbers = #tpu.dot_dimension_numbers<[1], [1], [0], [0], [0, 0, 1, 0], [], []>} : vector<16x32xf32>, vector<16x32xf32>, vector<16x16xf32> -> vector<16x16xf32>
    %cst_17 = arith.constant dense<0.000000e+00> : vector<16x5xf32>
    %44 = tpu.matmul %37, %1, %cst_17 {dimension_numbers = #tpu.dot_dimension_numbers<[1], [0], [0], [1], [0, 0, 1, 1], [], []>} : vector<16x32xf32>, vector<32x5xf32>, vector<16x5xf32> -> vector<16x5xf32>
    %45 = vector.shape_cast %44 : vector<16x5xf32> to vector<16x5x1xf32>
    %46 = vector.broadcast %45 : vector<16x5x1xf32> to vector<16x5x16xf32>
    %47 = arith.mulf %42, %46 : vector<16x5x16xf32>
    %cst_18 = arith.constant dense<0.000000e+00> : vector<16x16xf32>
    %48 = vector.multi_reduction <add>, %47, %cst_18 [1] : vector<16x5x16xf32> to vector<16x16xf32>
    %49 = arith.addf %43, %48 : vector<16x16xf32>
    %cst_19 = arith.constant 0.176776692 : f32
    %50 = vector.broadcast %cst_19 : f32 to vector<16x16xf32>
    %51 = arith.mulf %49, %50 : vector<16x16xf32>
    %cst_20 = arith.constant 0.000000e+00 : f32
    %52 = vector.broadcast %cst_20 : f32 to vector<16x16xf32>
    %53 = arith.cmpf ogt, %41, %52 : vector<16x16xf32>
    %cst_21 = arith.constant -1.000000e+30 : f32
    %54 = vector.broadcast %cst_21 : f32 to vector<16x16xf32>
    %55 = arith.select %53, %51, %54 : vector<16x16xi1>, vector<16x16xf32>
    %cst_22 = arith.constant dense<0xFF800000> : vector<16xf32>
    %56 = vector.multi_reduction <maximumf>, %55, %cst_22 [1] : vector<16x16xf32> to vector<16xf32>
    %57 = vector.shape_cast %56 : vector<16xf32> to vector<16x1xf32>
    %58 = vector.broadcast %57 : vector<16x1xf32> to vector<16x16xf32>
    %59 = arith.subf %55, %58 : vector<16x16xf32>
    %60 = math.exp %59 : vector<16x16xf32>
    %61 = arith.mulf %60, %41 : vector<16x16xf32>
    %cst_23 = arith.constant dense<0.000000e+00> : vector<16xf32>
    %62 = vector.multi_reduction <add>, %61, %cst_23 [1] : vector<16x16xf32> to vector<16xf32>
    %63 = vector.shape_cast %62 : vector<16xf32> to vector<16x1xf32>
    %cst_24 = arith.constant 1.000000e-16 : f32
    %64 = vector.broadcast %cst_24 : f32 to vector<16x1xf32>
    %65 = arith.maximumf %63, %64 : vector<16x1xf32>
    %66 = tpu.reciprocal %65 {approx = true} : vector<16x1xf32> -> vector<16x1xf32>
    %67 = vector.broadcast %66 : vector<16x1xf32> to vector<16x16xf32>
    %68 = arith.mulf %61, %67 : vector<16x16xf32>
    %cst_25 = arith.constant dense<0.000000e+00> : vector<16x32xf32>
    %69 = tpu.matmul %68, %39, %cst_25 {dimension_numbers = #tpu.dot_dimension_numbers<[1], [0], [0], [1], [0, 0, 1, 1], [], []>} : vector<16x16xf32>, vector<16x32xf32>, vector<16x32xf32> -> vector<16x32xf32>
    %70 = vector.shape_cast %68 : vector<16x16xf32> to vector<16x1x16xf32>
    %71 = vector.broadcast %70 : vector<16x1x16xf32> to vector<16x5x16xf32>
    %72 = arith.mulf %42, %71 : vector<16x5x16xf32>
    %cst_26 = arith.constant dense<0.000000e+00> : vector<16x5xf32>
    %73 = vector.multi_reduction <add>, %72, %cst_26 [2] : vector<16x5x16xf32> to vector<16x5xf32>
    %cst_27 = arith.constant dense<0.000000e+00> : vector<16x32xf32>
    %74 = tpu.matmul %73, %1, %cst_27 {dimension_numbers = #tpu.dot_dimension_numbers<[1], [1], [0], [0], [0, 0, 1, 0], [], []>} : vector<16x5xf32>, vector<32x5xf32>, vector<16x32xf32> -> vector<16x32xf32>
    %75 = arith.addf %69, %74 : vector<16x32xf32>
    %76 = arith.addf %75, %40 : vector<16x32xf32>
    %cst_28 = arith.constant dense<0.000000e+00> : vector<32xf32>
    %77 = vector.multi_reduction <add>, %76, %cst_28 [0] : vector<16x32xf32> to vector<32xf32>
    %78 = vector.shape_cast %77 : vector<32xf32> to vector<1x32xf32>
    %cst_29 = arith.constant 1.600000e+01 : f32
    %79 = vector.broadcast %cst_29 : f32 to vector<1x32xf32>
    %80 = arith.divf %78, %79 : vector<1x32xf32>
    %81 = vector.broadcast %80 : vector<1x32xf32> to vector<16x32xf32>
    %82 = arith.subf %76, %81 : vector<16x32xf32>
    %83 = arith.mulf %82, %82 : vector<16x32xf32>
    %cst_30 = arith.constant dense<0.000000e+00> : vector<32xf32>
    %84 = vector.multi_reduction <add>, %83, %cst_30 [0] : vector<16x32xf32> to vector<32xf32>
    %85 = vector.shape_cast %84 : vector<32xf32> to vector<1x32xf32>
    %cst_31 = arith.constant 1.600000e+01 : f32
    %86 = vector.broadcast %cst_31 : f32 to vector<1x32xf32>
    %87 = arith.divf %85, %86 : vector<1x32xf32>
    %88 = vector.broadcast %80 : vector<1x32xf32> to vector<16x32xf32>
    %89 = arith.subf %76, %88 : vector<16x32xf32>
    %cst_32 = arith.constant 9.99999974E-6 : f32
    %90 = vector.broadcast %cst_32 : f32 to vector<1x32xf32>
    %91 = arith.addf %87, %90 : vector<1x32xf32>
    %92 = math.rsqrt %91 : vector<1x32xf32>
    %93 = vector.broadcast %92 : vector<1x32xf32> to vector<16x32xf32>
    %94 = arith.mulf %89, %93 : vector<16x32xf32>
    %95 = vector.broadcast %12 : vector<1x32xf32> to vector<16x32xf32>
    %96 = arith.mulf %94, %95 : vector<16x32xf32>
    %97 = vector.broadcast %13 : vector<1x32xf32> to vector<16x32xf32>
    %98 = arith.addf %96, %97 : vector<16x32xf32>
    %cst_33 = arith.constant 0.000000e+00 : f32
    %99 = vector.broadcast %cst_33 : f32 to vector<16x32xf32>
    %100 = arith.maximumf %98, %99 : vector<16x32xf32>
    %c0_34 = arith.constant 0 : index
    %c0_35 = arith.constant 0 : index
    %101 = vector.load %arg3[%c0_34, %c0_35] : memref<16x16xf32, #tpu.memory_space<vmem>>, vector<16x16xf32>
    %cst_36 = arith.constant dense<0.000000e+00> : vector<16x32xf32>
    %102 = tpu.matmul %101, %100, %cst_36 {dimension_numbers = #tpu.dot_dimension_numbers<[0], [0], [1], [1], [0, 1, 1, 1], [], []>} : vector<16x16xf32>, vector<16x32xf32>, vector<16x32xf32> -> vector<16x32xf32>
    %c0_37 = arith.constant 0 : index
    %c0_38 = arith.constant 0 : index
    %103 = vector.load %arg4[%c0_37, %c0_38] : memref<16x16xf32, #tpu.memory_space<vmem>>, vector<16x16xf32>
    %cst_39 = arith.constant dense<0.000000e+00> : vector<16x4xf32>
    %104 = tpu.matmul %102, %2, %cst_39 {dimension_numbers = #tpu.dot_dimension_numbers<[1], [0], [0], [1], [0, 0, 1, 1], [], []>} : vector<16x32xf32>, vector<32x4xf32>, vector<16x4xf32> -> vector<16x4xf32>
    %105 = vector.broadcast %14 : vector<1x4xf32> to vector<16x4xf32>
    %106 = arith.addf %104, %105 : vector<16x4xf32>
    %cst_40 = arith.constant dense<0xFF800000> : vector<16xf32>
    %107 = vector.multi_reduction <maximumf>, %106, %cst_40 [1] : vector<16x4xf32> to vector<16xf32>
    %108 = vector.shape_cast %107 : vector<16xf32> to vector<16x1xf32>
    %109 = vector.broadcast %108 : vector<16x1xf32> to vector<16x4xf32>
    %110 = arith.subf %106, %109 : vector<16x4xf32>
    %111 = math.exp %110 : vector<16x4xf32>
    %cst_41 = arith.constant dense<0.000000e+00> : vector<16xf32>
    %112 = vector.multi_reduction <add>, %111, %cst_41 [1] : vector<16x4xf32> to vector<16xf32>
    %113 = vector.shape_cast %112 : vector<16xf32> to vector<16x1xf32>
    %114 = vector.broadcast %113 : vector<16x1xf32> to vector<16x4xf32>
    %115 = arith.divf %111, %114 : vector<16x4xf32>
    %116 = tpu.concatenate %115, %115 in 1 : vector<16x4xf32>, vector<16x4xf32> -> vector<16x8xf32>
    %117 = arith.mulf %116, %22 : vector<16x8xf32>
    %118 = tpu.concatenate %102, %103 in 1 : vector<16x32xf32>, vector<16x16xf32> -> vector<16x48xf32>
    %cst_42 = arith.constant dense<0.000000e+00> : vector<8x48xf32>
    %119 = tpu.matmul %117, %118, %cst_42 {dimension_numbers = #tpu.dot_dimension_numbers<[0], [0], [1], [1], [0, 1, 1, 1], [], []>} : vector<16x8xf32>, vector<16x48xf32>, vector<8x48xf32> -> vector<8x48xf32>
    %120 = vector.extract_strided_slice %119 {offsets = [0, 0], sizes = [8, 32], strides = [1, 1]} : vector<8x48xf32> to vector<8x32xf32>
    %121 = vector.extract_strided_slice %119 {offsets = [0, 32], sizes = [8, 16], strides = [1, 1]} : vector<8x48xf32> to vector<8x16xf32>
    %cst_43 = arith.constant dense<0.000000e+00> : vector<8x8xf32>
    %122 = tpu.matmul %121, %117, %cst_43 {dimension_numbers = #tpu.dot_dimension_numbers<[1], [0], [0], [1], [0, 0, 1, 1], [], []>} : vector<8x16xf32>, vector<16x8xf32>, vector<8x8xf32> -> vector<8x8xf32>
    %123 = tpu.iota {dimensions = array<i32: 0>} : vector<8x8xi32>
    %124 = tpu.iota {dimensions = array<i32: 1>} : vector<8x8xi32>
    %125 = arith.cmpi eq, %123, %124 : vector<8x8xi32>
    %cst_44 = arith.constant 0.000000e+00 : f32
    %126 = vector.broadcast %cst_44 : f32 to vector<8x8xf32>
    %127 = arith.select %125, %126, %122 : vector<8x8xi1>, vector<8x8xf32>
    %cst_45 = arith.constant dense<0.000000e+00> : vector<8xf32>
    %128 = vector.multi_reduction <add>, %127, %cst_45 [1] : vector<8x8xf32> to vector<8xf32>
    %129 = vector.shape_cast %128 : vector<8xf32> to vector<8x1xf32>
    %130 = math.sqrt %129 : vector<8x1xf32>
    %cst_46 = arith.constant 1.000000e-15 : f32
    %131 = vector.broadcast %cst_46 : f32 to vector<8x1xf32>
    %132 = arith.addf %130, %131 : vector<8x1xf32>
    %133 = vector.broadcast %132 : vector<8x1xf32> to vector<8x8xf32>
    %134 = arith.divf %127, %133 : vector<8x8xf32>
    %135 = tpu.transpose %132, [1, 0] : vector<8x1xf32> -> vector<1x8xf32>
    %136 = vector.broadcast %135 : vector<1x8xf32> to vector<8x8xf32>
    %137 = arith.divf %134, %136 : vector<8x8xf32>
    %cst_47 = arith.constant dense<0.000000e+00> : vector<8x32xf32>
    %138 = tpu.matmul %137, %120, %cst_47 {dimension_numbers = #tpu.dot_dimension_numbers<[1], [0], [0], [1], [0, 0, 1, 1], [], []>} : vector<8x8xf32>, vector<8x32xf32>, vector<8x32xf32> -> vector<8x32xf32>
    %139 = tpu.concatenate %138, %120 in 1 : vector<8x32xf32>, vector<8x32xf32> -> vector<8x64xf32>
    %cst_48 = arith.constant dense<0.000000e+00> : vector<8x32xf32>
    %140 = tpu.matmul %139, %8, %cst_48 {dimension_numbers = #tpu.dot_dimension_numbers<[1], [0], [0], [1], [0, 0, 1, 1], [], []>} : vector<8x64xf32>, vector<64x32xf32>, vector<8x32xf32> -> vector<8x32xf32>
    %141 = vector.broadcast %17 : vector<1x32xf32> to vector<8x32xf32>
    %142 = arith.addf %140, %141 : vector<8x32xf32>
    %cst_49 = arith.constant dense<0.000000e+00> : vector<8xf32>
    %143 = vector.multi_reduction <add>, %142, %cst_49 [1] : vector<8x32xf32> to vector<8xf32>
    %144 = vector.shape_cast %143 : vector<8xf32> to vector<8x1xf32>
    %cst_50 = arith.constant dense<0.000000e+00> : vector<8x1xf32>
    %145 = tpu.matmul %25, %144, %cst_50 {dimension_numbers = #tpu.dot_dimension_numbers<[1], [0], [0], [1], [0, 0, 1, 1], [], []>} : vector<8x8xf32>, vector<8x1xf32>, vector<8x1xf32> -> vector<8x1xf32>
    %cst_51 = arith.constant 1.562500e-02 : f32
    %146 = vector.broadcast %cst_51 : f32 to vector<8x1xf32>
    %147 = arith.mulf %145, %146 : vector<8x1xf32>
    %148 = vector.broadcast %147 : vector<8x1xf32> to vector<8x32xf32>
    %149 = arith.subf %142, %148 : vector<8x32xf32>
    %150 = arith.mulf %149, %149 : vector<8x32xf32>
    %cst_52 = arith.constant dense<0.000000e+00> : vector<8xf32>
    %151 = vector.multi_reduction <add>, %150, %cst_52 [1] : vector<8x32xf32> to vector<8xf32>
    %152 = vector.shape_cast %151 : vector<8xf32> to vector<8x1xf32>
    %cst_53 = arith.constant dense<0.000000e+00> : vector<8x1xf32>
    %153 = tpu.matmul %25, %152, %cst_53 {dimension_numbers = #tpu.dot_dimension_numbers<[1], [0], [0], [1], [0, 0, 1, 1], [], []>} : vector<8x8xf32>, vector<8x1xf32>, vector<8x1xf32> -> vector<8x1xf32>
    %cst_54 = arith.constant 1.562500e-02 : f32
    %154 = vector.broadcast %cst_54 : f32 to vector<8x1xf32>
    %155 = arith.mulf %153, %154 : vector<8x1xf32>
    %156 = vector.broadcast %147 : vector<8x1xf32> to vector<8x32xf32>
    %157 = arith.subf %142, %156 : vector<8x32xf32>
    %cst_55 = arith.constant 9.99999974E-6 : f32
    %158 = vector.broadcast %cst_55 : f32 to vector<8x1xf32>
    %159 = arith.addf %155, %158 : vector<8x1xf32>
    %160 = math.rsqrt %159 : vector<8x1xf32>
    %161 = vector.broadcast %160 : vector<8x1xf32> to vector<8x32xf32>
    %162 = arith.mulf %157, %161 : vector<8x32xf32>
    %163 = vector.broadcast %28 : vector<8x1xf32> to vector<8x32xf32>
    %164 = arith.mulf %162, %163 : vector<8x32xf32>
    %165 = vector.broadcast %29 : vector<8x1xf32> to vector<8x32xf32>
    %166 = arith.addf %164, %165 : vector<8x32xf32>
    %cst_56 = arith.constant 0.000000e+00 : f32
    %167 = vector.broadcast %cst_56 : f32 to vector<8x32xf32>
    %168 = arith.maximumf %166, %167 : vector<8x32xf32>
    %cst_57 = arith.constant dense<0.000000e+00> : vector<8x2xf32>
    %169 = tpu.matmul %168, %3, %cst_57 {dimension_numbers = #tpu.dot_dimension_numbers<[1], [0], [0], [1], [0, 0, 1, 1], [], []>} : vector<8x32xf32>, vector<32x2xf32>, vector<8x2xf32> -> vector<8x2xf32>
    %170 = vector.broadcast %15 : vector<1x2xf32> to vector<8x2xf32>
    %171 = arith.addf %169, %170 : vector<8x2xf32>
    %cst_58 = arith.constant dense<0xFF800000> : vector<8xf32>
    %172 = vector.multi_reduction <maximumf>, %171, %cst_58 [1] : vector<8x2xf32> to vector<8xf32>
    %173 = vector.shape_cast %172 : vector<8xf32> to vector<8x1xf32>
    %174 = vector.broadcast %173 : vector<8x1xf32> to vector<8x2xf32>
    %175 = arith.subf %171, %174 : vector<8x2xf32>
    %176 = math.exp %175 : vector<8x2xf32>
    %cst_59 = arith.constant dense<0.000000e+00> : vector<8xf32>
    %177 = vector.multi_reduction <add>, %176, %cst_59 [1] : vector<8x2xf32> to vector<8xf32>
    %178 = vector.shape_cast %177 : vector<8xf32> to vector<8x1xf32>
    %179 = vector.broadcast %178 : vector<8x1xf32> to vector<8x2xf32>
    %180 = arith.divf %176, %179 : vector<8x2xf32>
    %181 = tpu.concatenate %180, %180 in 1 : vector<8x2xf32>, vector<8x2xf32> -> vector<8x4xf32>
    %182 = arith.mulf %181, %23 : vector<8x4xf32>
    %183 = tpu.concatenate %168, %137 in 1 : vector<8x32xf32>, vector<8x8xf32> -> vector<8x40xf32>
    %cst_60 = arith.constant dense<0.000000e+00> : vector<4x40xf32>
    %184 = tpu.matmul %182, %183, %cst_60 {dimension_numbers = #tpu.dot_dimension_numbers<[0], [0], [1], [1], [0, 1, 1, 1], [], []>} : vector<8x4xf32>, vector<8x40xf32>, vector<4x40xf32> -> vector<4x40xf32>
    %185 = vector.extract_strided_slice %184 {offsets = [0, 0], sizes = [4, 32], strides = [1, 1]} : vector<4x40xf32> to vector<4x32xf32>
    %186 = vector.extract_strided_slice %184 {offsets = [0, 32], sizes = [4, 8], strides = [1, 1]} : vector<4x40xf32> to vector<4x8xf32>
    %cst_61 = arith.constant dense<0.000000e+00> : vector<4x4xf32>
    %187 = tpu.matmul %186, %182, %cst_61 {dimension_numbers = #tpu.dot_dimension_numbers<[1], [0], [0], [1], [0, 0, 1, 1], [], []>} : vector<4x8xf32>, vector<8x4xf32>, vector<4x4xf32> -> vector<4x4xf32>
    %188 = tpu.iota {dimensions = array<i32: 0>} : vector<4x4xi32>
    %189 = tpu.iota {dimensions = array<i32: 1>} : vector<4x4xi32>
    %190 = arith.cmpi eq, %188, %189 : vector<4x4xi32>
    %cst_62 = arith.constant 0.000000e+00 : f32
    %191 = vector.broadcast %cst_62 : f32 to vector<4x4xf32>
    %192 = arith.select %190, %191, %187 : vector<4x4xi1>, vector<4x4xf32>
    %cst_63 = arith.constant dense<0.000000e+00> : vector<4xf32>
    %193 = vector.multi_reduction <add>, %192, %cst_63 [1] : vector<4x4xf32> to vector<4xf32>
    %194 = vector.shape_cast %193 : vector<4xf32> to vector<4x1xf32>
    %195 = math.sqrt %194 : vector<4x1xf32>
    %cst_64 = arith.constant 1.000000e-15 : f32
    %196 = vector.broadcast %cst_64 : f32 to vector<4x1xf32>
    %197 = arith.addf %195, %196 : vector<4x1xf32>
    %198 = vector.broadcast %197 : vector<4x1xf32> to vector<4x4xf32>
    %199 = arith.divf %192, %198 : vector<4x4xf32>
    %200 = tpu.transpose %197, [1, 0] : vector<4x1xf32> -> vector<1x4xf32>
    %201 = vector.broadcast %200 : vector<1x4xf32> to vector<4x4xf32>
    %202 = arith.divf %199, %201 : vector<4x4xf32>
    %cst_65 = arith.constant dense<0.000000e+00> : vector<4x32xf32>
    %203 = tpu.matmul %202, %185, %cst_65 {dimension_numbers = #tpu.dot_dimension_numbers<[1], [0], [0], [1], [0, 0, 1, 1], [], []>} : vector<4x4xf32>, vector<4x32xf32>, vector<4x32xf32> -> vector<4x32xf32>
    %204 = tpu.concatenate %203, %185 in 1 : vector<4x32xf32>, vector<4x32xf32> -> vector<4x64xf32>
    %cst_66 = arith.constant dense<0.000000e+00> : vector<4x32xf32>
    %205 = tpu.matmul %204, %9, %cst_66 {dimension_numbers = #tpu.dot_dimension_numbers<[1], [0], [0], [1], [0, 0, 1, 1], [], []>} : vector<4x64xf32>, vector<64x32xf32>, vector<4x32xf32> -> vector<4x32xf32>
    %206 = vector.broadcast %18 : vector<1x32xf32> to vector<4x32xf32>
    %207 = arith.addf %205, %206 : vector<4x32xf32>
    %cst_67 = arith.constant dense<0.000000e+00> : vector<4xf32>
    %208 = vector.multi_reduction <add>, %207, %cst_67 [1] : vector<4x32xf32> to vector<4xf32>
    %209 = vector.shape_cast %208 : vector<4xf32> to vector<4x1xf32>
    %cst_68 = arith.constant dense<0.000000e+00> : vector<4x1xf32>
    %210 = tpu.matmul %26, %209, %cst_68 {dimension_numbers = #tpu.dot_dimension_numbers<[1], [0], [0], [1], [0, 0, 1, 1], [], []>} : vector<4x4xf32>, vector<4x1xf32>, vector<4x1xf32> -> vector<4x1xf32>
    %cst_69 = arith.constant 1.562500e-02 : f32
    %211 = vector.broadcast %cst_69 : f32 to vector<4x1xf32>
    %212 = arith.mulf %210, %211 : vector<4x1xf32>
    %213 = vector.broadcast %212 : vector<4x1xf32> to vector<4x32xf32>
    %214 = arith.subf %207, %213 : vector<4x32xf32>
    %215 = arith.mulf %214, %214 : vector<4x32xf32>
    %cst_70 = arith.constant dense<0.000000e+00> : vector<4xf32>
    %216 = vector.multi_reduction <add>, %215, %cst_70 [1] : vector<4x32xf32> to vector<4xf32>
    %217 = vector.shape_cast %216 : vector<4xf32> to vector<4x1xf32>
    %cst_71 = arith.constant dense<0.000000e+00> : vector<4x1xf32>
    %218 = tpu.matmul %26, %217, %cst_71 {dimension_numbers = #tpu.dot_dimension_numbers<[1], [0], [0], [1], [0, 0, 1, 1], [], []>} : vector<4x4xf32>, vector<4x1xf32>, vector<4x1xf32> -> vector<4x1xf32>
    %cst_72 = arith.constant 1.562500e-02 : f32
    %219 = vector.broadcast %cst_72 : f32 to vector<4x1xf32>
    %220 = arith.mulf %218, %219 : vector<4x1xf32>
    %221 = vector.broadcast %212 : vector<4x1xf32> to vector<4x32xf32>
    %222 = arith.subf %207, %221 : vector<4x32xf32>
    %cst_73 = arith.constant 9.99999974E-6 : f32
    %223 = vector.broadcast %cst_73 : f32 to vector<4x1xf32>
    %224 = arith.addf %220, %223 : vector<4x1xf32>
    %225 = math.rsqrt %224 : vector<4x1xf32>
    %226 = vector.broadcast %225 : vector<4x1xf32> to vector<4x32xf32>
    %227 = arith.mulf %222, %226 : vector<4x32xf32>
    %228 = vector.broadcast %30 : vector<4x1xf32> to vector<4x32xf32>
    %229 = arith.mulf %227, %228 : vector<4x32xf32>
    %230 = vector.broadcast %31 : vector<4x1xf32> to vector<4x32xf32>
    %231 = arith.addf %229, %230 : vector<4x32xf32>
    %cst_74 = arith.constant 0.000000e+00 : f32
    %232 = vector.broadcast %cst_74 : f32 to vector<4x32xf32>
    %233 = arith.maximumf %231, %232 : vector<4x32xf32>
    %cst_75 = arith.constant dense<0.000000e+00> : vector<4x1xf32>
    %234 = tpu.matmul %233, %4, %cst_75 {dimension_numbers = #tpu.dot_dimension_numbers<[1], [0], [0], [1], [0, 0, 1, 1], [], []>} : vector<4x32xf32>, vector<32x1xf32>, vector<4x1xf32> -> vector<4x1xf32>
    %235 = vector.broadcast %16 : vector<1x1xf32> to vector<4x1xf32>
    %236 = arith.addf %234, %235 : vector<4x1xf32>
    %cst_76 = arith.constant dense<0xFF800000> : vector<4xf32>
    %237 = vector.multi_reduction <maximumf>, %236, %cst_76 [1] : vector<4x1xf32> to vector<4xf32>
    %238 = vector.shape_cast %237 : vector<4xf32> to vector<4x1xf32>
    %239 = arith.subf %236, %238 : vector<4x1xf32>
    %240 = math.exp %239 : vector<4x1xf32>
    %cst_77 = arith.constant dense<0.000000e+00> : vector<4xf32>
    %241 = vector.multi_reduction <add>, %240, %cst_77 [1] : vector<4x1xf32> to vector<4xf32>
    %242 = vector.shape_cast %241 : vector<4xf32> to vector<4x1xf32>
    %243 = arith.divf %240, %242 : vector<4x1xf32>
    %244 = tpu.concatenate %243, %243 in 1 : vector<4x1xf32>, vector<4x1xf32> -> vector<4x2xf32>
    %245 = arith.mulf %244, %24 : vector<4x2xf32>
    %cst_78 = arith.constant dense<0.000000e+00> : vector<2x32xf32>
    %246 = tpu.matmul %245, %233, %cst_78 {dimension_numbers = #tpu.dot_dimension_numbers<[0], [0], [1], [1], [0, 1, 1, 1], [], []>} : vector<4x2xf32>, vector<4x32xf32>, vector<2x32xf32> -> vector<2x32xf32>
    %cst_79 = arith.constant dense<0.000000e+00> : vector<2x32xf32>
    %247 = tpu.matmul %27, %246, %cst_79 {dimension_numbers = #tpu.dot_dimension_numbers<[1], [0], [0], [1], [0, 0, 1, 1], [], []>} : vector<2x2xf32>, vector<2x32xf32>, vector<2x32xf32> -> vector<2x32xf32>
    %cst_80 = arith.constant dense<0.000000e+00> : vector<2x32xf32>
    %248 = tpu.matmul %247, %5, %cst_80 {dimension_numbers = #tpu.dot_dimension_numbers<[1], [0], [0], [1], [0, 0, 1, 1], [], []>} : vector<2x32xf32>, vector<32x32xf32>, vector<2x32xf32> -> vector<2x32xf32>
    %249 = vector.broadcast %19 : vector<1x32xf32> to vector<2x32xf32>
    %250 = arith.addf %248, %249 : vector<2x32xf32>
    %cst_81 = arith.constant 0.000000e+00 : f32
    %251 = vector.broadcast %cst_81 : f32 to vector<2x32xf32>
    %252 = arith.maximumf %250, %251 : vector<2x32xf32>
    %cst_82 = arith.constant dense<0.000000e+00> : vector<2x1xf32>
    %253 = tpu.matmul %252, %6, %cst_82 {dimension_numbers = #tpu.dot_dimension_numbers<[1], [0], [0], [1], [0, 0, 1, 1], [], []>} : vector<2x32xf32>, vector<32x1xf32>, vector<2x1xf32> -> vector<2x1xf32>
    %254 = vector.broadcast %20 : vector<1x1xf32> to vector<2x1xf32>
    %255 = arith.addf %253, %254 : vector<2x1xf32>
    %cst_83 = arith.constant 0.000000e+00 : f32
    %256 = vector.broadcast %cst_83 : f32 to vector<2x1xf32>
    %257 = arith.subf %256, %255 : vector<2x1xf32>
    %258 = math.exp %257 : vector<2x1xf32>
    %cst_84 = arith.constant 1.000000e+00 : f32
    %259 = vector.broadcast %cst_84 : f32 to vector<2x1xf32>
    %260 = arith.addf %259, %258 : vector<2x1xf32>
    %cst_85 = arith.constant 1.000000e+00 : f32
    %261 = vector.broadcast %cst_85 : f32 to vector<2x1xf32>
    %262 = arith.divf %261, %260 : vector<2x1xf32>
    %c0_86 = arith.constant 0 : index
    %c0_87 = arith.constant 0 : index
    %263 = vector.load %arg10[%c0_86, %c0_87] : memref<2x1xf32, #tpu.memory_space<vmem>>, vector<2x1xf32>
    tpu.vector_store %arg10[%c0_86, %c0_87], %262 {strides = array<i32>} : memref<2x1xf32, #tpu.memory_space<vmem>>, vector<2x1xf32>,
    return
  }
}

</mosaic_0001>

<llo_original>
// kernel: model_forward.1
$region0: #{model_forward.1}
  #allocation0 [shape = 'u32[]', space=smem, size = 0x4, offset = 0x4, fixed_abs, tag = 'smem constant byte address 0x4 - core index']
  #allocation1 [shape = 'u32[144,128]{1,0:T(1,128)}', space=vmem, size = 0x12000, scoped, tag = 'internal scratch']
  %s0 = inlined_call_operand.vmem [shape: f32[16,6], index: 0, kind: input, shape index: {}]
  %s1 = inlined_call_operand.vmem [shape: f32[16,5,16], index: 1, kind: input, shape index: {}]
  %s2 = inlined_call_operand.vmem [shape: f32[16,16], index: 2, kind: input, shape index: {}]
  %s3 = inlined_call_operand.vmem [shape: f32[16,16], index: 3, kind: input, shape index: {}]
  %s4 = inlined_call_operand.vmem [shape: f32[16,16], index: 4, kind: input, shape index: {}]
  %s5 = inlined_call_operand.vmem [shape: f32[6,128], index: 5, kind: input, shape index: {}]
  %s6 = inlined_call_operand.vmem [shape: f32[32,45], index: 6, kind: input, shape index: {}]
  %s7 = inlined_call_operand.vmem [shape: f32[64,64], index: 7, kind: input, shape index: {}]
  %s8 = inlined_call_operand.vmem [shape: f32[10,128], index: 8, kind: input, shape index: {}]
  %s9 = inlined_call_operand.vmem [shape: f32[16,32], index: 9, kind: input, shape index: {}]
  %s10 = inlined_call_operand.vmem [shape: f32[2,1], index: 10, kind: output, shape index: {}]
  %s11 = sld [smem:[#allocation0]]
  $region50: #{model_forward.1} parent=0
    _
  %s13 = ssub.s32 1, %s11
  %s14 = scalar_select 0, %s13, %s11
  // Predicated region
  $region2: #{model_forward.1} parent=0 // pred_check
    _
  $region3: #{model_forward.1} parent=0 // pred_check_branch
    %16 = sbr.rel (0) target = $region5
  $region4: #{model_forward.1} parent=0 // pred_region
    _
  $region5: #{model_forward.1} parent=0 // pred_fallthru
    _
  // Predicated region
  $region6: #{model_forward.1} parent=0 // pred_check
    _
  $region7: #{model_forward.1} parent=0 // pred_check_branch
    %18 = sbr.rel (0) target = $region9
  $region8: #{model_forward.1} parent=0 // pred_region
    _
  $region9: #{model_forward.1} parent=0 // pred_fallthru
    _
  // Predicated region
  $region10: #{model_forward.1} parent=0 // pred_check
    _
  $region11: #{model_forward.1} parent=0 // pred_check_branch
    %20 = sbr.rel (0) target = $region13
  $region12: #{model_forward.1} parent=0 // pred_region
    _
  $region13: #{model_forward.1} parent=0 // pred_fallthru
    _
  // Predicated region
  $region14: #{model_forward.1} parent=0 // pred_check
    _
  $region15: #{model_forward.1} parent=0 // pred_check_branch
    %22 = sbr.rel (0) target = $region17
  $region16: #{model_forward.1} parent=0 // pred_region
    _
  $region17: #{model_forward.1} parent=0 // pred_fallthru
    _
  // Predicated region
  $region18: #{model_forward.1} parent=0 // pred_check
    _
  $region19: #{model_forward.1} parent=0 // pred_check_branch
    %24 = sbr.rel (0) target = $region21
  $region20: #{model_forward.1} parent=0 // pred_region
    _
  $region21: #{model_forward.1} parent=0 // pred_fallthru
    _
  // Predicated region
  $region22: #{model_forward.1} parent=0 // pred_check
    _
  $region23: #{model_forward.1} parent=0 // pred_check_branch
    %26 = sbr.rel (0) target = $region25
  $region24: #{model_forward.1} parent=0 // pred_region
    _
  $region25: #{model_forward.1} parent=0 // pred_fallthru
    _
  // Predicated region
  $region26: #{model_forward.1} parent=0 // pred_check
    _
  $region27: #{model_forward.1} parent=0 // pred_check_branch
    %28 = sbr.rel (0) target = $region29
  $region28: #{model_forward.1} parent=0 // pred_region
    _
  $region29: #{model_forward.1} parent=0 // pred_fallthru
    _
  // Predicated region
  $region30: #{model_forward.1} parent=0 // pred_check
    _
  $region31: #{model_forward.1} parent=0 // pred_check_branch
    %30 = sbr.rel (0) target = $region33
  $region32: #{model_forward.1} parent=0 // pred_region
    _
  $region33: #{model_forward.1} parent=0 // pred_fallthru
    _
  // Predicated region
  $region34: #{model_forward.1} parent=0 // pred_check
    _
  $region35: #{model_forward.1} parent=0 // pred_check_branch
    %32 = sbr.rel (0) target = $region37
  $region36: #{model_forward.1} parent=0 // pred_region
    _
  $region37: #{model_forward.1} parent=0 // pred_fallthru
    _
  // Predicated region
  $region38: #{model_forward.1} parent=0 // pred_check
    _
  $region39: #{model_forward.1} parent=0 // pred_check_branch
    %34 = sbr.rel (0) target = $region41
  $region40: #{model_forward.1} parent=0 // pred_region
    _
  $region41: #{model_forward.1} parent=0 // pred_fallthru
    _
  %v35 = vld [vmem:[%s6] sm:$0xff]
  %v36 = vld [vmem:[%s6 + $0x8] sm:$0xff]
  %v37 = vld [vmem:[%s6 + $0x10] sm:$0xff]
  %v38 = vld [vmem:[%s6 + $0x18] sm:$0xff]
  %v39 = vld [vmem:[%s7] sm:$0xff]
  %v40 = vld [vmem:[%s7 + $0x8] sm:$0xff]
  %v41 = vld [vmem:[%s7 + $0x10] sm:$0xff]
  %v42 = vld [vmem:[%s7 + $0x18] sm:$0xff]
  %v43 = vld [vmem:[%s7 + $0x20] sm:$0xff]
  %v44 = vld [vmem:[%s7 + $0x28] sm:$0xff]
  %v45 = vld [vmem:[%s7 + $0x30] sm:$0xff]
  %v46 = vld [vmem:[%s7 + $0x38] sm:$0xff]
  %v47 = vld [vmem:[%s8] sm:$0xff]
  %v48 = vld [vmem:[%s8 + $0x8] sm:$0x3]
  %v49 = vld [vmem:[%s9] sm:$0xff]
  %v50 = vld [vmem:[%s9 + $0x8] sm:$0xff]
  %v51 = vld [vmem:[%s0] sm:$0xff]
  %v52 = vld [vmem:[%s0 + $0x8] sm:$0xff]
  %v53 = vld [vmem:[%s5] sm:$0x3f]
  %v54 = vlaneseq
  %v55 = vshrl.u32 %v54, 7
  %v56 = vsub.s32 0, %v55
  %v57 = vrot.slane %v47, %v56
  %vm58 = vcmask 48128
  %v60 = vsel %vm58, %v51, 0
  %v63 = vsel %vm58, %v52, 0
  %vm65 = vcmask 1045504
  %v67 = vsel %vm65, %v53, 0
  %69 = vmatprep.subr.mxu0 0.0
  %70 = vmatpush1.msra.mxu0 %v67
  %71 = vmatprep.subr.mxu0 0.0
  %72 = vmatpush1.msra.mxu0 0.0
  %73 = vmatprep.subr.mxu0 0.0
  %74 = vmatpush1.msra.mxu0 0.0
  %75 = vmatprep.subr.mxu0 0.0
  %76 = vmatpush1.msra.mxu0 0.0
  %77 = vmatprep.subr.mxu0 0.0
  %78 = vmatpush1.msra.mxu0 0.0
  %79 = vmatprep.subr.mxu0 0.0
  %80 = vmatpush1.msra.mxu0 0.0
  %81 = vmatprep.subr.mxu0 0.0
  %82 = vmatpush1.msra.mxu0 0.0
  %83 = vmatprep.subr.mxu0 0.0
  %84 = vmatpush1.msra.mxu0 0.0
  %85 = vmatprep.subr.mxu0 0.0
  %86 = vmatpush1.msra.mxu0 0.0
  %87 = vmatprep.subr.mxu0 0.0
  %88 = vmatpush1.msra.mxu0 0.0
  %89 = vmatprep.subr.mxu0 0.0
  %90 = vmatpush1.msra.mxu0 0.0
  %91 = vmatprep.subr.mxu0 0.0
  %92 = vmatpush1.msra.mxu0 0.0
  %93 = vmatprep.subr.mxu0 0.0
  %94 = vmatpush1.msra.mxu0 0.0
  %95 = vmatprep.subr.mxu0 0.0
  %96 = vmatpush1.msra.mxu0 0.0
  %97 = vmatprep.subr.mxu0 0.0
  %98 = vmatpush1.msra.mxu0 0.0
  %99 = vmatprep.subr.mxu0 0.0
  %100 = vmatpush1.msra.mxu0 0.0
  %101 = vmatprep.subr.mxu0 0.0
  %102 = vmatpush1.msra.mxu0 0.0
  %103 = vmatprep.subr.mxu0 0.0
  %104 = vmatpush1.msra.mxu0 0.0
  %105 = vmatprep.subr.mxu0 0.0
  %106 = vmatpush1.msra.mxu0 0.0
  %107 = vmatprep.subr.mxu0 0.0
  %108 = vmatpush1.msra.mxu0 0.0
  %109 = vmatprep.subr.mxu0 0.0
  %110 = vmatpush1.msra.mxu0 0.0
  %111 = vmatprep.subr.mxu0 0.0
  %112 = vmatpush1.msra.mxu0 0.0
  %113 = vmatprep.subr.mxu0 0.0
  %114 = vmatpush1.msra.mxu0 0.0
  %115 = vmatprep.subr.mxu0 0.0
  %116 = vmatpush1.msra.mxu0 0.0
  %117 = vmatprep.subr.mxu0 0.0
  %118 = vmatpush1.msra.mxu0 0.0
  %119 = vmatprep.subr.mxu0 0.0
  %120 = vmatpush1.msra.mxu0 0.0
  %121 = vmatprep.subr.mxu0 0.0
  %122 = vmatpush1.msra.mxu0 0.0
  %123 = vmatprep.subr.mxu0 0.0
  %124 = vmatpush1.msra.mxu0 0.0
  %125 = vmatprep.subr.mxu0 0.0
  %126 = vmatpush1.msra.mxu0 0.0
  %127 = vmatprep.subr.mxu0 0.0
  %128 = vmatpush1.msra.mxu0 0.0
  %129 = vmatprep.subr.mxu0 0.0
  %130 = vmatpush1.msra.mxu0 0.0
  %131 = vmatprep.subr.mxu0 0.0
  %132 = vmatpush1.msra.mxu0 0.0
  %133 = vmatprep.mubr.f32.mxu0 0.0
  %134 = vmatmul.mubr.f32.gmra.mrb[0].mxu0 %v60
  %v135 = vpop.f32.mrb[0].mxu0
  %v136 = vadd.f32 %v57, %v135
  %v137 = vpop.f32.mrb[0].mxu0
  %138 = vmatprep.mubr.f32.mxu0 0.0
  %139 = vmatmul.mubr.f32.gmra.mrb[0].mxu0 %v63
  %v140 = vpop.f32.mrb[0].mxu0
  %v141 = vadd.f32 %v57, %v140
  %v142 = vpop.f32.mrb[0].mxu0
  %143 = vdwg.mxu0
  %v144 = vld [vmem:[%s2] sm:$0xff]
  %v145 = vld [vmem:[%s2 + $0x8] sm:$0xff]
  %v146 = vld [vmem:[%s1] sm:$0x1f]
  %v147 = vld [vmem:[%s1 + $0x8] sm:$0x1f]
  %v148 = vld [vmem:[%s1 + $0x10] sm:$0x1f]
  %v149 = vld [vmem:[%s1 + $0x18] sm:$0x1f]
  %v150 = vld [vmem:[%s1 + $0x20] sm:$0x1f]
  %v151 = vld [vmem:[%s1 + $0x28] sm:$0x1f]
  %v152 = vld [vmem:[%s1 + $0x30] sm:$0x1f]
  %v153 = vld [vmem:[%s1 + $0x38] sm:$0x1f]
  %v154 = vld [vmem:[%s1 + $0x40] sm:$0x1f]
  %v155 = vld [vmem:[%s1 + $0x48] sm:$0x1f]
  %v156 = vld [vmem:[%s1 + $0x50] sm:$0x1f]
  %v157 = vld [vmem:[%s1 + $0x58] sm:$0x1f]
  %v158 = vld [vmem:[%s1 + $0x60] sm:$0x1f]
  %v159 = vld [vmem:[%s1 + $0x68] sm:$0x1f]
  %v160 = vld [vmem:[%s1 + $0x70] sm:$0x1f]
  %v161 = vld [vmem:[%s1 + $0x78] sm:$0x1f]
  %vm162 = vcmask 261120
  %v164 = vsel %vm162, %v136, 0
  %v167 = vsel %vm162, %v141, 0
  %169 = vmatprep.subr.mxu0 0.0
  %170 = vmatpush1.msra.mxu0 %v35
  %171 = vmatprep.subr.mxu0 0.0
  %172 = vmatpush1.msra.mxu0 %v36
  %173 = vmatprep.subr.mxu0 0.0
  %174 = vmatpush1.msra.mxu0 %v37
  %175 = vmatprep.subr.mxu0 0.0
  %176 = vmatpush1.msra.mxu0 %v38
  %177 = vmatprep.subr.mxu0 0.0
  %178 = vmatpush1.msra.mxu0 0.0
  %179 = vmatprep.subr.mxu0 0.0
  %180 = vmatpush1.msra.mxu0 0.0
  %181 = vmatprep.subr.mxu0 0.0
  %182 = vmatpush1.msra.mxu0 0.0
  %183 = vmatprep.subr.mxu0 0.0
  %184 = vmatpush1.msra.mxu0 0.0
  %185 = vmatprep.subr.mxu0 0.0
  %186 = vmatpush1.msra.mxu0 0.0
  %187 = vmatprep.subr.mxu0 0.0
  %188 = vmatpush1.msra.mxu0 0.0
  %189 = vmatprep.subr.mxu0 0.0
  %190 = vmatpush1.msra.mxu0 0.0
  %191 = vmatprep.subr.mxu0 0.0
  %192 = vmatpush1.msra.mxu0 0.0
  %193 = vmatprep.subr.mxu0 0.0
  %194 = vmatpush1.msra.mxu0 0.0
  %195 = vmatprep.subr.mxu0 0.0
  %196 = vmatpush1.msra.mxu0 0.0
  %197 = vmatprep.subr.mxu0 0.0
  %198 = vmatpush1.msra.mxu0 0.0
  %199 = vmatprep.subr.mxu0 0.0
  %200 = vmatpush1.msra.mxu0 0.0
  %201 = vmatprep.subr.mxu0 0.0
  %202 = vmatpush1.msra.mxu0 0.0
  %203 = vmatprep.subr.mxu0 0.0
  %204 = vmatpush1.msra.mxu0 0.0
  %205 = vmatprep.subr.mxu0 0.0
  %206 = vmatpush1.msra.mxu0 0.0
  %207 = vmatprep.subr.mxu0 0.0
  %208 = vmatpush1.msra.mxu0 0.0
  %209 = vmatprep.subr.mxu0 0.0
  %210 = vmatpush1.msra.mxu0 0.0
  %211 = vmatprep.subr.mxu0 0.0
  %212 = vmatpush1.msra.mxu0 0.0
  %213 = vmatprep.subr.mxu0 0.0
  %214 = vmatpush1.msra.mxu0 0.0
  %215 = vmatprep.subr.mxu0 0.0
  %216 = vmatpush1.msra.mxu0 0.0
  %217 = vmatprep.subr.mxu0 0.0
  %218 = vmatpush1.msra.mxu0 0.0
  %219 = vmatprep.subr.mxu0 0.0
  %220 = vmatpush1.msra.mxu0 0.0
  %221 = vmatprep.subr.mxu0 0.0
  %222 = vmatpush1.msra.mxu0 0.0
  %223 = vmatprep.subr.mxu0 0.0
  %224 = vmatpush1.msra.mxu0 0.0
  %225 = vmatprep.subr.mxu0 0.0
  %226 = vmatpush1.msra.mxu0 0.0
  %227 = vmatprep.subr.mxu0 0.0
  %228 = vmatpush1.msra.mxu0 0.0
  %229 = vmatprep.subr.mxu0 0.0
  %230 = vmatpush1.msra.mxu0 0.0
  %231 = vmatprep.subr.mxu0 0.0
  %232 = vmatpush1.msra.mxu0 0.0
  %233 = vmatprep.mubr.f32.mxu0 0.0
  %234 = vmatmul.mubr.f32.gmra.mrb[0].mxu0 %v164
  %v235 = vpop.f32.mrb[0].mxu0
  %v236 = vadd.f32 0.0, %v235
  %v237 = vpop.f32.mrb[0].mxu0
  %238 = vmatprep.mubr.f32.mxu0 0.0
  %239 = vmatmul.mubr.f32.gmra.mrb[0].mxu0 %v167
  %v240 = vpop.f32.mrb[0].mxu0
  %v241 = vadd.f32 0.0, %v240
  %v242 = vpop.f32.mrb[0].mxu0
  %243 = vdwg.mxu0
  %v244 = vlaneseq
  %v245 = vshrl.u32 %v244, 7
  %v246 = vsub.s32 0, %v245
  %v247 = vrot.slane %v236, %v246
  %249 = vbcast.lane.b32.xlu0 %v247, 256
  %v250 = vpop.permute.xlu0 %249
  %v251 = vlaneseq
  %v252 = vshrl.u32 %v251, 7
  %v253 = vsub.s32 1, %v252
  %v254 = vrot.slane %v236, %v253
  %256 = vbcast.lane.b32.xlu0 %v254, 256
  %v257 = vpop.permute.xlu0 %256
  %v258 = vlaneseq
  %v259 = vshrl.u32 %v258, 7
  %v260 = vsub.s32 2, %v259
  %v261 = vrot.slane %v236, %v260
  %263 = vbcast.lane.b32.xlu0 %v261, 256
  %v264 = vpop.permute.xlu0 %263
  %v265 = vlaneseq
  %v266 = vshrl.u32 %v265, 7
  %v267 = vsub.s32 3, %v266
  %v268 = vrot.slane %v236, %v267
  %270 = vbcast.lane.b32.xlu0 %v268, 256
  %v271 = vpop.permute.xlu0 %270
  %v272 = vlaneseq
  %v273 = vshrl.u32 %v272, 7
  %v274 = vsub.s32 4, %v273
  %v275 = vrot.slane %v236, %v274
  %277 = vbcast.lane.b32.xlu0 %v275, 256
  %v278 = vpop.permute.xlu0 %277
  %v279 = vlaneseq
  %v280 = vshrl.u32 %v279, 7
  %v281 = vsub.s32 5, %v280
  %v282 = vrot.slane %v236, %v281
  %284 = vbcast.lane.b32.xlu0 %v282, 256
  %v285 = vpop.permute.xlu0 %284
  %v286 = vlaneseq
  %v287 = vshrl.u32 %v286, 7
  %v288 = vsub.s32 6, %v287
  %v289 = vrot.slane %v236, %v288
  %291 = vbcast.lane.b32.xlu0 %v289, 256
  %v292 = vpop.permute.xlu0 %291
  %v293 = vlaneseq
  %v294 = vshrl.u32 %v293, 7
  %v295 = vsub.s32 7, %v294
  %v296 = vrot.slane %v236, %v295
  %298 = vbcast.lane.b32.xlu0 %v296, 256
  %v299 = vpop.permute.xlu0 %298
  %v300 = vlaneseq
  %v301 = vshrl.u32 %v300, 7
  %v302 = vsub.s32 0, %v301
  %v303 = vrot.slane %v241, %v302
  %305 = vbcast.lane.b32.xlu0 %v303, 256
  %v306 = vpop.permute.xlu0 %305
  %v307 = vlaneseq
  %v308 = vshrl.u32 %v307, 7
  %v309 = vsub.s32 1, %v308
  %v310 = vrot.slane %v241, %v309
  %312 = vbcast.lane.b32.xlu0 %v310, 256
  %v313 = vpop.permute.xlu0 %312
  %v314 = vlaneseq
  %v315 = vshrl.u32 %v314, 7
  %v316 = vsub.s32 2, %v315
  %v317 = vrot.slane %v241, %v316
  %319 = vbcast.lane.b32.xlu0 %v317, 256
  %v320 = vpop.permute.xlu0 %319
  %v321 = vlaneseq
  %v322 = vshrl.u32 %v321, 7
  %v323 = vsub.s32 3, %v322
  %v324 = vrot.slane %v241, %v323
  %326 = vbcast.lane.b32.xlu0 %v324, 256
  %v327 = vpop.permute.xlu0 %326
  %v328 = vlaneseq
  %v329 = vshrl.u32 %v328, 7
  %v330 = vsub.s32 4, %v329
  %v331 = vrot.slane %v241, %v330
  %333 = vbcast.lane.b32.xlu0 %v331, 256
  %v334 = vpop.permute.xlu0 %333
  %v335 = vlaneseq
  %v336 = vshrl.u32 %v335, 7
  %v337 = vsub.s32 5, %v336
  %v338 = vrot.slane %v241, %v337
  %340 = vbcast.lane.b32.xlu0 %v338, 256
  %v341 = vpop.permute.xlu0 %340
  %v342 = vlaneseq
  %v343 = vshrl.u32 %v342, 7
  %v344 = vsub.s32 6, %v343
  %v345 = vrot.slane %v241, %v344
  %347 = vbcast.lane.b32.xlu0 %v345, 256
  %v348 = vpop.permute.xlu0 %347
  %v349 = vlaneseq
  %v350 = vshrl.u32 %v349, 7
  %v351 = vsub.s32 7, %v350
  %v352 = vrot.slane %v241, %v351
  %354 = vbcast.lane.b32.xlu0 %v352, 256
  %v355 = vpop.permute.xlu0 %354
  %v356 = vmul.f32 %v146, %v250
  %v357 = vmul.f32 %v147, %v257
  %v358 = vmul.f32 %v148, %v264
  %v359 = vmul.f32 %v149, %v271
  %v360 = vmul.f32 %v150, %v278
  %v361 = vmul.f32 %v151, %v285
  %v362 = vmul.f32 %v152, %v292
  %v363 = vmul.f32 %v153, %v299
  %v364 = vmul.f32 %v154, %v306
  %v365 = vmul.f32 %v155, %v313
  %v366 = vmul.f32 %v156, %v320
  %v367 = vmul.f32 %v157, %v327
  %v368 = vmul.f32 %v158, %v334
  %v369 = vmul.f32 %v159, %v341
  %v370 = vmul.f32 %v160, %v348
  %v371 = vmul.f32 %v161, %v355
  %vm372 = vcmask 126976
  %v373 = vsel %vm372, %v356, 0.0
  %v374 = vrot.slane %v373, 4
  %v375 = vadd.f32 %v373, %v374
  %v376 = vrot.slane %v375, 2
  %v377 = vadd.f32 %v375, %v376
  %v378 = vrot.slane %v377, 1
  %v379 = vadd.f32 %v377, %v378
  %v380 = vsel %vm372, %v357, 0.0
  %v381 = vrot.slane %v380, 4
  %v382 = vadd.f32 %v380, %v381
  %v383 = vrot.slane %v382, 2
  %v384 = vadd.f32 %v382, %v383
  %v385 = vrot.slane %v384, 1
  %v386 = vadd.f32 %v384, %v385
  %v387 = vsel %vm372, %v358, 0.0
  %v388 = vrot.slane %v387, 4
  %v389 = vadd.f32 %v387, %v388
  %v390 = vrot.slane %v389, 2
  %v391 = vadd.f32 %v389, %v390
  %v392 = vrot.slane %v391, 1
  %v393 = vadd.f32 %v391, %v392
  %v394 = vsel %vm372, %v359, 0.0
  %v395 = vrot.slane %v394, 4
  %v396 = vadd.f32 %v394, %v395
  %v397 = vrot.slane %v396, 2
  %v398 = vadd.f32 %v396, %v397
  %v399 = vrot.slane %v398, 1
  %v400 = vadd.f32 %v398, %v399
  %v401 = vsel %vm372, %v360, 0.0
  %v402 = vrot.slane %v401, 4
  %v403 = vadd.f32 %v401, %v402
  %v404 = vrot.slane %v403, 2
  %v405 = vadd.f32 %v403, %v404
  %v406 = vrot.slane %v405, 1
  %v407 = vadd.f32 %v405, %v406
  %v408 = vsel %vm372, %v361, 0.0
  %v409 = vrot.slane %v408, 4
  %v410 = vadd.f32 %v408, %v409
  %v411 = vrot.slane %v410, 2
  %v412 = vadd.f32 %v410, %v411
  %v413 = vrot.slane %v412, 1
  %v414 = vadd.f32 %v412, %v413
  %v415 = vsel %vm372, %v362, 0.0
  %v416 = vrot.slane %v415, 4
  %v417 = vadd.f32 %v415, %v416
  %v418 = vrot.slane %v417, 2
  %v419 = vadd.f32 %v417, %v418
  %v420 = vrot.slane %v419, 1
  %v421 = vadd.f32 %v419, %v420
  %v422 = vsel %vm372, %v363, 0.0
  %v423 = vrot.slane %v422, 4
  %v424 = vadd.f32 %v422, %v423
  %v425 = vrot.slane %v424, 2
  %v426 = vadd.f32 %v424, %v425
  %v427 = vrot.slane %v426, 1
  %v428 = vadd.f32 %v426, %v427
  %v429 = vsel %vm372, %v364, 0.0
  %v430 = vrot.slane %v429, 4
  %v431 = vadd.f32 %v429, %v430
  %v432 = vrot.slane %v431, 2
  %v433 = vadd.f32 %v431, %v432
  %v434 = vrot.slane %v433, 1
  %v435 = vadd.f32 %v433, %v434
  %v436 = vsel %vm372, %v365, 0.0
  %v437 = vrot.slane %v436, 4
  %v438 = vadd.f32 %v436, %v437
  %v439 = vrot.slane %v438, 2
  %v440 = vadd.f32 %v438, %v439
  %v441 = vrot.slane %v440, 1
  %v442 = vadd.f32 %v440, %v441
  %v443 = vsel %vm372, %v366, 0.0
  %v444 = vrot.slane %v443, 4
  %v445 = vadd.f32 %v443, %v444
  %v446 = vrot.slane %v445, 2
  %v447 = vadd.f32 %v445, %v446
  %v448 = vrot.slane %v447, 1
  %v449 = vadd.f32 %v447, %v448
  %v450 = vsel %vm372, %v367, 0.0
  %v451 = vrot.slane %v450, 4
  %v452 = vadd.f32 %v450, %v451
  %v453 = vrot.slane %v452, 2
  %v454 = vadd.f32 %v452, %v453
  %v455 = vrot.slane %v454, 1
  %v456 = vadd.f32 %v454, %v455
  %v457 = vsel %vm372, %v368, 0.0
  %v458 = vrot.slane %v457, 4
  %v459 = vadd.f32 %v457, %v458
  %v460 = vrot.slane %v459, 2
  %v461 = vadd.f32 %v459, %v460
  %v462 = vrot.slane %v461, 1
  %v463 = vadd.f32 %v461, %v462
  %v464 = vsel %vm372, %v369, 0.0
  %v465 = vrot.slane %v464, 4
  %v466 = vadd.f32 %v464, %v465
  %v467 = vrot.slane %v466, 2
  %v468 = vadd.f32 %v466, %v467
  %v469 = vrot.slane %v468, 1
  %v470 = vadd.f32 %v468, %v469
  %v471 = vsel %vm372, %v370, 0.0
  %v472 = vrot.slane %v471, 4
  %v473 = vadd.f32 %v471, %v472
  %v474 = vrot.slane %v473, 2
  %v475 = vadd.f32 %v473, %v474
  %v476 = vrot.slane %v475, 1
  %v477 = vadd.f32 %v475, %v476
  %v478 = vsel %vm372, %v371, 0.0
  %v479 = vrot.slane %v478, 4
  %v480 = vadd.f32 %v478, %v479
  %v481 = vrot.slane %v480, 2
  %v482 = vadd.f32 %v480, %v481
  %v483 = vrot.slane %v482, 1
  %v484 = vadd.f32 %v482, %v483
  %485 = vrot.lane.b32.xlu0 %v136, 96
  %v486 = vpop.permute.xlu0 %485
  %487 = vrot.lane.b32.xlu0 %v141, 96
  %v488 = vpop.permute.xlu0 %487
  %vm505 = vcmask 1041409
  %v506 = vsel %vm505, %v386, %v379
  %vm507 = vcmask 1042434
  %v508 = vsel %vm507, %v393, %v506
  %vm509 = vcmask 1043459
  %v510 = vsel %vm509, %v400, %v508
  %vm511 = vcmask 1044484
  %v512 = vsel %vm511, %v407, %v510
  %vm513 = vcmask 1045509
  %v514 = vsel %vm513, %v414, %v512
  %vm515 = vcmask 1046534
  %v516 = vsel %vm515, %v421, %v514
  %vm517 = vcmask 1047559
  %v518 = vsel %vm517, %v428, %v516
  %v519 = vsel %vm505, %v442, %v435
  %v520 = vsel %vm507, %v449, %v519
  %v521 = vsel %vm509, %v456, %v520
  %v522 = vsel %vm511, %v463, %v521
  %v523 = vsel %vm513, %v470, %v522
  %v524 = vsel %vm515, %v477, %v523
  %v525 = vsel %vm517, %v484, %v524
  %v528 = vsel %vm162, %v486, 0
  %v530 = vsel %vm162, %v488, 0
  %532 = vmatprep.subr.mxu0 0.0
  %533 = vmatpush1.xpose.msra.mxu0 %v528
  %534 = vmatprep.subr.mxu0 0.0
  %535 = vmatpush1.xpose.msra.mxu0 %v530
  %536 = vmatprep.subr.mxu0 0.0
  %537 = vmatpush1.xpose.msra.mxu0 0.0
  %538 = vmatprep.subr.mxu0 0.0
  %539 = vmatpush1.xpose.msra.mxu0 0.0
  %540 = vmatprep.subr.mxu0 0.0
  %541 = vmatpush1.xpose.msra.mxu0 0.0
  %542 = vmatprep.subr.mxu0 0.0
  %543 = vmatpush1.xpose.msra.mxu0 0.0
  %544 = vmatprep.subr.mxu0 0.0
  %545 = vmatpush1.xpose.msra.mxu0 0.0
  %546 = vmatprep.subr.mxu0 0.0
  %547 = vmatpush1.xpose.msra.mxu0 0.0
  %548 = vmatprep.subr.mxu0 0.0
  %549 = vmatpush1.xpose.msra.mxu0 0.0
  %550 = vmatprep.subr.mxu0 0.0
  %551 = vmatpush1.xpose.msra.mxu0 0.0
  %552 = vmatprep.subr.mxu0 0.0
  %553 = vmatpush1.xpose.msra.mxu0 0.0
  %554 = vmatprep.subr.mxu0 0.0
  %555 = vmatpush1.xpose.msra.mxu0 0.0
  %556 = vmatprep.subr.mxu0 0.0
  %557 = vmatpush1.xpose.msra.mxu0 0.0
  %558 = vmatprep.subr.mxu0 0.0
  %559 = vmatpush1.xpose.msra.mxu0 0.0
  %560 = vmatprep.subr.mxu0 0.0
  %561 = vmatpush1.xpose.msra.mxu0 0.0
  %562 = vmatprep.subr.mxu0 0.0
  %563 = vmatpush1.xpose.msra.mxu0 0.0
  %564 = vmatprep.subr.mxu0 0.0
  %565 = vmatpush1.xpose.msra.mxu0 0.0
  %566 = vmatprep.subr.mxu0 0.0
  %567 = vmatpush1.xpose.msra.mxu0 0.0
  %568 = vmatprep.subr.mxu0 0.0
  %569 = vmatpush1.xpose.msra.mxu0 0.0
  %570 = vmatprep.subr.mxu0 0.0
  %571 = vmatpush1.xpose.msra.mxu0 0.0
  %572 = vmatprep.subr.mxu0 0.0
  %573 = vmatpush1.xpose.msra.mxu0 0.0
  %574 = vmatprep.subr.mxu0 0.0
  %575 = vmatpush1.xpose.msra.mxu0 0.0
  %576 = vmatprep.subr.mxu0 0.0
  %577 = vmatpush1.xpose.msra.mxu0 0.0
  %578 = vmatprep.subr.mxu0 0.0
  %579 = vmatpush1.xpose.msra.mxu0 0.0
  %580 = vmatprep.subr.mxu0 0.0
  %581 = vmatpush1.xpose.msra.mxu0 0.0
  %582 = vmatprep.subr.mxu0 0.0
  %583 = vmatpush1.xpose.msra.mxu0 0.0
  %584 = vmatprep.subr.mxu0 0.0
  %585 = vmatpush1.xpose.msra.mxu0 0.0
  %586 = vmatprep.subr.mxu0 0.0
  %587 = vmatpush1.xpose.msra.mxu0 0.0
  %588 = vmatprep.subr.mxu0 0.0
  %589 = vmatpush1.xpose.msra.mxu0 0.0
  %590 = vmatprep.subr.mxu0 0.0
  %591 = vmatpush1.xpose.msra.mxu0 0.0
  %592 = vmatprep.subr.mxu0 0.0
  %593 = vmatpush1.xpose.msra.mxu0 0.0
  %594 = vmatprep.subr.mxu0 0.0
  %595 = vmatpush1.xpose.msra.mxu0 0.0
  %596 = vmatprep.mubr.f32.mxu0 0.0
  %597 = vmatmul.mubr.f32.gmra.mrb[0].mxu0 %v164
  %v598 = vpop.f32.mrb[0].mxu0
  %v599 = vadd.f32 %v518, %v598
  %v600 = vpop.f32.mrb[0].mxu0
  %601 = vmatprep.mubr.f32.mxu0 0.0
  %602 = vmatmul.mubr.f32.gmra.mrb[0].mxu0 %v167
  %v603 = vpop.f32.mrb[0].mxu0
  %v604 = vadd.f32 %v525, %v603
  %v605 = vpop.f32.mrb[0].mxu0
  %606 = vdwg.mxu0
  %v607 = vmul.f32 %v599, 0.17677669
  %v608 = vmul.f32 %v604, 0.17677669
  %vm609 = vcmp.gt.f32.partialorder %v144, 0.0
  %vm610 = vcmp.gt.f32.partialorder %v145, 0.0
  %v611 = vsel %vm609, %v607, -1e+30
  %v612 = vsel %vm610, %v608, -1e+30
  %vm613 = vcmask 130048
  %v614 = vsel %vm613, %v611, -inf
  %615 = vmax.xlane.f32.xlu0 %v614
  %v616 = vpop.xlane.xlu0 %615
  %v617 = vsel %vm613, %v612, -inf
  %618 = vmax.xlane.f32.xlu0 %v617
  %v619 = vpop.xlane.xlu0 %618
  %v620 = vsub.f32 %v611, %v616
  %v621 = vsub.f32 %v612, %v619
  %v622 = vmul.f32 %v620, 1.442695
  %v623 = vpow.pop %v622
  %v624 = vmul.f32 %v621, 1.442695
  %v625 = vpow.pop %v624
  %v626 = vmul.f32 %v623, %v144
  %v627 = vmul.f32 %v625, %v145
  %v628 = vsel %vm613, %v626, 0.0
  %629 = vadd.xlane.f32.xlu0 %v628
  %v630 = vpop.xlane.xlu0 %629
  %v631 = vsel %vm613, %v627, 0.0
  %632 = vadd.xlane.f32.xlu0 %v631
  %v633 = vpop.xlane.xlu0 %632
  %v634 = vmax.f32 %v630, 1e-16
  %v635 = vmax.f32 %v633, 1e-16
  %v636 = vrcp.pop %v634
  %v637 = vrcp.pop %v635
  %v638 = vmul.f32 %v626, %v636
  %v639 = vmul.f32 %v627, %v637
  %v642 = vcombine.high %v638, %v638
  %v644 = vunpack.c.l.s4 1966171168
  %v645 = vunpack.c.0.s8 %v644
  %v646 = vlaneseq
  %v647 = vshrl.u32 %v646, 7
  %v648 = vsub.s32 %v645, %v647
  %v649 = vrot.slane %v638, %v648
  %v651 = vunpack.c.l.s4 1966171168
  %v652 = vunpack.c.0.s8 %v651
  %v653 = vlaneseq
  %v654 = vshrl.u32 %v653, 7
  %v655 = vsub.s32 %v652, %v654
  %v656 = vrot.slane %v642, %v655
  %v657 = vcombine.high %v649, %v649
  %v658 = vcombine.high %v656, %v656
  %v660 = vunpack.c.l.s4 1966171168
  %v661 = vunpack.c.0.s8 %v660
  %v662 = vlaneseq
  %v663 = vshrl.u32 %v662, 7
  %v664 = vsub.s32 %v661, %v663
  %v665 = vrot.slane %v649, %v664
  %v667 = vunpack.c.l.s4 1966171168
  %v668 = vunpack.c.0.s8 %v667
  %v669 = vlaneseq
  %v670 = vshrl.u32 %v669, 7
  %v671 = vsub.s32 %v668, %v670
  %v672 = vrot.slane %v656, %v671
  %v674 = vunpack.c.l.s4 1966171168
  %v675 = vunpack.c.0.s8 %v674
  %v676 = vlaneseq
  %v677 = vshrl.u32 %v676, 7
  %v678 = vsub.s32 %v675, %v677
  %v679 = vrot.slane %v657, %v678
  %v681 = vunpack.c.l.s4 1966171168
  %v682 = vunpack.c.0.s8 %v681
  %v683 = vlaneseq
  %v684 = vshrl.u32 %v683, 7
  %v685 = vsub.s32 %v682, %v684
  %v686 = vrot.slane %v658, %v685
  %v687 = vcombine.high %v665, %v665
  %v688 = vcombine.high %v672, %v672
  %v689 = vcombine.high %v679, %v679
  %v690 = vcombine.high %v686, %v686
  %v691 = vcombine.high %v639, %v639
  %v693 = vunpack.c.l.s4 1966171168
  %v694 = vunpack.c.0.s8 %v693
  %v695 = vlaneseq
  %v696 = vshrl.u32 %v695, 7
  %v697 = vsub.s32 %v694, %v696
  %v698 = vrot.slane %v639, %v697
  %v700 = vunpack.c.l.s4 1966171168
  %v701 = vunpack.c.0.s8 %v700
  %v702 = vlaneseq
  %v703 = vshrl.u32 %v702, 7
  %v704 = vsub.s32 %v701, %v703
  %v705 = vrot.slane %v691, %v704
  %v706 = vcombine.high %v698, %v698
  %v707 = vcombine.high %v705, %v705
  %v709 = vunpack.c.l.s4 1966171168
  %v710 = vunpack.c.0.s8 %v709
  %v711 = vlaneseq
  %v712 = vshrl.u32 %v711, 7
  %v713 = vsub.s32 %v710, %v712
  %v714 = vrot.slane %v698, %v713
  %v716 = vunpack.c.l.s4 1966171168
  %v717 = vunpack.c.0.s8 %v716
  %v718 = vlaneseq
  %v719 = vshrl.u32 %v718, 7
  %v720 = vsub.s32 %v717, %v719
  %v721 = vrot.slane %v705, %v720
  %v723 = vunpack.c.l.s4 1966171168
  %v724 = vunpack.c.0.s8 %v723
  %v725 = vlaneseq
  %v726 = vshrl.u32 %v725, 7
  %v727 = vsub.s32 %v724, %v726
  %v728 = vrot.slane %v706, %v727
  %v730 = vunpack.c.l.s4 1966171168
  %v731 = vunpack.c.0.s8 %v730
  %v732 = vlaneseq
  %v733 = vshrl.u32 %v732, 7
  %v734 = vsub.s32 %v731, %v733
  %v735 = vrot.slane %v707, %v734
  %v736 = vcombine.high %v714, %v714
  %v737 = vcombine.high %v721, %v721
  %v738 = vcombine.high %v728, %v728
  %v739 = vcombine.high %v735, %v735
  %v740 = vlaneseq
  %v741 = vshrl.u32 %v740, 7
  %v742 = vsub.s32 0, %v741
  %v743 = vrot.slane %v665, %v742
  %v744 = vlaneseq
  %v745 = vshrl.u32 %v744, 7
  %v746 = vsub.s32 0, %v745
  %v747 = vrot.slane %v679, %v746
  %v748 = vlaneseq
  %v749 = vshrl.u32 %v748, 7
  %v750 = vsub.s32 0, %v749
  %v751 = vrot.slane %v687, %v750
  %v752 = vlaneseq
  %v753 = vshrl.u32 %v752, 7
  %v754 = vsub.s32 0, %v753
  %v755 = vrot.slane %v689, %v754
  %v756 = vlaneseq
  %v757 = vshrl.u32 %v756, 7
  %v758 = vsub.s32 0, %v757
  %v759 = vrot.slane %v672, %v758
  %v760 = vlaneseq
  %v761 = vshrl.u32 %v760, 7
  %v762 = vsub.s32 0, %v761
  %v763 = vrot.slane %v686, %v762
  %v764 = vlaneseq
  %v765 = vshrl.u32 %v764, 7
  %v766 = vsub.s32 0, %v765
  %v767 = vrot.slane %v688, %v766
  %v768 = vlaneseq
  %v769 = vshrl.u32 %v768, 7
  %v770 = vsub.s32 0, %v769
  %v771 = vrot.slane %v690, %v770
  %v772 = vlaneseq
  %v773 = vshrl.u32 %v772, 7
  %v774 = vsub.s32 0, %v773
  %v775 = vrot.slane %v714, %v774
  %v776 = vlaneseq
  %v777 = vshrl.u32 %v776, 7
  %v778 = vsub.s32 0, %v777
  %v779 = vrot.slane %v728, %v778
  %v780 = vlaneseq
  %v781 = vshrl.u32 %v780, 7
  %v782 = vsub.s32 0, %v781
  %v783 = vrot.slane %v736, %v782
  %v784 = vlaneseq
  %v785 = vshrl.u32 %v784, 7
  %v786 = vsub.s32 0, %v785
  %v787 = vrot.slane %v738, %v786
  %v788 = vlaneseq
  %v789 = vshrl.u32 %v788, 7
  %v790 = vsub.s32 0, %v789
  %v791 = vrot.slane %v721, %v790
  %v792 = vlaneseq
  %v793 = vshrl.u32 %v792, 7
  %v794 = vsub.s32 0, %v793
  %v795 = vrot.slane %v735, %v794
  %v796 = vlaneseq
  %v797 = vshrl.u32 %v796, 7
  %v798 = vsub.s32 0, %v797
  %v799 = vrot.slane %v737, %v798
  %v800 = vlaneseq
  %v801 = vshrl.u32 %v800, 7
  %v802 = vsub.s32 0, %v801
  %v803 = vrot.slane %v739, %v802
  %v820 = vmul.f32 %v146, %v743
  %v821 = vmul.f32 %v147, %v747
  %v822 = vmul.f32 %v148, %v751
  %v823 = vmul.f32 %v149, %v755
  %v824 = vmul.f32 %v150, %v759
  %v825 = vmul.f32 %v151, %v763
  %v826 = vmul.f32 %v152, %v767
  %v827 = vmul.f32 %v153, %v771
  %v828 = vmul.f32 %v154, %v775
  %v829 = vmul.f32 %v155, %v779
  %v830 = vmul.f32 %v156, %v783
  %v831 = vmul.f32 %v157, %v787
  %v832 = vmul.f32 %v158, %v791
  %v833 = vmul.f32 %v159, %v795
  %v834 = vmul.f32 %v160, %v799
  %v835 = vmul.f32 %v161, %v803
  %v836 = vsel %vm372, %v820, 0.0
  %837 = vadd.xlane.f32.xlu0 %v836
  %v838 = vpop.xlane.xlu0 %837
  %v839 = vsel %vm372, %v821, 0.0
  %840 = vadd.xlane.f32.xlu0 %v839
  %v841 = vpop.xlane.xlu0 %840
  %v842 = vsel %vm372, %v822, 0.0
  %843 = vadd.xlane.f32.xlu0 %v842
  %v844 = vpop.xlane.xlu0 %843
  %v845 = vsel %vm372, %v823, 0.0
  %846 = vadd.xlane.f32.xlu0 %v845
  %v847 = vpop.xlane.xlu0 %846
  %v848 = vsel %vm372, %v824, 0.0
  %849 = vadd.xlane.f32.xlu0 %v848
  %v850 = vpop.xlane.xlu0 %849
  %v851 = vsel %vm372, %v825, 0.0
  %852 = vadd.xlane.f32.xlu0 %v851
  %v853 = vpop.xlane.xlu0 %852
  %v854 = vsel %vm372, %v826, 0.0
  %855 = vadd.xlane.f32.xlu0 %v854
  %v856 = vpop.xlane.xlu0 %855
  %v857 = vsel %vm372, %v827, 0.0
  %858 = vadd.xlane.f32.xlu0 %v857
  %v859 = vpop.xlane.xlu0 %858
  %v860 = vsel %vm372, %v828, 0.0
  %861 = vadd.xlane.f32.xlu0 %v860
  %v862 = vpop.xlane.xlu0 %861
  %v863 = vsel %vm372, %v829, 0.0
  %864 = vadd.xlane.f32.xlu0 %v863
  %v865 = vpop.xlane.xlu0 %864
  %v866 = vsel %vm372, %v830, 0.0
  %867 = vadd.xlane.f32.xlu0 %v866
  %v868 = vpop.xlane.xlu0 %867
  %v869 = vsel %vm372, %v831, 0.0
  %870 = vadd.xlane.f32.xlu0 %v869
  %v871 = vpop.xlane.xlu0 %870
  %v872 = vsel %vm372, %v832, 0.0
  %873 = vadd.xlane.f32.xlu0 %v872
  %v874 = vpop.xlane.xlu0 %873
  %v875 = vsel %vm372, %v833, 0.0
  %876 = vadd.xlane.f32.xlu0 %v875
  %v877 = vpop.xlane.xlu0 %876
  %v878 = vsel %vm372, %v834, 0.0
  %879 = vadd.xlane.f32.xlu0 %v878
  %v880 = vpop.xlane.xlu0 %879
  %v881 = vsel %vm372, %v835, 0.0
  %882 = vadd.xlane.f32.xlu0 %v881
  %v883 = vpop.xlane.xlu0 %882
  %v900 = vlaneseq
  %v901 = vand.u32 %v900, 127
  %v902 = vlaneseq
  %v903 = vshrl.u32 %v902, 7
  %v904 = vsub.s32 %v901, %v903
  %v905 = vrot.slane %v838, %v904
  %v906 = vlaneseq
  %v907 = vshrl.u32 %v906, 7
  %v908 = vsub.s32 %v901, %v907
  %v909 = vrot.slane %v841, %v908
  %v910 = vlaneseq
  %v911 = vshrl.u32 %v910, 7
  %v912 = vsub.s32 %v901, %v911
  %v913 = vrot.slane %v844, %v912
  %v914 = vlaneseq
  %v915 = vshrl.u32 %v914, 7
  %v916 = vsub.s32 %v901, %v915
  %v917 = vrot.slane %v847, %v916
  %v918 = vlaneseq
  %v919 = vshrl.u32 %v918, 7
  %v920 = vsub.s32 %v901, %v919
  %v921 = vrot.slane %v850, %v920
  %v922 = vlaneseq
  %v923 = vshrl.u32 %v922, 7
  %v924 = vsub.s32 %v901, %v923
  %v925 = vrot.slane %v853, %v924
  %v926 = vlaneseq
  %v927 = vshrl.u32 %v926, 7
  %v928 = vsub.s32 %v901, %v927
  %v929 = vrot.slane %v856, %v928
  %v930 = vlaneseq
  %v931 = vshrl.u32 %v930, 7
  %v932 = vsub.s32 %v901, %v931
  %v933 = vrot.slane %v859, %v932
  %v934 = vlaneseq
  %v935 = vshrl.u32 %v934, 7
  %v936 = vsub.s32 %v901, %v935
  %v937 = vrot.slane %v862, %v936
  %v938 = vlaneseq
  %v939 = vshrl.u32 %v938, 7
  %v940 = vsub.s32 %v901, %v939
  %v941 = vrot.slane %v865, %v940
  %v942 = vlaneseq
  %v943 = vshrl.u32 %v942, 7
  %v944 = vsub.s32 %v901, %v943
  %v945 = vrot.slane %v868, %v944
  %v946 = vlaneseq
  %v947 = vshrl.u32 %v946, 7
  %v948 = vsub.s32 %v901, %v947
  %v949 = vrot.slane %v871, %v948
  %v950 = vlaneseq
  %v951 = vshrl.u32 %v950, 7
  %v952 = vsub.s32 %v901, %v951
  %v953 = vrot.slane %v874, %v952
  %v954 = vlaneseq
  %v955 = vshrl.u32 %v954, 7
  %v956 = vsub.s32 %v901, %v955
  %v957 = vrot.slane %v877, %v956
  %v958 = vlaneseq
  %v959 = vshrl.u32 %v958, 7
  %v960 = vsub.s32 %v901, %v959
  %v961 = vrot.slane %v880, %v960
  %v962 = vlaneseq
  %v963 = vshrl.u32 %v962, 7
  %v964 = vsub.s32 %v901, %v963
  %v965 = vrot.slane %v883, %v964
  %v966 = vsel %vm505, %v909, %v905
  %v967 = vsel %vm507, %v913, %v966
  %v968 = vsel %vm509, %v917, %v967
  %v969 = vsel %vm511, %v921, %v968
  %v970 = vsel %vm513, %v925, %v969
  %v971 = vsel %vm515, %v929, %v970
  %v972 = vsel %vm517, %v933, %v971
  %v973 = vsel %vm505, %v941, %v937
  %v974 = vsel %vm507, %v945, %v973
  %v975 = vsel %vm509, %v949, %v974
  %v976 = vsel %vm511, %v953, %v975
  %v977 = vsel %vm513, %v957, %v976
  %v978 = vsel %vm515, %v961, %v977
  %v979 = vsel %vm517, %v965, %v978
  %vm980 = vcmask 39936
  %v981 = vsel %vm980, %v972, 0
  %v983 = vsel %vm980, %v979, 0
  %v986 = vsel %vm980, %v35, 0
  %v989 = vsel %vm980, %v36, 0
  %v992 = vsel %vm980, %v37, 0
  %v995 = vsel %vm980, %v38, 0
  %997 = vmatprep.subr.mxu0 0.0
  %998 = vmatpush1.xpose.msra.mxu0 %v986
  %999 = vmatprep.subr.mxu0 0.0
  %1000 = vmatpush1.xpose.msra.mxu0 %v989
  %1001 = vmatprep.subr.mxu0 0.0
  %1002 = vmatpush1.xpose.msra.mxu0 %v992
  %1003 = vmatprep.subr.mxu0 0.0
  %1004 = vmatpush1.xpose.msra.mxu0 %v995
  %1005 = vmatprep.subr.mxu0 0.0
  %1006 = vmatpush1.xpose.msra.mxu0 0.0
  %1007 = vmatprep.subr.mxu0 0.0
  %1008 = vmatpush1.xpose.msra.mxu0 0.0
  %1009 = vmatprep.subr.mxu0 0.0
  %1010 = vmatpush1.xpose.msra.mxu0 0.0
  %1011 = vmatprep.subr.mxu0 0.0
  %1012 = vmatpush1.xpose.msra.mxu0 0.0
  %1013 = vmatprep.subr.mxu0 0.0
  %1014 = vmatpush1.xpose.msra.mxu0 0.0
  %1015 = vmatprep.subr.mxu0 0.0
  %1016 = vmatpush1.xpose.msra.mxu0 0.0
  %1017 = vmatprep.subr.mxu0 0.0
  %1018 = vmatpush1.xpose.msra.mxu0 0.0
  %1019 = vmatprep.subr.mxu0 0.0
  %1020 = vmatpush1.xpose.msra.mxu0 0.0
  %1021 = vmatprep.subr.mxu0 0.0
  %1022 = vmatpush1.xpose.msra.mxu0 0.0
  %1023 = vmatprep.subr.mxu0 0.0
  %1024 = vmatpush1.xpose.msra.mxu0 0.0
  %1025 = vmatprep.subr.mxu0 0.0
  %1026 = vmatpush1.xpose.msra.mxu0 0.0
  %1027 = vmatprep.subr.mxu0 0.0
  %1028 = vmatpush1.xpose.msra.mxu0 0.0
  %1029 = vmatprep.subr.mxu0 0.0
  %1030 = vmatpush1.xpose.msra.mxu0 0.0
  %1031 = vmatprep.subr.mxu0 0.0
  %1032 = vmatpush1.xpose.msra.mxu0 0.0
  %1033 = vmatprep.subr.mxu0 0.0
  %1034 = vmatpush1.xpose.msra.mxu0 0.0
  %1035 = vmatprep.subr.mxu0 0.0
  %1036 = vmatpush1.xpose.msra.mxu0 0.0
  %1037 = vmatprep.subr.mxu0 0.0
  %1038 = vmatpush1.xpose.msra.mxu0 0.0
  %1039 = vmatprep.subr.mxu0 0.0
  %1040 = vmatpush1.xpose.msra.mxu0 0.0
  %1041 = vmatprep.subr.mxu0 0.0
  %1042 = vmatpush1.xpose.msra.mxu0 0.0
  %1043 = vmatprep.subr.mxu0 0.0
  %1044 = vmatpush1.xpose.msra.mxu0 0.0
  %1045 = vmatprep.subr.mxu0 0.0
  %1046 = vmatpush1.xpose.msra.mxu0 0.0
  %1047 = vmatprep.subr.mxu0 0.0
  %1048 = vmatpush1.xpose.msra.mxu0 0.0
  %1049 = vmatprep.subr.mxu0 0.0
  %1050 = vmatpush1.xpose.msra.mxu0 0.0
  %1051 = vmatprep.subr.mxu0 0.0
  %1052 = vmatpush1.xpose.msra.mxu0 0.0
  %1053 = vmatprep.subr.mxu0 0.0
  %1054 = vmatpush1.xpose.msra.mxu0 0.0
  %1055 = vmatprep.subr.mxu0 0.0
  %1056 = vmatpush1.xpose.msra.mxu0 0.0
  %1057 = vmatprep.subr.mxu0 0.0
  %1058 = vmatpush1.xpose.msra.mxu0 0.0
  %1059 = vmatprep.subr.mxu0 0.0
  %1060 = vmatpush1.xpose.msra.mxu0 0.0
  %1061 = vmatprep.mubr.f32.mxu0 0.0
  %1062 = vmatmul.mubr.f32.gmra.mrb[0].mxu0 %v981
  %v1063 = vpop.f32.mrb[0].mxu0
  %v1064 = vadd.f32 0.0, %v1063
  %v1065 = vpop.f32.mrb[0].mxu0
  %1066 = vmatprep.mubr.f32.mxu0 0.0
  %1067 = vmatmul.mubr.f32.gmra.mrb[0].mxu0 %v983
  %v1068 = vpop.f32.mrb[0].mxu0
  %v1069 = vadd.f32 0.0, %v1068
  %v1070 = vpop.f32.mrb[0].mxu0
  %1071 = vdwg.mxu0
  %1072 = vrot.lane.b32.xlu0 %v136, 64
  %v1073 = vpop.permute.xlu0 %1072
  %1074 = vrot.lane.b32.xlu0 %v141, 64
  %v1075 = vpop.permute.xlu0 %1074
  %v1078 = vsel %vm613, %v638, 0
  %v1080 = vsel %vm613, %v639, 0
  %1082 = vmatprep.subr.mxu0 0.0
  %1083 = vmatpush1.msra.mxu0 %v1073
  %1084 = vmatprep.subr.mxu0 0.0
  %1085 = vmatpush1.msra.mxu0 %v1075
  %1086 = vmatprep.subr.mxu0 0.0
  %1087 = vmatpush1.msra.mxu0 0.0
  %1088 = vmatprep.subr.mxu0 0.0
  %1089 = vmatpush1.msra.mxu0 0.0
  %1090 = vmatprep.subr.mxu0 0.0
  %1091 = vmatpush1.msra.mxu0 0.0
  %1092 = vmatprep.subr.mxu0 0.0
  %1093 = vmatpush1.msra.mxu0 0.0
  %1094 = vmatprep.subr.mxu0 0.0
  %1095 = vmatpush1.msra.mxu0 0.0
  %1096 = vmatprep.subr.mxu0 0.0
  %1097 = vmatpush1.msra.mxu0 0.0
  %1098 = vmatprep.subr.mxu0 0.0
  %1099 = vmatpush1.msra.mxu0 0.0
  %1100 = vmatprep.subr.mxu0 0.0
  %1101 = vmatpush1.msra.mxu0 0.0
  %1102 = vmatprep.subr.mxu0 0.0
  %1103 = vmatpush1.msra.mxu0 0.0
  %1104 = vmatprep.subr.mxu0 0.0
  %1105 = vmatpush1.msra.mxu0 0.0
  %1106 = vmatprep.subr.mxu0 0.0
  %1107 = vmatpush1.msra.mxu0 0.0
  %1108 = vmatprep.subr.mxu0 0.0
  %1109 = vmatpush1.msra.mxu0 0.0
  %1110 = vmatprep.subr.mxu0 0.0
  %1111 = vmatpush1.msra.mxu0 0.0
  %1112 = vmatprep.subr.mxu0 0.0
  %1113 = vmatpush1.msra.mxu0 0.0
  %1114 = vmatprep.subr.mxu0 0.0
  %1115 = vmatpush1.msra.mxu0 0.0
  %1116 = vmatprep.subr.mxu0 0.0
  %1117 = vmatpush1.msra.mxu0 0.0
  %1118 = vmatprep.subr.mxu0 0.0
  %1119 = vmatpush1.msra.mxu0 0.0
  %1120 = vmatprep.subr.mxu0 0.0
  %1121 = vmatpush1.msra.mxu0 0.0
  %1122 = vmatprep.subr.mxu0 0.0
  %1123 = vmatpush1.msra.mxu0 0.0
  %1124 = vmatprep.subr.mxu0 0.0
  %1125 = vmatpush1.msra.mxu0 0.0
  %1126 = vmatprep.subr.mxu0 0.0
  %1127 = vmatpush1.msra.mxu0 0.0
  %1128 = vmatprep.subr.mxu0 0.0
  %1129 = vmatpush1.msra.mxu0 0.0
  %1130 = vmatprep.subr.mxu0 0.0
  %1131 = vmatpush1.msra.mxu0 0.0
  %1132 = vmatprep.subr.mxu0 0.0
  %1133 = vmatpush1.msra.mxu0 0.0
  %1134 = vmatprep.subr.mxu0 0.0
  %1135 = vmatpush1.msra.mxu0 0.0
  %1136 = vmatprep.subr.mxu0 0.0
  %1137 = vmatpush1.msra.mxu0 0.0
  %1138 = vmatprep.subr.mxu0 0.0
  %1139 = vmatpush1.msra.mxu0 0.0
  %1140 = vmatprep.subr.mxu0 0.0
  %1141 = vmatpush1.msra.mxu0 0.0
  %1142 = vmatprep.subr.mxu0 0.0
  %1143 = vmatpush1.msra.mxu0 0.0
  %1144 = vmatprep.subr.mxu0 0.0
  %1145 = vmatpush1.msra.mxu0 0.0
  %1146 = vmatprep.mubr.f32.mxu0 0.0
  %1147 = vmatmul.mubr.f32.gmra.mrb[0].mxu0 %v1078
  %v1148 = vpop.f32.mrb[0].mxu0
  %v1149 = vadd.f32 %v1064, %v1148
  %v1150 = vpop.f32.mrb[0].mxu0
  %1151 = vmatprep.mubr.f32.mxu0 0.0
  %1152 = vmatmul.mubr.f32.gmra.mrb[0].mxu0 %v1080
  %v1153 = vpop.f32.mrb[0].mxu0
  %v1154 = vadd.f32 %v1069, %v1153
  %v1155 = vpop.f32.mrb[0].mxu0
  %1156 = vdwg.mxu0
  %1157 = vrot.lane.b32.xlu0 %v136, 32
  %v1158 = vpop.permute.xlu0 %1157
  %1159 = vrot.lane.b32.xlu0 %v141, 32
  %v1160 = vpop.permute.xlu0 %1159
  %v1163 = vadd.f32 %v1149, %v1158
  %v1164 = vadd.f32 %v1154, %v1160
  %v1165 = vsel %vm162, %v1163, 0.0
  %v1166 = vsel %vm162, %v1164, 0.0
  %v1167 = vadd.f32 %v1165, %v1166
  %v1168 = vrot.slane %v1167, 4
  %v1169 = vadd.f32 %v1167, %v1168
  %v1170 = vrot.slane %v1169, 2
  %v1171 = vadd.f32 %v1169, %v1170
  %v1172 = vrot.slane %v1171, 1
  %v1173 = vadd.f32 %v1171, %v1172
  %v1174 = vrcp.pop 16.0
  %v1175 = vmul.f32 %v1173, %v1174
  %v1176 = vsub.f32 %v1163, %v1175
  %v1177 = vsub.f32 %v1164, %v1175
  %v1178 = vmul.f32 %v1176, %v1176
  %v1179 = vmul.f32 %v1177, %v1177
  %v1180 = vsel %vm162, %v1178, 0.0
  %v1181 = vsel %vm162, %v1179, 0.0
  %v1182 = vadd.f32 %v1180, %v1181
  %v1183 = vrot.slane %v1182, 4
  %v1184 = vadd.f32 %v1182, %v1183
  %v1185 = vrot.slane %v1184, 2
  %v1186 = vadd.f32 %v1184, %v1185
  %v1187 = vrot.slane %v1186, 1
  %v1188 = vadd.f32 %v1186, %v1187
  %v1189 = vmul.f32 %v1188, %v1174
  %v1190 = vadd.f32 %v1189, 1e-05
  %v1191 = vrsqrt.pop %v1190
  %v1192 = vmul.f32 %v1176, %v1191
  %v1193 = vmul.f32 %v1177, %v1191
  %v1194 = vlaneseq
  %v1195 = vshrl.u32 %v1194, 7
  %v1196 = vsub.s32 1, %v1195
  %v1197 = vrot.slane %v47, %v1196
  %v1198 = vmul.f32 %v1192, %v1197
  %v1199 = vmul.f32 %v1193, %v1197
  %v1200 = vlaneseq
  %v1201 = vshrl.u32 %v1200, 7
  %v1202 = vsub.s32 2, %v1201
  %v1203 = vrot.slane %v47, %v1202
  %v1204 = vadd.f32 %v1198, %v1203
  %v1205 = vadd.f32 %v1199, %v1203
  %v1206 = vmax.f32 %v1204, 0.0
  %v1207 = vmax.f32 %v1205, 0.0
  %v1208 = vld [vmem:[%s3] sm:$0xff]
  %v1209 = vld [vmem:[%s3 + $0x8] sm:$0xff]
  %1210 = vxpose.xlu0.b32.start [1/16] %v1208, 128
  %1211 = vxpose.xlu0.b32.cont [2/16] %v1209, 128
  %1212 = vxpose.xlu0.b32.cont [3/16] 0.0, 128
  %1213 = vxpose.xlu0.b32.cont [4/16] 0.0, 128
  %1214 = vxpose.xlu0.b32.cont [5/16] 0.0, 128
  %1215 = vxpose.xlu0.b32.cont [6/16] 0.0, 128
  %1216 = vxpose.xlu0.b32.cont [7/16] 0.0, 128
  %1217 = vxpose.xlu0.b32.cont [8/16] 0.0, 128
  %1218 = vxpose.xlu0.b32.cont [9/16] 0.0, 128
  %1219 = vxpose.xlu0.b32.cont [10/16] 0.0, 128
  %1220 = vxpose.xlu0.b32.cont [11/16] 0.0, 128
  %1221 = vxpose.xlu0.b32.cont [12/16] 0.0, 128
  %1222 = vxpose.xlu0.b32.cont [13/16] 0.0, 128
  %1223 = vxpose.xlu0.b32.cont [14/16] 0.0, 128
  %1224 = vxpose.xlu0.b32.cont [15/16] 0.0, 128
  %1225 = vxpose.xlu0.b32.end [16/16] 0.0, 128
  %v1226 = vpop.trf.xlu0
  %v1227 = vpop.trf.xlu0
  %v1228 = vpop.trf.xlu0
  %v1229 = vpop.trf.xlu0
  %v1230 = vpop.trf.xlu0
  %v1231 = vpop.trf.xlu0
  %v1232 = vpop.trf.xlu0
  %v1233 = vpop.trf.xlu0
  %v1234 = vpop.trf.xlu0
  %v1235 = vpop.trf.xlu0
  %v1236 = vpop.trf.xlu0
  %v1237 = vpop.trf.xlu0
  %v1238 = vpop.trf.xlu0
  %v1239 = vpop.trf.xlu0
  %v1240 = vpop.trf.xlu0
  %v1241 = vpop.trf.xlu0
  %v1243 = vsel %vm613, %v1226, 0
  %v1246 = vsel %vm613, %v1227, 0
  %1248 = vmatprep.subr.mxu0 0.0
  %1249 = vmatpush1.msra.mxu0 %v1206
  %1250 = vmatprep.subr.mxu0 0.0
  %1251 = vmatpush1.msra.mxu0 %v1207
  %1252 = vmatprep.subr.mxu0 0.0
  %1253 = vmatpush1.msra.mxu0 0.0
  %1254 = vmatprep.subr.mxu0 0.0
  %1255 = vmatpush1.msra.mxu0 0.0
  %1256 = vmatprep.subr.mxu0 0.0
  %1257 = vmatpush1.msra.mxu0 0.0
  %1258 = vmatprep.subr.mxu0 0.0
  %1259 = vmatpush1.msra.mxu0 0.0
  %1260 = vmatprep.subr.mxu0 0.0
  %1261 = vmatpush1.msra.mxu0 0.0
  %1262 = vmatprep.subr.mxu0 0.0
  %1263 = vmatpush1.msra.mxu0 0.0
  %1264 = vmatprep.subr.mxu0 0.0
  %1265 = vmatpush1.msra.mxu0 0.0
  %1266 = vmatprep.subr.mxu0 0.0
  %1267 = vmatpush1.msra.mxu0 0.0
  %1268 = vmatprep.subr.mxu0 0.0
  %1269 = vmatpush1.msra.mxu0 0.0
  %1270 = vmatprep.subr.mxu0 0.0
  %1271 = vmatpush1.msra.mxu0 0.0
  %1272 = vmatprep.subr.mxu0 0.0
  %1273 = vmatpush1.msra.mxu0 0.0
  %1274 = vmatprep.subr.mxu0 0.0
  %1275 = vmatpush1.msra.mxu0 0.0
  %1276 = vmatprep.subr.mxu0 0.0
  %1277 = vmatpush1.msra.mxu0 0.0
  %1278 = vmatprep.subr.mxu0 0.0
  %1279 = vmatpush1.msra.mxu0 0.0
  %1280 = vmatprep.subr.mxu0 0.0
  %1281 = vmatpush1.msra.mxu0 0.0
  %1282 = vmatprep.subr.mxu0 0.0
  %1283 = vmatpush1.msra.mxu0 0.0
  %1284 = vmatprep.subr.mxu0 0.0
  %1285 = vmatpush1.msra.mxu0 0.0
  %1286 = vmatprep.subr.mxu0 0.0
  %1287 = vmatpush1.msra.mxu0 0.0
  %1288 = vmatprep.subr.mxu0 0.0
  %1289 = vmatpush1.msra.mxu0 0.0
  %1290 = vmatprep.subr.mxu0 0.0
  %1291 = vmatpush1.msra.mxu0 0.0
  %1292 = vmatprep.subr.mxu0 0.0
  %1293 = vmatpush1.msra.mxu0 0.0
  %1294 = vmatprep.subr.mxu0 0.0
  %1295 = vmatpush1.msra.mxu0 0.0
  %1296 = vmatprep.subr.mxu0 0.0
  %1297 = vmatpush1.msra.mxu0 0.0
  %1298 = vmatprep.subr.mxu0 0.0
  %1299 = vmatpush1.msra.mxu0 0.0
  %1300 = vmatprep.subr.mxu0 0.0
  %1301 = vmatpush1.msra.mxu0 0.0
  %1302 = vmatprep.subr.mxu0 0.0
  %1303 = vmatpush1.msra.mxu0 0.0
  %1304 = vmatprep.subr.mxu0 0.0
  %1305 = vmatpush1.msra.mxu0 0.0
  %1306 = vmatprep.subr.mxu0 0.0
  %1307 = vmatpush1.msra.mxu0 0.0
  %1308 = vmatprep.subr.mxu0 0.0
  %1309 = vmatpush1.msra.mxu0 0.0
  %1310 = vmatprep.subr.mxu0 0.0
  %1311 = vmatpush1.msra.mxu0 0.0
  %1312 = vmatprep.mubr.f32.mxu0 0.0
  %1313 = vmatmul.mubr.f32.gmra.mrb[0].mxu0 %v1243
  %v1314 = vpop.f32.mrb[0].mxu0
  %v1315 = vadd.f32 0.0, %v1314
  %v1316 = vpop.f32.mrb[0].mxu0
  %1317 = vmatprep.mubr.f32.mxu0 0.0
  %1318 = vmatmul.mubr.f32.gmra.mrb[0].mxu0 %v1246
  %v1319 = vpop.f32.mrb[0].mxu0
  %v1320 = vadd.f32 0.0, %v1319
  %v1321 = vpop.f32.mrb[0].mxu0
  %1322 = vdwg.mxu0
  %v1323 = vld [vmem:[%s4] sm:$0xff]
  %v1324 = vld [vmem:[%s4 + $0x8] sm:$0xff]
  %v1325 = vlaneseq
  %v1326 = vshrl.u32 %v1325, 7
  %v1327 = vsub.s32 3, %v1326
  %v1328 = vrot.slane %v47, %v1327
  %1329 = vrot.lane.b32.xlu0 %v35, 123
  %v1330 = vpop.permute.xlu0 %1329
  %1331 = vrot.lane.b32.xlu0 %v36, 123
  %v1332 = vpop.permute.xlu0 %1331
  %1333 = vrot.lane.b32.xlu0 %v37, 123
  %v1334 = vpop.permute.xlu0 %1333
  %1335 = vrot.lane.b32.xlu0 %v38, 123
  %v1336 = vpop.permute.xlu0 %1335
  %v1342 = vsel %vm162, %v1315, 0
  %v1345 = vsel %vm162, %v1320, 0
  %1347 = vmatprep.subr.mxu0 0.0
  %1348 = vmatpush1.msra.mxu0 %v1330
  %1349 = vmatprep.subr.mxu0 0.0
  %1350 = vmatpush1.msra.mxu0 %v1332
  %1351 = vmatprep.subr.mxu0 0.0
  %1352 = vmatpush1.msra.mxu0 %v1334
  %1353 = vmatprep.subr.mxu0 0.0
  %1354 = vmatpush1.msra.mxu0 %v1336
  %1355 = vmatprep.subr.mxu0 0.0
  %1356 = vmatpush1.msra.mxu0 0.0
  %1357 = vmatprep.subr.mxu0 0.0
  %1358 = vmatpush1.msra.mxu0 0.0
  %1359 = vmatprep.subr.mxu0 0.0
  %1360 = vmatpush1.msra.mxu0 0.0
  %1361 = vmatprep.subr.mxu0 0.0
  %1362 = vmatpush1.msra.mxu0 0.0
  %1363 = vmatprep.subr.mxu0 0.0
  %1364 = vmatpush1.msra.mxu0 0.0
  %1365 = vmatprep.subr.mxu0 0.0
  %1366 = vmatpush1.msra.mxu0 0.0
  %1367 = vmatprep.subr.mxu0 0.0
  %1368 = vmatpush1.msra.mxu0 0.0
  %1369 = vmatprep.subr.mxu0 0.0
  %1370 = vmatpush1.msra.mxu0 0.0
  %1371 = vmatprep.subr.mxu0 0.0
  %1372 = vmatpush1.msra.mxu0 0.0
  %1373 = vmatprep.subr.mxu0 0.0
  %1374 = vmatpush1.msra.mxu0 0.0
  %1375 = vmatprep.subr.mxu0 0.0
  %1376 = vmatpush1.msra.mxu0 0.0
  %1377 = vmatprep.subr.mxu0 0.0
  %1378 = vmatpush1.msra.mxu0 0.0
  %1379 = vmatprep.subr.mxu0 0.0
  %1380 = vmatpush1.msra.mxu0 0.0
  %1381 = vmatprep.subr.mxu0 0.0
  %1382 = vmatpush1.msra.mxu0 0.0
  %1383 = vmatprep.subr.mxu0 0.0
  %1384 = vmatpush1.msra.mxu0 0.0
  %1385 = vmatprep.subr.mxu0 0.0
  %1386 = vmatpush1.msra.mxu0 0.0
  %1387 = vmatprep.subr.mxu0 0.0
  %1388 = vmatpush1.msra.mxu0 0.0
  %1389 = vmatprep.subr.mxu0 0.0
  %1390 = vmatpush1.msra.mxu0 0.0
  %1391 = vmatprep.subr.mxu0 0.0
  %1392 = vmatpush1.msra.mxu0 0.0
  %1393 = vmatprep.subr.mxu0 0.0
  %1394 = vmatpush1.msra.mxu0 0.0
  %1395 = vmatprep.subr.mxu0 0.0
  %1396 = vmatpush1.msra.mxu0 0.0
  %1397 = vmatprep.subr.mxu0 0.0
  %1398 = vmatpush1.msra.mxu0 0.0
  %1399 = vmatprep.subr.mxu0 0.0
  %1400 = vmatpush1.msra.mxu0 0.0
  %1401 = vmatprep.subr.mxu0 0.0
  %1402 = vmatpush1.msra.mxu0 0.0
  %1403 = vmatprep.subr.mxu0 0.0
  %1404 = vmatpush1.msra.mxu0 0.0
  %1405 = vmatprep.subr.mxu0 0.0
  %1406 = vmatpush1.msra.mxu0 0.0
  %1407 = vmatprep.subr.mxu0 0.0
  %1408 = vmatpush1.msra.mxu0 0.0
  %1409 = vmatprep.subr.mxu0 0.0
  %1410 = vmatpush1.msra.mxu0 0.0
  %1411 = vmatprep.mubr.f32.mxu0 0.0
  %1412 = vmatmul.mubr.f32.gmra.mrb[0].mxu0 %v1342
  %v1413 = vpop.f32.mrb[0].mxu0
  %v1414 = vadd.f32 %v1328, %v1413
  %v1415 = vpop.f32.mrb[0].mxu0
  %1416 = vmatprep.mubr.f32.mxu0 0.0
  %1417 = vmatmul.mubr.f32.gmra.mrb[0].mxu0 %v1345
  %v1418 = vpop.f32.mrb[0].mxu0
  %v1419 = vadd.f32 %v1328, %v1418
  %v1420 = vpop.f32.mrb[0].mxu0
  %1421 = vdwg.mxu0
  %vm1422 = vcmask 31744
  %v1423 = vsel %vm1422, %v1414, -inf
  %1424 = vmax.xlane.f32.xlu0 %v1423
  %v1425 = vpop.xlane.xlu0 %1424
  %v1426 = vsel %vm1422, %v1419, -inf
  %1427 = vmax.xlane.f32.xlu0 %v1426
  %v1428 = vpop.xlane.xlu0 %1427
  %v1429 = vsub.f32 %v1414, %v1425
  %v1430 = vsub.f32 %v1419, %v1428
  %v1431 = vmul.f32 %v1429, 1.442695
  %v1432 = vpow.pop %v1431
  %v1433 = vmul.f32 %v1430, 1.442695
  %v1434 = vpow.pop %v1433
  %v1435 = vsel %vm1422, %v1432, 0.0
  %1436 = vadd.xlane.f32.xlu0 %v1435
  %v1437 = vpop.xlane.xlu0 %1436
  %v1438 = vsel %vm1422, %v1434, 0.0
  %1439 = vadd.xlane.f32.xlu0 %v1438
  %v1440 = vpop.xlane.xlu0 %1439
  %v1441 = vrcp.pop %v1437
  %v1442 = vmul.f32 %v1432, %v1441
  %v1443 = vrcp.pop %v1440
  %v1444 = vmul.f32 %v1434, %v1443
  %1447 = vrot.lane.b32.xlu0 %v1442, 4
  %v1448 = vpop.permute.xlu0 %1447
  %1449 = vrot.lane.b32.xlu0 %v1444, 4
  %v1450 = vpop.permute.xlu0 %1449
  %v1453 = vsel %vm1422, %v1442, %v1448
  %v1454 = vsel %vm1422, %v1444, %v1450
  %v1455 = vmul.f32 %v1453, %v49
  %v1456 = vmul.f32 %v1454, %v50
  %1459 = vrot.lane.b32.xlu0 %v1323, 32
  %v1460 = vpop.permute.xlu0 %1459
  %1461 = vrot.lane.b32.xlu0 %v1324, 32
  %v1462 = vpop.permute.xlu0 %1461
  %v1465 = vsel %vm162, %v1315, %v1460
  %v1466 = vsel %vm162, %v1320, %v1462
  %1467 = vxpose.xlu0.b32.start [1/16] %v1455, 128
  %1468 = vxpose.xlu0.b32.cont [2/16] %v1456, 128
  %1469 = vxpose.xlu0.b32.cont [3/16] 0.0, 128
  %1470 = vxpose.xlu0.b32.cont [4/16] 0.0, 128
  %1471 = vxpose.xlu0.b32.cont [5/16] 0.0, 128
  %1472 = vxpose.xlu0.b32.cont [6/16] 0.0, 128
  %1473 = vxpose.xlu0.b32.cont [7/16] 0.0, 128
  %1474 = vxpose.xlu0.b32.cont [8/16] 0.0, 128
  %1475 = vxpose.xlu0.b32.cont [9/16] 0.0, 128
  %1476 = vxpose.xlu0.b32.cont [10/16] 0.0, 128
  %1477 = vxpose.xlu0.b32.cont [11/16] 0.0, 128
  %1478 = vxpose.xlu0.b32.cont [12/16] 0.0, 128
  %1479 = vxpose.xlu0.b32.cont [13/16] 0.0, 128
  %1480 = vxpose.xlu0.b32.cont [14/16] 0.0, 128
  %1481 = vxpose.xlu0.b32.cont [15/16] 0.0, 128
  %1482 = vxpose.xlu0.b32.end [16/16] 0.0, 128
  %v1483 = vpop.trf.xlu0
  %v1484 = vpop.trf.xlu0
  %v1485 = vpop.trf.xlu0
  %v1486 = vpop.trf.xlu0
  %v1487 = vpop.trf.xlu0
  %v1488 = vpop.trf.xlu0
  %v1489 = vpop.trf.xlu0
  %v1490 = vpop.trf.xlu0
  %v1491 = vpop.trf.xlu0
  %v1492 = vpop.trf.xlu0
  %v1493 = vpop.trf.xlu0
  %v1494 = vpop.trf.xlu0
  %v1495 = vpop.trf.xlu0
  %v1496 = vpop.trf.xlu0
  %v1497 = vpop.trf.xlu0
  %v1498 = vpop.trf.xlu0
  %v1500 = vsel %vm613, %v1483, 0
  %1502 = vmatprep.subr.mxu0 0.0
  %1503 = vmatpush1.msra.mxu0 %v1465
  %1504 = vmatprep.subr.mxu0 0.0
  %1505 = vmatpush1.msra.mxu0 %v1466
  %1506 = vmatprep.subr.mxu0 0.0
  %1507 = vmatpush1.msra.mxu0 0.0
  %1508 = vmatprep.subr.mxu0 0.0
  %1509 = vmatpush1.msra.mxu0 0.0
  %1510 = vmatprep.subr.mxu0 0.0
  %1511 = vmatpush1.msra.mxu0 0.0
  %1512 = vmatprep.subr.mxu0 0.0
  %1513 = vmatpush1.msra.mxu0 0.0
  %1514 = vmatprep.subr.mxu0 0.0
  %1515 = vmatpush1.msra.mxu0 0.0
  %1516 = vmatprep.subr.mxu0 0.0
  %1517 = vmatpush1.msra.mxu0 0.0
  %1518 = vmatprep.subr.mxu0 0.0
  %1519 = vmatpush1.msra.mxu0 0.0
  %1520 = vmatprep.subr.mxu0 0.0
  %1521 = vmatpush1.msra.mxu0 0.0
  %1522 = vmatprep.subr.mxu0 0.0
  %1523 = vmatpush1.msra.mxu0 0.0
  %1524 = vmatprep.subr.mxu0 0.0
  %1525 = vmatpush1.msra.mxu0 0.0
  %1526 = vmatprep.subr.mxu0 0.0
  %1527 = vmatpush1.msra.mxu0 0.0
  %1528 = vmatprep.subr.mxu0 0.0
  %1529 = vmatpush1.msra.mxu0 0.0
  %1530 = vmatprep.subr.mxu0 0.0
  %1531 = vmatpush1.msra.mxu0 0.0
  %1532 = vmatprep.subr.mxu0 0.0
  %1533 = vmatpush1.msra.mxu0 0.0
  %1534 = vmatprep.subr.mxu0 0.0
  %1535 = vmatpush1.msra.mxu0 0.0
  %1536 = vmatprep.subr.mxu0 0.0
  %1537 = vmatpush1.msra.mxu0 0.0
  %1538 = vmatprep.subr.mxu0 0.0
  %1539 = vmatpush1.msra.mxu0 0.0
  %1540 = vmatprep.subr.mxu0 0.0
  %1541 = vmatpush1.msra.mxu0 0.0
  %1542 = vmatprep.subr.mxu0 0.0
  %1543 = vmatpush1.msra.mxu0 0.0
  %1544 = vmatprep.subr.mxu0 0.0
  %1545 = vmatpush1.msra.mxu0 0.0
  %1546 = vmatprep.subr.mxu0 0.0
  %1547 = vmatpush1.msra.mxu0 0.0
  %1548 = vmatprep.subr.mxu0 0.0
  %1549 = vmatpush1.msra.mxu0 0.0
  %1550 = vmatprep.subr.mxu0 0.0
  %1551 = vmatpush1.msra.mxu0 0.0
  %1552 = vmatprep.subr.mxu0 0.0
  %1553 = vmatpush1.msra.mxu0 0.0
  %1554 = vmatprep.subr.mxu0 0.0
  %1555 = vmatpush1.msra.mxu0 0.0
  %1556 = vmatprep.subr.mxu0 0.0
  %1557 = vmatpush1.msra.mxu0 0.0
  %1558 = vmatprep.subr.mxu0 0.0
  %1559 = vmatpush1.msra.mxu0 0.0
  %1560 = vmatprep.subr.mxu0 0.0
  %1561 = vmatpush1.msra.mxu0 0.0
  %1562 = vmatprep.subr.mxu0 0.0
  %1563 = vmatpush1.msra.mxu0 0.0
  %1564 = vmatprep.subr.mxu0 0.0
  %1565 = vmatpush1.msra.mxu0 0.0
  %1566 = vmatprep.mubr.f32.mxu0 0.0
  %1567 = vmatmul.mubr.f32.gmra.mrb[0].mxu0 %v1500
  %v1568 = vpop.f32.mrb[0].mxu0
  %v1569 = vadd.f32 0.0, %v1568
  %v1570 = vpop.f32.mrb[0].mxu0
  %1571 = vdwg.mxu0
  %1573 = vrot.lane.b32.xlu0 %v1569, 96
  %v1574 = vpop.permute.xlu0 %1573
  %v1575 = vsel %vm613, %v1574, 0
  %1577 = vmatprep.subr.mxu0 0.0
  %1578 = vmatpush1.msra.mxu0 %v1455
  %1579 = vmatprep.subr.mxu0 0.0
  %1580 = vmatpush1.msra.mxu0 %v1456
  %1581 = vmatprep.subr.mxu0 0.0
  %1582 = vmatpush1.msra.mxu0 0.0
  %1583 = vmatprep.subr.mxu0 0.0
  %1584 = vmatpush1.msra.mxu0 0.0
  %1585 = vmatprep.subr.mxu0 0.0
  %1586 = vmatpush1.msra.mxu0 0.0
  %1587 = vmatprep.subr.mxu0 0.0
  %1588 = vmatpush1.msra.mxu0 0.0
  %1589 = vmatprep.subr.mxu0 0.0
  %1590 = vmatpush1.msra.mxu0 0.0
  %1591 = vmatprep.subr.mxu0 0.0
  %1592 = vmatpush1.msra.mxu0 0.0
  %1593 = vmatprep.subr.mxu0 0.0
  %1594 = vmatpush1.msra.mxu0 0.0
  %1595 = vmatprep.subr.mxu0 0.0
  %1596 = vmatpush1.msra.mxu0 0.0
  %1597 = vmatprep.subr.mxu0 0.0
  %1598 = vmatpush1.msra.mxu0 0.0
  %1599 = vmatprep.subr.mxu0 0.0
  %1600 = vmatpush1.msra.mxu0 0.0
  %1601 = vmatprep.subr.mxu0 0.0
  %1602 = vmatpush1.msra.mxu0 0.0
  %1603 = vmatprep.subr.mxu0 0.0
  %1604 = vmatpush1.msra.mxu0 0.0
  %1605 = vmatprep.subr.mxu0 0.0
  %1606 = vmatpush1.msra.mxu0 0.0
  %1607 = vmatprep.subr.mxu0 0.0
  %1608 = vmatpush1.msra.mxu0 0.0
  %1609 = vmatprep.subr.mxu0 0.0
  %1610 = vmatpush1.msra.mxu0 0.0
  %1611 = vmatprep.subr.mxu0 0.0
  %1612 = vmatpush1.msra.mxu0 0.0
  %1613 = vmatprep.subr.mxu0 0.0
  %1614 = vmatpush1.msra.mxu0 0.0
  %1615 = vmatprep.subr.mxu0 0.0
  %1616 = vmatpush1.msra.mxu0 0.0
  %1617 = vmatprep.subr.mxu0 0.0
  %1618 = vmatpush1.msra.mxu0 0.0
  %1619 = vmatprep.subr.mxu0 0.0
  %1620 = vmatpush1.msra.mxu0 0.0
  %1621 = vmatprep.subr.mxu0 0.0
  %1622 = vmatpush1.msra.mxu0 0.0
  %1623 = vmatprep.subr.mxu0 0.0
  %1624 = vmatpush1.msra.mxu0 0.0
  %1625 = vmatprep.subr.mxu0 0.0
  %1626 = vmatpush1.msra.mxu0 0.0
  %1627 = vmatprep.subr.mxu0 0.0
  %1628 = vmatpush1.msra.mxu0 0.0
  %1629 = vmatprep.subr.mxu0 0.0
  %1630 = vmatpush1.msra.mxu0 0.0
  %1631 = vmatprep.subr.mxu0 0.0
  %1632 = vmatpush1.msra.mxu0 0.0
  %1633 = vmatprep.subr.mxu0 0.0
  %1634 = vmatpush1.msra.mxu0 0.0
  %1635 = vmatprep.subr.mxu0 0.0
  %1636 = vmatpush1.msra.mxu0 0.0
  %1637 = vmatprep.subr.mxu0 0.0
  %1638 = vmatpush1.msra.mxu0 0.0
  %1639 = vmatprep.subr.mxu0 0.0
  %1640 = vmatpush1.msra.mxu0 0.0
  %1641 = vmatprep.mubr.f32.mxu0 0.0
  %1642 = vmatmul.mubr.f32.gmra.mrb[0].mxu0 %v1575
  %v1643 = vpop.f32.mrb[0].mxu0
  %v1644 = vadd.f32 0.0, %v1643
  %v1645 = vpop.f32.mrb[0].mxu0
  %1646 = vdwg.mxu0
  %v1647 = vlaneseq
  %v1648 = vshrl.u32 %v1647, 7
  %vm1649 = vcmp.eq.s32.totalorder %v1648, %v901
  %v1650 = vsel %vm1649, 0.0, %v1644
  %vm1651 = vcmask 64512
  %v1652 = vsel %vm1651, %v1650, 0.0
  %1653 = vadd.xlane.f32.xlu0 %v1652
  %v1654 = vpop.xlane.xlu0 %1653
  %v1655 = vrsqrt.pop %v1654
  %v1656 = vmul.f32 %v1654, %v1655
  %vm1657 = vcmp.eq.f32.partialorder %v1654, inf
  %v1658 = vsel %vm1657, %v1654, %v1656
  %vm1659 = vcmp.eq.f32.partialorder %v1654, 0.0
  %v1660 = vand.u32 %v1654, 2147483648
  %v1661 = vsel %vm1659, %v1660, %v1658
  %v1662 = vadd.f32 %v1661, 1e-15
  %v1663 = vrcp.pop %v1662
  %v1664 = vmul.f32 %v1650, %v1663
  %1665 = vxpose.xlu0.b32.start [1/16] %v1662, 128
  %1666 = vxpose.xlu0.b32.cont [2/16] 0.0, 128
  %1667 = vxpose.xlu0.b32.cont [3/16] 0.0, 128
  %1668 = vxpose.xlu0.b32.cont [4/16] 0.0, 128
  %1669 = vxpose.xlu0.b32.cont [5/16] 0.0, 128
  %1670 = vxpose.xlu0.b32.cont [6/16] 0.0, 128
  %1671 = vxpose.xlu0.b32.cont [7/16] 0.0, 128
  %1672 = vxpose.xlu0.b32.cont [8/16] 0.0, 128
  %1673 = vxpose.xlu0.b32.cont [9/16] 0.0, 128
  %1674 = vxpose.xlu0.b32.cont [10/16] 0.0, 128
  %1675 = vxpose.xlu0.b32.cont [11/16] 0.0, 128
  %1676 = vxpose.xlu0.b32.cont [12/16] 0.0, 128
  %1677 = vxpose.xlu0.b32.cont [13/16] 0.0, 128
  %1678 = vxpose.xlu0.b32.cont [14/16] 0.0, 128
  %1679 = vxpose.xlu0.b32.cont [15/16] 0.0, 128
  %1680 = vxpose.xlu0.b32.end [16/16] 0.0, 128
  %v1681 = vpop.trf.xlu0
  %v1682 = vpop.trf.xlu0
  %v1683 = vpop.trf.xlu0
  %v1684 = vpop.trf.xlu0
  %v1685 = vpop.trf.xlu0
  %v1686 = vpop.trf.xlu0
  %v1687 = vpop.trf.xlu0
  %v1688 = vpop.trf.xlu0
  %v1689 = vpop.trf.xlu0
  %v1690 = vpop.trf.xlu0
  %v1691 = vpop.trf.xlu0
  %v1692 = vpop.trf.xlu0
  %v1693 = vpop.trf.xlu0
  %v1694 = vpop.trf.xlu0
  %v1695 = vpop.trf.xlu0
  %v1696 = vpop.trf.xlu0
  %v1697 = vlaneseq
  %v1698 = vshrl.u32 %v1697, 7
  %v1699 = vsub.s32 0, %v1698
  %v1700 = vrot.slane %v1681, %v1699
  %v1701 = vrcp.pop %v1700
  %v1702 = vmul.f32 %v1664, %v1701
  %v1704 = vsel %vm1651, %v1702, 0
  %1706 = vmatprep.subr.mxu0 0.0
  %1707 = vmatpush1.msra.mxu0 %v1569
  %1708 = vmatprep.subr.mxu0 0.0
  %1709 = vmatpush1.msra.mxu0 0.0
  %1710 = vmatprep.subr.mxu0 0.0
  %1711 = vmatpush1.msra.mxu0 0.0
  %1712 = vmatprep.subr.mxu0 0.0
  %1713 = vmatpush1.msra.mxu0 0.0
  %1714 = vmatprep.subr.mxu0 0.0
  %1715 = vmatpush1.msra.mxu0 0.0
  %1716 = vmatprep.subr.mxu0 0.0
  %1717 = vmatpush1.msra.mxu0 0.0
  %1718 = vmatprep.subr.mxu0 0.0
  %1719 = vmatpush1.msra.mxu0 0.0
  %1720 = vmatprep.subr.mxu0 0.0
  %1721 = vmatpush1.msra.mxu0 0.0
  %1722 = vmatprep.subr.mxu0 0.0
  %1723 = vmatpush1.msra.mxu0 0.0
  %1724 = vmatprep.subr.mxu0 0.0
  %1725 = vmatpush1.msra.mxu0 0.0
  %1726 = vmatprep.subr.mxu0 0.0
  %1727 = vmatpush1.msra.mxu0 0.0
  %1728 = vmatprep.subr.mxu0 0.0
  %1729 = vmatpush1.msra.mxu0 0.0
  %1730 = vmatprep.subr.mxu0 0.0
  %1731 = vmatpush1.msra.mxu0 0.0
  %1732 = vmatprep.subr.mxu0 0.0
  %1733 = vmatpush1.msra.mxu0 0.0
  %1734 = vmatprep.subr.mxu0 0.0
  %1735 = vmatpush1.msra.mxu0 0.0
  %1736 = vmatprep.subr.mxu0 0.0
  %1737 = vmatpush1.msra.mxu0 0.0
  %1738 = vmatprep.subr.mxu0 0.0
  %1739 = vmatpush1.msra.mxu0 0.0
  %1740 = vmatprep.subr.mxu0 0.0
  %1741 = vmatpush1.msra.mxu0 0.0
  %1742 = vmatprep.subr.mxu0 0.0
  %1743 = vmatpush1.msra.mxu0 0.0
  %1744 = vmatprep.subr.mxu0 0.0
  %1745 = vmatpush1.msra.mxu0 0.0
  %1746 = vmatprep.subr.mxu0 0.0
  %1747 = vmatpush1.msra.mxu0 0.0
  %1748 = vmatprep.subr.mxu0 0.0
  %1749 = vmatpush1.msra.mxu0 0.0
  %1750 = vmatprep.subr.mxu0 0.0
  %1751 = vmatpush1.msra.mxu0 0.0
  %1752 = vmatprep.subr.mxu0 0.0
  %1753 = vmatpush1.msra.mxu0 0.0
  %1754 = vmatprep.subr.mxu0 0.0
  %1755 = vmatpush1.msra.mxu0 0.0
  %1756 = vmatprep.subr.mxu0 0.0
  %1757 = vmatpush1.msra.mxu0 0.0
  %1758 = vmatprep.subr.mxu0 0.0
  %1759 = vmatpush1.msra.mxu0 0.0
  %1760 = vmatprep.subr.mxu0 0.0
  %1761 = vmatpush1.msra.mxu0 0.0
  %1762 = vmatprep.subr.mxu0 0.0
  %1763 = vmatpush1.msra.mxu0 0.0
  %1764 = vmatprep.subr.mxu0 0.0
  %1765 = vmatpush1.msra.mxu0 0.0
  %1766 = vmatprep.subr.mxu0 0.0
  %1767 = vmatpush1.msra.mxu0 0.0
  %1768 = vmatprep.subr.mxu0 0.0
  %1769 = vmatpush1.msra.mxu0 0.0
  %1770 = vmatprep.mubr.f32.mxu0 0.0
  %1771 = vmatmul.mubr.f32.gmra.mrb[0].mxu0 %v1704
  %v1772 = vpop.f32.mrb[0].mxu0
  %v1773 = vadd.f32 0.0, %v1772
  %v1774 = vpop.f32.mrb[0].mxu0
  %1775 = vdwg.mxu0
  %1776 = vrot.lane.b32.xlu0 %v1569, 32
  %v1777 = vpop.permute.xlu0 %1776
  %v1779 = vsel %vm162, %v1773, %v1777
  %v1780 = vlaneseq
  %v1781 = vshrl.u32 %v1780, 7
  %v1782 = vsub.s32 6, %v1781
  %v1783 = vrot.slane %v47, %v1782
  %vm1784 = vcmask 523264
  %v1786 = vsel %vm1784, %v1779, 0
  %1788 = vmatprep.subr.mxu0 0.0
  %1789 = vmatpush1.msra.mxu0 %v39
  %1790 = vmatprep.subr.mxu0 0.0
  %1791 = vmatpush1.msra.mxu0 %v40
  %1792 = vmatprep.subr.mxu0 0.0
  %1793 = vmatpush1.msra.mxu0 %v41
  %1794 = vmatprep.subr.mxu0 0.0
  %1795 = vmatpush1.msra.mxu0 %v42
  %1796 = vmatprep.subr.mxu0 0.0
  %1797 = vmatpush1.msra.mxu0 %v43
  %1798 = vmatprep.subr.mxu0 0.0
  %1799 = vmatpush1.msra.mxu0 %v44
  %1800 = vmatprep.subr.mxu0 0.0
  %1801 = vmatpush1.msra.mxu0 %v45
  %1802 = vmatprep.subr.mxu0 0.0
  %1803 = vmatpush1.msra.mxu0 %v46
  %1804 = vmatprep.subr.mxu0 0.0
  %1805 = vmatpush1.msra.mxu0 0.0
  %1806 = vmatprep.subr.mxu0 0.0
  %1807 = vmatpush1.msra.mxu0 0.0
  %1808 = vmatprep.subr.mxu0 0.0
  %1809 = vmatpush1.msra.mxu0 0.0
  %1810 = vmatprep.subr.mxu0 0.0
  %1811 = vmatpush1.msra.mxu0 0.0
  %1812 = vmatprep.subr.mxu0 0.0
  %1813 = vmatpush1.msra.mxu0 0.0
  %1814 = vmatprep.subr.mxu0 0.0
  %1815 = vmatpush1.msra.mxu0 0.0
  %1816 = vmatprep.subr.mxu0 0.0
  %1817 = vmatpush1.msra.mxu0 0.0
  %1818 = vmatprep.subr.mxu0 0.0
  %1819 = vmatpush1.msra.mxu0 0.0
  %1820 = vmatprep.subr.mxu0 0.0
  %1821 = vmatpush1.msra.mxu0 0.0
  %1822 = vmatprep.subr.mxu0 0.0
  %1823 = vmatpush1.msra.mxu0 0.0
  %1824 = vmatprep.subr.mxu0 0.0
  %1825 = vmatpush1.msra.mxu0 0.0
  %1826 = vmatprep.subr.mxu0 0.0
  %1827 = vmatpush1.msra.mxu0 0.0
  %1828 = vmatprep.subr.mxu0 0.0
  %1829 = vmatpush1.msra.mxu0 0.0
  %1830 = vmatprep.subr.mxu0 0.0
  %1831 = vmatpush1.msra.mxu0 0.0
  %1832 = vmatprep.subr.mxu0 0.0
  %1833 = vmatpush1.msra.mxu0 0.0
  %1834 = vmatprep.subr.mxu0 0.0
  %1835 = vmatpush1.msra.mxu0 0.0
  %1836 = vmatprep.subr.mxu0 0.0
  %1837 = vmatpush1.msra.mxu0 0.0
  %1838 = vmatprep.subr.mxu0 0.0
  %1839 = vmatpush1.msra.mxu0 0.0
  %1840 = vmatprep.subr.mxu0 0.0
  %1841 = vmatpush1.msra.mxu0 0.0
  %1842 = vmatprep.subr.mxu0 0.0
  %1843 = vmatpush1.msra.mxu0 0.0
  %1844 = vmatprep.subr.mxu0 0.0
  %1845 = vmatpush1.msra.mxu0 0.0
  %1846 = vmatprep.subr.mxu0 0.0
  %1847 = vmatpush1.msra.mxu0 0.0
  %1848 = vmatprep.subr.mxu0 0.0
  %1849 = vmatpush1.msra.mxu0 0.0
  %1850 = vmatprep.subr.mxu0 0.0
  %1851 = vmatpush1.msra.mxu0 0.0
  %1852 = vmatprep.mubr.f32.mxu0 0.0
  %1853 = vmatmul.mubr.f32.gmra.mrb[0].mxu0 %v1786
  %v1854 = vpop.f32.mrb[0].mxu0
  %v1855 = vadd.f32 %v1783, %v1854
  %v1856 = vpop.f32.mrb[0].mxu0
  %1857 = vdwg.mxu0
  %v1858 = vsel %vm162, %v1855, 0.0
  %1859 = vadd.xlane.f32.xlu0 %v1858
  %v1860 = vpop.xlane.xlu0 %1859
  %1862 = vrot.lane.b32.xlu0 %v49, 114
  %v1863 = vpop.permute.xlu0 %1862
  %v1864 = vsel %vm1651, %v1863, 0
  %1866 = vmatprep.subr.mxu0 0.0
  %1867 = vmatpush1.msra.mxu0 %v1860
  %1868 = vmatprep.subr.mxu0 0.0
  %1869 = vmatpush1.msra.mxu0 0.0
  %1870 = vmatprep.subr.mxu0 0.0
  %1871 = vmatpush1.msra.mxu0 0.0
  %1872 = vmatprep.subr.mxu0 0.0
  %1873 = vmatpush1.msra.mxu0 0.0
  %1874 = vmatprep.subr.mxu0 0.0
  %1875 = vmatpush1.msra.mxu0 0.0
  %1876 = vmatprep.subr.mxu0 0.0
  %1877 = vmatpush1.msra.mxu0 0.0
  %1878 = vmatprep.subr.mxu0 0.0
  %1879 = vmatpush1.msra.mxu0 0.0
  %1880 = vmatprep.subr.mxu0 0.0
  %1881 = vmatpush1.msra.mxu0 0.0
  %1882 = vmatprep.subr.mxu0 0.0
  %1883 = vmatpush1.msra.mxu0 0.0
  %1884 = vmatprep.subr.mxu0 0.0
  %1885 = vmatpush1.msra.mxu0 0.0
  %1886 = vmatprep.subr.mxu0 0.0
  %1887 = vmatpush1.msra.mxu0 0.0
  %1888 = vmatprep.subr.mxu0 0.0
  %1889 = vmatpush1.msra.mxu0 0.0
  %1890 = vmatprep.subr.mxu0 0.0
  %1891 = vmatpush1.msra.mxu0 0.0
  %1892 = vmatprep.subr.mxu0 0.0
  %1893 = vmatpush1.msra.mxu0 0.0
  %1894 = vmatprep.subr.mxu0 0.0
  %1895 = vmatpush1.msra.mxu0 0.0
  %1896 = vmatprep.subr.mxu0 0.0
  %1897 = vmatpush1.msra.mxu0 0.0
  %1898 = vmatprep.subr.mxu0 0.0
  %1899 = vmatpush1.msra.mxu0 0.0
  %1900 = vmatprep.subr.mxu0 0.0
  %1901 = vmatpush1.msra.mxu0 0.0
  %1902 = vmatprep.subr.mxu0 0.0
  %1903 = vmatpush1.msra.mxu0 0.0
  %1904 = vmatprep.subr.mxu0 0.0
  %1905 = vmatpush1.msra.mxu0 0.0
  %1906 = vmatprep.subr.mxu0 0.0
  %1907 = vmatpush1.msra.mxu0 0.0
  %1908 = vmatprep.subr.mxu0 0.0
  %1909 = vmatpush1.msra.mxu0 0.0
  %1910 = vmatprep.subr.mxu0 0.0
  %1911 = vmatpush1.msra.mxu0 0.0
  %1912 = vmatprep.subr.mxu0 0.0
  %1913 = vmatpush1.msra.mxu0 0.0
  %1914 = vmatprep.subr.mxu0 0.0
  %1915 = vmatpush1.msra.mxu0 0.0
  %1916 = vmatprep.subr.mxu0 0.0
  %1917 = vmatpush1.msra.mxu0 0.0
  %1918 = vmatprep.subr.mxu0 0.0
  %1919 = vmatpush1.msra.mxu0 0.0
  %1920 = vmatprep.subr.mxu0 0.0
  %1921 = vmatpush1.msra.mxu0 0.0
  %1922 = vmatprep.subr.mxu0 0.0
  %1923 = vmatpush1.msra.mxu0 0.0
  %1924 = vmatprep.subr.mxu0 0.0
  %1925 = vmatpush1.msra.mxu0 0.0
  %1926 = vmatprep.subr.mxu0 0.0
  %1927 = vmatpush1.msra.mxu0 0.0
  %1928 = vmatprep.subr.mxu0 0.0
  %1929 = vmatpush1.msra.mxu0 0.0
  %1930 = vmatprep.mubr.f32.mxu0 0.0
  %1931 = vmatmul.mubr.f32.gmra.mrb[0].mxu0 %v1864
  %v1932 = vpop.f32.mrb[0].mxu0
  %v1933 = vadd.f32 0.0, %v1932
  %v1934 = vpop.f32.mrb[0].mxu0
  %1935 = vdwg.mxu0
  %v1936 = vmul.f32 %v1933, 0.015625
  %1938 = vset.pattern.permute.xlu0 0
  %1939 = vperm.xlu0 %1938, %v1936
  %v1940 = vpop.permute.xlu0 %1939
  %v1942 = vsub.f32 %v1855, %v1940
  %v1943 = vmul.f32 %v1942, %v1942
  %v1944 = vsel %vm162, %v1943, 0.0
  %1945 = vadd.xlane.f32.xlu0 %v1944
  %v1946 = vpop.xlane.xlu0 %1945
  %1947 = vmatprep.subr.mxu0 0.0
  %1948 = vmatpush1.msra.mxu0 %v1946
  %1949 = vmatprep.subr.mxu0 0.0
  %1950 = vmatpush1.msra.mxu0 0.0
  %1951 = vmatprep.subr.mxu0 0.0
  %1952 = vmatpush1.msra.mxu0 0.0
  %1953 = vmatprep.subr.mxu0 0.0
  %1954 = vmatpush1.msra.mxu0 0.0
  %1955 = vmatprep.subr.mxu0 0.0
  %1956 = vmatpush1.msra.mxu0 0.0
  %1957 = vmatprep.subr.mxu0 0.0
  %1958 = vmatpush1.msra.mxu0 0.0
  %1959 = vmatprep.subr.mxu0 0.0
  %1960 = vmatpush1.msra.mxu0 0.0
  %1961 = vmatprep.subr.mxu0 0.0
  %1962 = vmatpush1.msra.mxu0 0.0
  %1963 = vmatprep.subr.mxu0 0.0
  %1964 = vmatpush1.msra.mxu0 0.0
  %1965 = vmatprep.subr.mxu0 0.0
  %1966 = vmatpush1.msra.mxu0 0.0
  %1967 = vmatprep.subr.mxu0 0.0
  %1968 = vmatpush1.msra.mxu0 0.0
  %1969 = vmatprep.subr.mxu0 0.0
  %1970 = vmatpush1.msra.mxu0 0.0
  %1971 = vmatprep.subr.mxu0 0.0
  %1972 = vmatpush1.msra.mxu0 0.0
  %1973 = vmatprep.subr.mxu0 0.0
  %1974 = vmatpush1.msra.mxu0 0.0
  %1975 = vmatprep.subr.mxu0 0.0
  %1976 = vmatpush1.msra.mxu0 0.0
  %1977 = vmatprep.subr.mxu0 0.0
  %1978 = vmatpush1.msra.mxu0 0.0
  %1979 = vmatprep.subr.mxu0 0.0
  %1980 = vmatpush1.msra.mxu0 0.0
  %1981 = vmatprep.subr.mxu0 0.0
  %1982 = vmatpush1.msra.mxu0 0.0
  %1983 = vmatprep.subr.mxu0 0.0
  %1984 = vmatpush1.msra.mxu0 0.0
  %1985 = vmatprep.subr.mxu0 0.0
  %1986 = vmatpush1.msra.mxu0 0.0
  %1987 = vmatprep.subr.mxu0 0.0
  %1988 = vmatpush1.msra.mxu0 0.0
  %1989 = vmatprep.subr.mxu0 0.0
  %1990 = vmatpush1.msra.mxu0 0.0
  %1991 = vmatprep.subr.mxu0 0.0
  %1992 = vmatpush1.msra.mxu0 0.0
  %1993 = vmatprep.subr.mxu0 0.0
  %1994 = vmatpush1.msra.mxu0 0.0
  %1995 = vmatprep.subr.mxu0 0.0
  %1996 = vmatpush1.msra.mxu0 0.0
  %1997 = vmatprep.subr.mxu0 0.0
  %1998 = vmatpush1.msra.mxu0 0.0
  %1999 = vmatprep.subr.mxu0 0.0
  %2000 = vmatpush1.msra.mxu0 0.0
  %2001 = vmatprep.subr.mxu0 0.0
  %2002 = vmatpush1.msra.mxu0 0.0
  %2003 = vmatprep.subr.mxu0 0.0
  %2004 = vmatpush1.msra.mxu0 0.0
  %2005 = vmatprep.subr.mxu0 0.0
  %2006 = vmatpush1.msra.mxu0 0.0
  %2007 = vmatprep.subr.mxu0 0.0
  %2008 = vmatpush1.msra.mxu0 0.0
  %2009 = vmatprep.subr.mxu0 0.0
  %2010 = vmatpush1.msra.mxu0 0.0
  %2011 = vmatprep.mubr.f32.mxu0 0.0
  %2012 = vmatmul.mubr.f32.gmra.mrb[0].mxu0 %v1864
  %v2013 = vpop.f32.mrb[0].mxu0
  %v2014 = vadd.f32 0.0, %v2013
  %v2015 = vpop.f32.mrb[0].mxu0
  %2016 = vdwg.mxu0
  %v2017 = vmul.f32 %v2014, 0.015625
  %v2018 = vadd.f32 %v2017, 1e-05
  %v2019 = vrsqrt.pop %v2018
  %2021 = vset.pattern.permute.xlu0 0
  %2022 = vperm.xlu0 %2021, %v2019
  %v2023 = vpop.permute.xlu0 %2022
  %v2025 = vmul.f32 %v1942, %v2023
  %2026 = vset.pattern.permute.xlu0 28
  %2027 = vperm.xlu0 %2026, %v49
  %v2028 = vpop.permute.xlu0 %2027
  %v2030 = vmul.f32 %v2025, %v2028
  %2031 = vset.pattern.permute.xlu0 29
  %2032 = vperm.xlu0 %2031, %v49
  %v2033 = vpop.permute.xlu0 %2032
  %v2035 = vadd.f32 %v2030, %v2033
  %v2036 = vmax.f32 %v2035, 0.0
  %v2037 = vlaneseq
  %v2038 = vshrl.u32 %v2037, 7
  %v2039 = vsub.s32 4, %v2038
  %v2040 = vrot.slane %v47, %v2039
  %2041 = vrot.lane.b32.xlu0 %v35, 119
  %v2042 = vpop.permute.xlu0 %2041
  %2043 = vrot.lane.b32.xlu0 %v36, 119
  %v2044 = vpop.permute.xlu0 %2043
  %2045 = vrot.lane.b32.xlu0 %v37, 119
  %v2046 = vpop.permute.xlu0 %2045
  %2047 = vrot.lane.b32.xlu0 %v38, 119
  %v2048 = vpop.permute.xlu0 %2047
  %v2054 = vsel %vm162, %v2036, 0
  %2056 = vmatprep.subr.mxu0 0.0
  %2057 = vmatpush1.msra.mxu0 %v2042
  %2058 = vmatprep.subr.mxu0 0.0
  %2059 = vmatpush1.msra.mxu0 %v2044
  %2060 = vmatprep.subr.mxu0 0.0
  %2061 = vmatpush1.msra.mxu0 %v2046
  %2062 = vmatprep.subr.mxu0 0.0
  %2063 = vmatpush1.msra.mxu0 %v2048
  %2064 = vmatprep.subr.mxu0 0.0
  %2065 = vmatpush1.msra.mxu0 0.0
  %2066 = vmatprep.subr.mxu0 0.0
  %2067 = vmatpush1.msra.mxu0 0.0
  %2068 = vmatprep.subr.mxu0 0.0
  %2069 = vmatpush1.msra.mxu0 0.0
  %2070 = vmatprep.subr.mxu0 0.0
  %2071 = vmatpush1.msra.mxu0 0.0
  %2072 = vmatprep.subr.mxu0 0.0
  %2073 = vmatpush1.msra.mxu0 0.0
  %2074 = vmatprep.subr.mxu0 0.0
  %2075 = vmatpush1.msra.mxu0 0.0
  %2076 = vmatprep.subr.mxu0 0.0
  %2077 = vmatpush1.msra.mxu0 0.0
  %2078 = vmatprep.subr.mxu0 0.0
  %2079 = vmatpush1.msra.mxu0 0.0
  %2080 = vmatprep.subr.mxu0 0.0
  %2081 = vmatpush1.msra.mxu0 0.0
  %2082 = vmatprep.subr.mxu0 0.0
  %2083 = vmatpush1.msra.mxu0 0.0
  %2084 = vmatprep.subr.mxu0 0.0
  %2085 = vmatpush1.msra.mxu0 0.0
  %2086 = vmatprep.subr.mxu0 0.0
  %2087 = vmatpush1.msra.mxu0 0.0
  %2088 = vmatprep.subr.mxu0 0.0
  %2089 = vmatpush1.msra.mxu0 0.0
  %2090 = vmatprep.subr.mxu0 0.0
  %2091 = vmatpush1.msra.mxu0 0.0
  %2092 = vmatprep.subr.mxu0 0.0
  %2093 = vmatpush1.msra.mxu0 0.0
  %2094 = vmatprep.subr.mxu0 0.0
  %2095 = vmatpush1.msra.mxu0 0.0
  %2096 = vmatprep.subr.mxu0 0.0
  %2097 = vmatpush1.msra.mxu0 0.0
  %2098 = vmatprep.subr.mxu0 0.0
  %2099 = vmatpush1.msra.mxu0 0.0
  %2100 = vmatprep.subr.mxu0 0.0
  %2101 = vmatpush1.msra.mxu0 0.0
  %2102 = vmatprep.subr.mxu0 0.0
  %2103 = vmatpush1.msra.mxu0 0.0
  %2104 = vmatprep.subr.mxu0 0.0
  %2105 = vmatpush1.msra.mxu0 0.0
  %2106 = vmatprep.subr.mxu0 0.0
  %2107 = vmatpush1.msra.mxu0 0.0
  %2108 = vmatprep.subr.mxu0 0.0
  %2109 = vmatpush1.msra.mxu0 0.0
  %2110 = vmatprep.subr.mxu0 0.0
  %2111 = vmatpush1.msra.mxu0 0.0
  %2112 = vmatprep.subr.mxu0 0.0
  %2113 = vmatpush1.msra.mxu0 0.0
  %2114 = vmatprep.subr.mxu0 0.0
  %2115 = vmatpush1.msra.mxu0 0.0
  %2116 = vmatprep.subr.mxu0 0.0
  %2117 = vmatpush1.msra.mxu0 0.0
  %2118 = vmatprep.subr.mxu0 0.0
  %2119 = vmatpush1.msra.mxu0 0.0
  %2120 = vmatprep.mubr.f32.mxu0 0.0
  %2121 = vmatmul.mubr.f32.gmra.mrb[0].mxu0 %v2054
  %v2122 = vpop.f32.mrb[0].mxu0
  %v2123 = vadd.f32 %v2040, %v2122
  %v2124 = vpop.f32.mrb[0].mxu0
  %2125 = vdwg.mxu0
  %vm2126 = vcmask 15360
  %v2127 = vsel %vm2126, %v2123, -inf
  %2128 = vmax.xlane.f32.xlu0 %v2127
  %v2129 = vpop.xlane.xlu0 %2128
  %v2130 = vsub.f32 %v2123, %v2129
  %v2131 = vmul.f32 %v2130, 1.442695
  %v2132 = vpow.pop %v2131
  %v2133 = vsel %vm2126, %v2132, 0.0
  %2134 = vadd.xlane.f32.xlu0 %v2133
  %v2135 = vpop.xlane.xlu0 %2134
  %v2136 = vrcp.pop %v2135
  %v2137 = vmul.f32 %v2132, %v2136
  %2139 = vrot.lane.b32.xlu0 %v2137, 2
  %v2140 = vpop.permute.xlu0 %2139
  %v2142 = vsel %vm2126, %v2137, %v2140
  %2143 = vrot.lane.b32.xlu0 %v49, 120
  %v2144 = vpop.permute.xlu0 %2143
  %v2146 = vmul.f32 %v2142, %v2144
  %2147 = vrot.lane.b32.xlu0 %v1702, 32
  %v2148 = vpop.permute.xlu0 %2147
  %v2150 = vsel %vm162, %v2036, %v2148
  %2151 = vxpose.xlu0.b32.start [1/16] %v2146, 128
  %2152 = vxpose.xlu0.b32.cont [2/16] 0.0, 128
  %2153 = vxpose.xlu0.b32.cont [3/16] 0.0, 128
  %2154 = vxpose.xlu0.b32.cont [4/16] 0.0, 128
  %2155 = vxpose.xlu0.b32.cont [5/16] 0.0, 128
  %2156 = vxpose.xlu0.b32.cont [6/16] 0.0, 128
  %2157 = vxpose.xlu0.b32.cont [7/16] 0.0, 128
  %2158 = vxpose.xlu0.b32.cont [8/16] 0.0, 128
  %2159 = vxpose.xlu0.b32.cont [9/16] 0.0, 128
  %2160 = vxpose.xlu0.b32.cont [10/16] 0.0, 128
  %2161 = vxpose.xlu0.b32.cont [11/16] 0.0, 128
  %2162 = vxpose.xlu0.b32.cont [12/16] 0.0, 128
  %2163 = vxpose.xlu0.b32.cont [13/16] 0.0, 128
  %2164 = vxpose.xlu0.b32.cont [14/16] 0.0, 128
  %2165 = vxpose.xlu0.b32.cont [15/16] 0.0, 128
  %2166 = vxpose.xlu0.b32.end [16/16] 0.0, 128
  %v2167 = vpop.trf.xlu0
  %v2168 = vpop.trf.xlu0
  %v2169 = vpop.trf.xlu0
  %v2170 = vpop.trf.xlu0
  %v2171 = vpop.trf.xlu0
  %v2172 = vpop.trf.xlu0
  %v2173 = vpop.trf.xlu0
  %v2174 = vpop.trf.xlu0
  %v2175 = vpop.trf.xlu0
  %v2176 = vpop.trf.xlu0
  %v2177 = vpop.trf.xlu0
  %v2178 = vpop.trf.xlu0
  %v2179 = vpop.trf.xlu0
  %v2180 = vpop.trf.xlu0
  %v2181 = vpop.trf.xlu0
  %v2182 = vpop.trf.xlu0
  %v2184 = vsel %vm1651, %v2167, 0
  %2186 = vmatprep.subr.mxu0 0.0
  %2187 = vmatpush1.msra.mxu0 %v2150
  %2188 = vmatprep.subr.mxu0 0.0
  %2189 = vmatpush1.msra.mxu0 0.0
  %2190 = vmatprep.subr.mxu0 0.0
  %2191 = vmatpush1.msra.mxu0 0.0
  %2192 = vmatprep.subr.mxu0 0.0
  %2193 = vmatpush1.msra.mxu0 0.0
  %2194 = vmatprep.subr.mxu0 0.0
  %2195 = vmatpush1.msra.mxu0 0.0
  %2196 = vmatprep.subr.mxu0 0.0
  %2197 = vmatpush1.msra.mxu0 0.0
  %2198 = vmatprep.subr.mxu0 0.0
  %2199 = vmatpush1.msra.mxu0 0.0
  %2200 = vmatprep.subr.mxu0 0.0
  %2201 = vmatpush1.msra.mxu0 0.0
  %2202 = vmatprep.subr.mxu0 0.0
  %2203 = vmatpush1.msra.mxu0 0.0
  %2204 = vmatprep.subr.mxu0 0.0
  %2205 = vmatpush1.msra.mxu0 0.0
  %2206 = vmatprep.subr.mxu0 0.0
  %2207 = vmatpush1.msra.mxu0 0.0
  %2208 = vmatprep.subr.mxu0 0.0
  %2209 = vmatpush1.msra.mxu0 0.0
  %2210 = vmatprep.subr.mxu0 0.0
  %2211 = vmatpush1.msra.mxu0 0.0
  %2212 = vmatprep.subr.mxu0 0.0
  %2213 = vmatpush1.msra.mxu0 0.0
  %2214 = vmatprep.subr.mxu0 0.0
  %2215 = vmatpush1.msra.mxu0 0.0
  %2216 = vmatprep.subr.mxu0 0.0
  %2217 = vmatpush1.msra.mxu0 0.0
  %2218 = vmatprep.subr.mxu0 0.0
  %2219 = vmatpush1.msra.mxu0 0.0
  %2220 = vmatprep.subr.mxu0 0.0
  %2221 = vmatpush1.msra.mxu0 0.0
  %2222 = vmatprep.subr.mxu0 0.0
  %2223 = vmatpush1.msra.mxu0 0.0
  %2224 = vmatprep.subr.mxu0 0.0
  %2225 = vmatpush1.msra.mxu0 0.0
  %2226 = vmatprep.subr.mxu0 0.0
  %2227 = vmatpush1.msra.mxu0 0.0
  %2228 = vmatprep.subr.mxu0 0.0
  %2229 = vmatpush1.msra.mxu0 0.0
  %2230 = vmatprep.subr.mxu0 0.0
  %2231 = vmatpush1.msra.mxu0 0.0
  %2232 = vmatprep.subr.mxu0 0.0
  %2233 = vmatpush1.msra.mxu0 0.0
  %2234 = vmatprep.subr.mxu0 0.0
  %2235 = vmatpush1.msra.mxu0 0.0
  %2236 = vmatprep.subr.mxu0 0.0
  %2237 = vmatpush1.msra.mxu0 0.0
  %2238 = vmatprep.subr.mxu0 0.0
  %2239 = vmatpush1.msra.mxu0 0.0
  %2240 = vmatprep.subr.mxu0 0.0
  %2241 = vmatpush1.msra.mxu0 0.0
  %2242 = vmatprep.subr.mxu0 0.0
  %2243 = vmatpush1.msra.mxu0 0.0
  %2244 = vmatprep.subr.mxu0 0.0
  %2245 = vmatpush1.msra.mxu0 0.0
  %2246 = vmatprep.subr.mxu0 0.0
  %2247 = vmatpush1.msra.mxu0 0.0
  %2248 = vmatprep.subr.mxu0 0.0
  %2249 = vmatpush1.msra.mxu0 0.0
  %2250 = vmatprep.mubr.f32.mxu0 0.0
  %2251 = vmatmul.mubr.f32.gmra.mrb[0].mxu0 %v2184
  %v2252 = vpop.f32.mrb[0].mxu0
  %v2253 = vadd.f32 0.0, %v2252
  %v2254 = vpop.f32.mrb[0].mxu0
  %2255 = vdwg.mxu0
  %2257 = vrot.lane.b32.xlu0 %v2253, 96
  %v2258 = vpop.permute.xlu0 %2257
  %v2259 = vsel %vm1651, %v2258, 0
  %2261 = vmatprep.subr.mxu0 0.0
  %2262 = vmatpush1.msra.mxu0 %v2146
  %2263 = vmatprep.subr.mxu0 0.0
  %2264 = vmatpush1.msra.mxu0 0.0
  %2265 = vmatprep.subr.mxu0 0.0
  %2266 = vmatpush1.msra.mxu0 0.0
  %2267 = vmatprep.subr.mxu0 0.0
  %2268 = vmatpush1.msra.mxu0 0.0
  %2269 = vmatprep.subr.mxu0 0.0
  %2270 = vmatpush1.msra.mxu0 0.0
  %2271 = vmatprep.subr.mxu0 0.0
  %2272 = vmatpush1.msra.mxu0 0.0
  %2273 = vmatprep.subr.mxu0 0.0
  %2274 = vmatpush1.msra.mxu0 0.0
  %2275 = vmatprep.subr.mxu0 0.0
  %2276 = vmatpush1.msra.mxu0 0.0
  %2277 = vmatprep.subr.mxu0 0.0
  %2278 = vmatpush1.msra.mxu0 0.0
  %2279 = vmatprep.subr.mxu0 0.0
  %2280 = vmatpush1.msra.mxu0 0.0
  %2281 = vmatprep.subr.mxu0 0.0
  %2282 = vmatpush1.msra.mxu0 0.0
  %2283 = vmatprep.subr.mxu0 0.0
  %2284 = vmatpush1.msra.mxu0 0.0
  %2285 = vmatprep.subr.mxu0 0.0
  %2286 = vmatpush1.msra.mxu0 0.0
  %2287 = vmatprep.subr.mxu0 0.0
  %2288 = vmatpush1.msra.mxu0 0.0
  %2289 = vmatprep.subr.mxu0 0.0
  %2290 = vmatpush1.msra.mxu0 0.0
  %2291 = vmatprep.subr.mxu0 0.0
  %2292 = vmatpush1.msra.mxu0 0.0
  %2293 = vmatprep.subr.mxu0 0.0
  %2294 = vmatpush1.msra.mxu0 0.0
  %2295 = vmatprep.subr.mxu0 0.0
  %2296 = vmatpush1.msra.mxu0 0.0
  %2297 = vmatprep.subr.mxu0 0.0
  %2298 = vmatpush1.msra.mxu0 0.0
  %2299 = vmatprep.subr.mxu0 0.0
  %2300 = vmatpush1.msra.mxu0 0.0
  %2301 = vmatprep.subr.mxu0 0.0
  %2302 = vmatpush1.msra.mxu0 0.0
  %2303 = vmatprep.subr.mxu0 0.0
  %2304 = vmatpush1.msra.mxu0 0.0
  %2305 = vmatprep.subr.mxu0 0.0
  %2306 = vmatpush1.msra.mxu0 0.0
  %2307 = vmatprep.subr.mxu0 0.0
  %2308 = vmatpush1.msra.mxu0 0.0
  %2309 = vmatprep.subr.mxu0 0.0
  %2310 = vmatpush1.msra.mxu0 0.0
  %2311 = vmatprep.subr.mxu0 0.0
  %2312 = vmatpush1.msra.mxu0 0.0
  %2313 = vmatprep.subr.mxu0 0.0
  %2314 = vmatpush1.msra.mxu0 0.0
  %2315 = vmatprep.subr.mxu0 0.0
  %2316 = vmatpush1.msra.mxu0 0.0
  %2317 = vmatprep.subr.mxu0 0.0
  %2318 = vmatpush1.msra.mxu0 0.0
  %2319 = vmatprep.subr.mxu0 0.0
  %2320 = vmatpush1.msra.mxu0 0.0
  %2321 = vmatprep.subr.mxu0 0.0
  %2322 = vmatpush1.msra.mxu0 0.0
  %2323 = vmatprep.subr.mxu0 0.0
  %2324 = vmatpush1.msra.mxu0 0.0
  %2325 = vmatprep.mubr.f32.mxu0 0.0
  %2326 = vmatmul.mubr.f32.gmra.mrb[0].mxu0 %v2259
  %v2327 = vpop.f32.mrb[0].mxu0
  %v2328 = vadd.f32 0.0, %v2327
  %v2329 = vpop.f32.mrb[0].mxu0
  %2330 = vdwg.mxu0
  %v2331 = vsel %vm1649, 0.0, %v2328
  %vm2332 = vcmask 27648
  %v2333 = vsel %vm2332, %v2331, 0.0
  %2334 = vadd.xlane.f32.xlu0 %v2333
  %v2335 = vpop.xlane.xlu0 %2334
  %v2336 = vrsqrt.pop %v2335
  %v2337 = vmul.f32 %v2335, %v2336
  %vm2338 = vcmp.eq.f32.partialorder %v2335, inf
  %v2339 = vsel %vm2338, %v2335, %v2337
  %vm2340 = vcmp.eq.f32.partialorder %v2335, 0.0
  %v2341 = vand.u32 %v2335, 2147483648
  %v2342 = vsel %vm2340, %v2341, %v2339
  %v2343 = vadd.f32 %v2342, 1e-15
  %v2344 = vrcp.pop %v2343
  %v2345 = vmul.f32 %v2331, %v2344
  %2346 = vxpose.xlu0.b32.start [1/16] %v2343, 128
  %2347 = vxpose.xlu0.b32.cont [2/16] 0.0, 128
  %2348 = vxpose.xlu0.b32.cont [3/16] 0.0, 128
  %2349 = vxpose.xlu0.b32.cont [4/16] 0.0, 128
  %2350 = vxpose.xlu0.b32.cont [5/16] 0.0, 128
  %2351 = vxpose.xlu0.b32.cont [6/16] 0.0, 128
  %2352 = vxpose.xlu0.b32.cont [7/16] 0.0, 128
  %2353 = vxpose.xlu0.b32.cont [8/16] 0.0, 128
  %2354 = vxpose.xlu0.b32.cont [9/16] 0.0, 128
  %2355 = vxpose.xlu0.b32.cont [10/16] 0.0, 128
  %2356 = vxpose.xlu0.b32.cont [11/16] 0.0, 128
  %2357 = vxpose.xlu0.b32.cont [12/16] 0.0, 128
  %2358 = vxpose.xlu0.b32.cont [13/16] 0.0, 128
  %2359 = vxpose.xlu0.b32.cont [14/16] 0.0, 128
  %2360 = vxpose.xlu0.b32.cont [15/16] 0.0, 128
  %2361 = vxpose.xlu0.b32.end [16/16] 0.0, 128
  %v2362 = vpop.trf.xlu0
  %v2363 = vpop.trf.xlu0
  %v2364 = vpop.trf.xlu0
  %v2365 = vpop.trf.xlu0
  %v2366 = vpop.trf.xlu0
  %v2367 = vpop.trf.xlu0
  %v2368 = vpop.trf.xlu0
  %v2369 = vpop.trf.xlu0
  %v2370 = vpop.trf.xlu0
  %v2371 = vpop.trf.xlu0
  %v2372 = vpop.trf.xlu0
  %v2373 = vpop.trf.xlu0
  %v2374 = vpop.trf.xlu0
  %v2375 = vpop.trf.xlu0
  %v2376 = vpop.trf.xlu0
  %v2377 = vpop.trf.xlu0
  %v2378 = vlaneseq
  %v2379 = vshrl.u32 %v2378, 7
  %v2380 = vsub.s32 0, %v2379
  %v2381 = vrot.slane %v2362, %v2380
  %v2382 = vrcp.pop %v2381
  %v2383 = vmul.f32 %v2345, %v2382
  %v2385 = vsel %vm1422, %v2383, 0
  %vm2387 = vcmask 1043456
  %v2388 = vsel %vm2387, %v2253, 0
  %2390 = vmatprep.subr.mxu0 0.0
  %2391 = vmatpush1.msra.mxu0 %v2388
  %2392 = vmatprep.subr.mxu0 0.0
  %2393 = vmatpush1.msra.mxu0 0.0
  %2394 = vmatprep.subr.mxu0 0.0
  %2395 = vmatpush1.msra.mxu0 0.0
  %2396 = vmatprep.subr.mxu0 0.0
  %2397 = vmatpush1.msra.mxu0 0.0
  %2398 = vmatprep.subr.mxu0 0.0
  %2399 = vmatpush1.msra.mxu0 0.0
  %2400 = vmatprep.subr.mxu0 0.0
  %2401 = vmatpush1.msra.mxu0 0.0
  %2402 = vmatprep.subr.mxu0 0.0
  %2403 = vmatpush1.msra.mxu0 0.0
  %2404 = vmatprep.subr.mxu0 0.0
  %2405 = vmatpush1.msra.mxu0 0.0
  %2406 = vmatprep.subr.mxu0 0.0
  %2407 = vmatpush1.msra.mxu0 0.0
  %2408 = vmatprep.subr.mxu0 0.0
  %2409 = vmatpush1.msra.mxu0 0.0
  %2410 = vmatprep.subr.mxu0 0.0
  %2411 = vmatpush1.msra.mxu0 0.0
  %2412 = vmatprep.subr.mxu0 0.0
  %2413 = vmatpush1.msra.mxu0 0.0
  %2414 = vmatprep.subr.mxu0 0.0
  %2415 = vmatpush1.msra.mxu0 0.0
  %2416 = vmatprep.subr.mxu0 0.0
  %2417 = vmatpush1.msra.mxu0 0.0
  %2418 = vmatprep.subr.mxu0 0.0
  %2419 = vmatpush1.msra.mxu0 0.0
  %2420 = vmatprep.subr.mxu0 0.0
  %2421 = vmatpush1.msra.mxu0 0.0
  %2422 = vmatprep.subr.mxu0 0.0
  %2423 = vmatpush1.msra.mxu0 0.0
  %2424 = vmatprep.subr.mxu0 0.0
  %2425 = vmatpush1.msra.mxu0 0.0
  %2426 = vmatprep.subr.mxu0 0.0
  %2427 = vmatpush1.msra.mxu0 0.0
  %2428 = vmatprep.subr.mxu0 0.0
  %2429 = vmatpush1.msra.mxu0 0.0
  %2430 = vmatprep.subr.mxu0 0.0
  %2431 = vmatpush1.msra.mxu0 0.0
  %2432 = vmatprep.subr.mxu0 0.0
  %2433 = vmatpush1.msra.mxu0 0.0
  %2434 = vmatprep.subr.mxu0 0.0
  %2435 = vmatpush1.msra.mxu0 0.0
  %2436 = vmatprep.subr.mxu0 0.0
  %2437 = vmatpush1.msra.mxu0 0.0
  %2438 = vmatprep.subr.mxu0 0.0
  %2439 = vmatpush1.msra.mxu0 0.0
  %2440 = vmatprep.subr.mxu0 0.0
  %2441 = vmatpush1.msra.mxu0 0.0
  %2442 = vmatprep.subr.mxu0 0.0
  %2443 = vmatpush1.msra.mxu0 0.0
  %2444 = vmatprep.subr.mxu0 0.0
  %2445 = vmatpush1.msra.mxu0 0.0
  %2446 = vmatprep.subr.mxu0 0.0
  %2447 = vmatpush1.msra.mxu0 0.0
  %2448 = vmatprep.subr.mxu0 0.0
  %2449 = vmatpush1.msra.mxu0 0.0
  %2450 = vmatprep.subr.mxu0 0.0
  %2451 = vmatpush1.msra.mxu0 0.0
  %2452 = vmatprep.subr.mxu0 0.0
  %2453 = vmatpush1.msra.mxu0 0.0
  %2454 = vmatprep.mubr.f32.mxu0 0.0
  %2455 = vmatmul.mubr.f32.gmra.mrb[0].mxu0 %v2385
  %v2456 = vpop.f32.mrb[0].mxu0
  %v2457 = vadd.f32 0.0, %v2456
  %v2458 = vpop.f32.mrb[0].mxu0
  %2459 = vdwg.mxu0
  %2460 = vrot.lane.b32.xlu0 %v2253, 32
  %v2461 = vpop.permute.xlu0 %2460
  %v2463 = vsel %vm162, %v2457, %v2461
  %v2464 = vlaneseq
  %v2465 = vshrl.u32 %v2464, 7
  %v2466 = vsub.s32 7, %v2465
  %v2467 = vrot.slane %v47, %v2466
  %2476 = vrot.lane.b32.xlu0 %v39, 96
  %v2477 = vpop.permute.xlu0 %2476
  %2478 = vrot.lane.b32.xlu0 %v40, 96
  %v2479 = vpop.permute.xlu0 %2478
  %2480 = vrot.lane.b32.xlu0 %v41, 96
  %v2481 = vpop.permute.xlu0 %2480
  %2482 = vrot.lane.b32.xlu0 %v42, 96
  %v2483 = vpop.permute.xlu0 %2482
  %2484 = vrot.lane.b32.xlu0 %v43, 96
  %v2485 = vpop.permute.xlu0 %2484
  %2486 = vrot.lane.b32.xlu0 %v44, 96
  %v2487 = vpop.permute.xlu0 %2486
  %2488 = vrot.lane.b32.xlu0 %v45, 96
  %v2489 = vpop.permute.xlu0 %2488
  %2490 = vrot.lane.b32.xlu0 %v46, 96
  %v2491 = vpop.permute.xlu0 %2490
  %v2501 = vsel %vm1784, %v2463, 0
  %2503 = vmatprep.subr.mxu0 0.0
  %2504 = vmatpush1.msra.mxu0 %v2477
  %2505 = vmatprep.subr.mxu0 0.0
  %2506 = vmatpush1.msra.mxu0 %v2479
  %2507 = vmatprep.subr.mxu0 0.0
  %2508 = vmatpush1.msra.mxu0 %v2481
  %2509 = vmatprep.subr.mxu0 0.0
  %2510 = vmatpush1.msra.mxu0 %v2483
  %2511 = vmatprep.subr.mxu0 0.0
  %2512 = vmatpush1.msra.mxu0 %v2485
  %2513 = vmatprep.subr.mxu0 0.0
  %2514 = vmatpush1.msra.mxu0 %v2487
  %2515 = vmatprep.subr.mxu0 0.0
  %2516 = vmatpush1.msra.mxu0 %v2489
  %2517 = vmatprep.subr.mxu0 0.0
  %2518 = vmatpush1.msra.mxu0 %v2491
  %2519 = vmatprep.subr.mxu0 0.0
  %2520 = vmatpush1.msra.mxu0 0.0
  %2521 = vmatprep.subr.mxu0 0.0
  %2522 = vmatpush1.msra.mxu0 0.0
  %2523 = vmatprep.subr.mxu0 0.0
  %2524 = vmatpush1.msra.mxu0 0.0
  %2525 = vmatprep.subr.mxu0 0.0
  %2526 = vmatpush1.msra.mxu0 0.0
  %2527 = vmatprep.subr.mxu0 0.0
  %2528 = vmatpush1.msra.mxu0 0.0
  %2529 = vmatprep.subr.mxu0 0.0
  %2530 = vmatpush1.msra.mxu0 0.0
  %2531 = vmatprep.subr.mxu0 0.0
  %2532 = vmatpush1.msra.mxu0 0.0
  %2533 = vmatprep.subr.mxu0 0.0
  %2534 = vmatpush1.msra.mxu0 0.0
  %2535 = vmatprep.subr.mxu0 0.0
  %2536 = vmatpush1.msra.mxu0 0.0
  %2537 = vmatprep.subr.mxu0 0.0
  %2538 = vmatpush1.msra.mxu0 0.0
  %2539 = vmatprep.subr.mxu0 0.0
  %2540 = vmatpush1.msra.mxu0 0.0
  %2541 = vmatprep.subr.mxu0 0.0
  %2542 = vmatpush1.msra.mxu0 0.0
  %2543 = vmatprep.subr.mxu0 0.0
  %2544 = vmatpush1.msra.mxu0 0.0
  %2545 = vmatprep.subr.mxu0 0.0
  %2546 = vmatpush1.msra.mxu0 0.0
  %2547 = vmatprep.subr.mxu0 0.0
  %2548 = vmatpush1.msra.mxu0 0.0
  %2549 = vmatprep.subr.mxu0 0.0
  %2550 = vmatpush1.msra.mxu0 0.0
  %2551 = vmatprep.subr.mxu0 0.0
  %2552 = vmatpush1.msra.mxu0 0.0
  %2553 = vmatprep.subr.mxu0 0.0
  %2554 = vmatpush1.msra.mxu0 0.0
  %2555 = vmatprep.subr.mxu0 0.0
  %2556 = vmatpush1.msra.mxu0 0.0
  %2557 = vmatprep.subr.mxu0 0.0
  %2558 = vmatpush1.msra.mxu0 0.0
  %2559 = vmatprep.subr.mxu0 0.0
  %2560 = vmatpush1.msra.mxu0 0.0
  %2561 = vmatprep.subr.mxu0 0.0
  %2562 = vmatpush1.msra.mxu0 0.0
  %2563 = vmatprep.subr.mxu0 0.0
  %2564 = vmatpush1.msra.mxu0 0.0
  %2565 = vmatprep.subr.mxu0 0.0
  %2566 = vmatpush1.msra.mxu0 0.0
  %2567 = vmatprep.mubr.f32.mxu0 0.0
  %2568 = vmatmul.mubr.f32.gmra.mrb[0].mxu0 %v2501
  %v2569 = vpop.f32.mrb[0].mxu0
  %v2570 = vadd.f32 %v2467, %v2569
  %v2571 = vpop.f32.mrb[0].mxu0
  %2572 = vdwg.mxu0
  %vm2573 = vcmask 257024
  %v2574 = vsel %vm2573, %v2570, 0.0
  %2575 = vadd.xlane.f32.xlu0 %v2574
  %v2576 = vpop.xlane.xlu0 %2575
  %2577 = vrot.lane.b32.xlu0 %v49, 106
  %v2578 = vpop.permute.xlu0 %2577
  %v2579 = vsel %vm1422, %v2578, 0
  %v2582 = vsel %vm2387, %v2576, 0
  %2584 = vmatprep.subr.mxu0 0.0
  %2585 = vmatpush1.msra.mxu0 %v2582
  %2586 = vmatprep.subr.mxu0 0.0
  %2587 = vmatpush1.msra.mxu0 0.0
  %2588 = vmatprep.subr.mxu0 0.0
  %2589 = vmatpush1.msra.mxu0 0.0
  %2590 = vmatprep.subr.mxu0 0.0
  %2591 = vmatpush1.msra.mxu0 0.0
  %2592 = vmatprep.subr.mxu0 0.0
  %2593 = vmatpush1.msra.mxu0 0.0
  %2594 = vmatprep.subr.mxu0 0.0
  %2595 = vmatpush1.msra.mxu0 0.0
  %2596 = vmatprep.subr.mxu0 0.0
  %2597 = vmatpush1.msra.mxu0 0.0
  %2598 = vmatprep.subr.mxu0 0.0
  %2599 = vmatpush1.msra.mxu0 0.0
  %2600 = vmatprep.subr.mxu0 0.0
  %2601 = vmatpush1.msra.mxu0 0.0
  %2602 = vmatprep.subr.mxu0 0.0
  %2603 = vmatpush1.msra.mxu0 0.0
  %2604 = vmatprep.subr.mxu0 0.0
  %2605 = vmatpush1.msra.mxu0 0.0
  %2606 = vmatprep.subr.mxu0 0.0
  %2607 = vmatpush1.msra.mxu0 0.0
  %2608 = vmatprep.subr.mxu0 0.0
  %2609 = vmatpush1.msra.mxu0 0.0
  %2610 = vmatprep.subr.mxu0 0.0
  %2611 = vmatpush1.msra.mxu0 0.0
  %2612 = vmatprep.subr.mxu0 0.0
  %2613 = vmatpush1.msra.mxu0 0.0
  %2614 = vmatprep.subr.mxu0 0.0
  %2615 = vmatpush1.msra.mxu0 0.0
  %2616 = vmatprep.subr.mxu0 0.0
  %2617 = vmatpush1.msra.mxu0 0.0
  %2618 = vmatprep.subr.mxu0 0.0
  %2619 = vmatpush1.msra.mxu0 0.0
  %2620 = vmatprep.subr.mxu0 0.0
  %2621 = vmatpush1.msra.mxu0 0.0
  %2622 = vmatprep.subr.mxu0 0.0
  %2623 = vmatpush1.msra.mxu0 0.0
  %2624 = vmatprep.subr.mxu0 0.0
  %2625 = vmatpush1.msra.mxu0 0.0
  %2626 = vmatprep.subr.mxu0 0.0
  %2627 = vmatpush1.msra.mxu0 0.0
  %2628 = vmatprep.subr.mxu0 0.0
  %2629 = vmatpush1.msra.mxu0 0.0
  %2630 = vmatprep.subr.mxu0 0.0
  %2631 = vmatpush1.msra.mxu0 0.0
  %2632 = vmatprep.subr.mxu0 0.0
  %2633 = vmatpush1.msra.mxu0 0.0
  %2634 = vmatprep.subr.mxu0 0.0
  %2635 = vmatpush1.msra.mxu0 0.0
  %2636 = vmatprep.subr.mxu0 0.0
  %2637 = vmatpush1.msra.mxu0 0.0
  %2638 = vmatprep.subr.mxu0 0.0
  %2639 = vmatpush1.msra.mxu0 0.0
  %2640 = vmatprep.subr.mxu0 0.0
  %2641 = vmatpush1.msra.mxu0 0.0
  %2642 = vmatprep.subr.mxu0 0.0
  %2643 = vmatpush1.msra.mxu0 0.0
  %2644 = vmatprep.subr.mxu0 0.0
  %2645 = vmatpush1.msra.mxu0 0.0
  %2646 = vmatprep.subr.mxu0 0.0
  %2647 = vmatpush1.msra.mxu0 0.0
  %2648 = vmatprep.mubr.f32.mxu0 0.0
  %2649 = vmatmul.mubr.f32.gmra.mrb[0].mxu0 %v2579
  %v2650 = vpop.f32.mrb[0].mxu0
  %v2651 = vadd.f32 0.0, %v2650
  %v2652 = vpop.f32.mrb[0].mxu0
  %2653 = vdwg.mxu0
  %v2654 = vmul.f32 %v2651, 0.015625
  %2656 = vset.pattern.permute.xlu0 0
  %2657 = vperm.xlu0 %2656, %v2654
  %v2658 = vpop.permute.xlu0 %2657
  %v2660 = vsub.f32 %v2570, %v2658
  %v2661 = vmul.f32 %v2660, %v2660
  %v2662 = vsel %vm2573, %v2661, 0.0
  %2663 = vadd.xlane.f32.xlu0 %v2662
  %v2664 = vpop.xlane.xlu0 %2663
  %v2666 = vsel %vm2387, %v2664, 0
  %2668 = vmatprep.subr.mxu0 0.0
  %2669 = vmatpush1.msra.mxu0 %v2666
  %2670 = vmatprep.subr.mxu0 0.0
  %2671 = vmatpush1.msra.mxu0 0.0
  %2672 = vmatprep.subr.mxu0 0.0
  %2673 = vmatpush1.msra.mxu0 0.0
  %2674 = vmatprep.subr.mxu0 0.0
  %2675 = vmatpush1.msra.mxu0 0.0
  %2676 = vmatprep.subr.mxu0 0.0
  %2677 = vmatpush1.msra.mxu0 0.0
  %2678 = vmatprep.subr.mxu0 0.0
  %2679 = vmatpush1.msra.mxu0 0.0
  %2680 = vmatprep.subr.mxu0 0.0
  %2681 = vmatpush1.msra.mxu0 0.0
  %2682 = vmatprep.subr.mxu0 0.0
  %2683 = vmatpush1.msra.mxu0 0.0
  %2684 = vmatprep.subr.mxu0 0.0
  %2685 = vmatpush1.msra.mxu0 0.0
  %2686 = vmatprep.subr.mxu0 0.0
  %2687 = vmatpush1.msra.mxu0 0.0
  %2688 = vmatprep.subr.mxu0 0.0
  %2689 = vmatpush1.msra.mxu0 0.0
  %2690 = vmatprep.subr.mxu0 0.0
  %2691 = vmatpush1.msra.mxu0 0.0
  %2692 = vmatprep.subr.mxu0 0.0
  %2693 = vmatpush1.msra.mxu0 0.0
  %2694 = vmatprep.subr.mxu0 0.0
  %2695 = vmatpush1.msra.mxu0 0.0
  %2696 = vmatprep.subr.mxu0 0.0
  %2697 = vmatpush1.msra.mxu0 0.0
  %2698 = vmatprep.subr.mxu0 0.0
  %2699 = vmatpush1.msra.mxu0 0.0
  %2700 = vmatprep.subr.mxu0 0.0
  %2701 = vmatpush1.msra.mxu0 0.0
  %2702 = vmatprep.subr.mxu0 0.0
  %2703 = vmatpush1.msra.mxu0 0.0
  %2704 = vmatprep.subr.mxu0 0.0
  %2705 = vmatpush1.msra.mxu0 0.0
  %2706 = vmatprep.subr.mxu0 0.0
  %2707 = vmatpush1.msra.mxu0 0.0
  %2708 = vmatprep.subr.mxu0 0.0
  %2709 = vmatpush1.msra.mxu0 0.0
  %2710 = vmatprep.subr.mxu0 0.0
  %2711 = vmatpush1.msra.mxu0 0.0
  %2712 = vmatprep.subr.mxu0 0.0
  %2713 = vmatpush1.msra.mxu0 0.0
  %2714 = vmatprep.subr.mxu0 0.0
  %2715 = vmatpush1.msra.mxu0 0.0
  %2716 = vmatprep.subr.mxu0 0.0
  %2717 = vmatpush1.msra.mxu0 0.0
  %2718 = vmatprep.subr.mxu0 0.0
  %2719 = vmatpush1.msra.mxu0 0.0
  %2720 = vmatprep.subr.mxu0 0.0
  %2721 = vmatpush1.msra.mxu0 0.0
  %2722 = vmatprep.subr.mxu0 0.0
  %2723 = vmatpush1.msra.mxu0 0.0
  %2724 = vmatprep.subr.mxu0 0.0
  %2725 = vmatpush1.msra.mxu0 0.0
  %2726 = vmatprep.subr.mxu0 0.0
  %2727 = vmatpush1.msra.mxu0 0.0
  %2728 = vmatprep.subr.mxu0 0.0
  %2729 = vmatpush1.msra.mxu0 0.0
  %2730 = vmatprep.subr.mxu0 0.0
  %2731 = vmatpush1.msra.mxu0 0.0
  %2732 = vmatprep.mubr.f32.mxu0 0.0
  %2733 = vmatmul.mubr.f32.gmra.mrb[0].mxu0 %v2579
  %v2734 = vpop.f32.mrb[0].mxu0
  %v2735 = vadd.f32 0.0, %v2734
  %v2736 = vpop.f32.mrb[0].mxu0
  %2737 = vdwg.mxu0
  %v2738 = vmul.f32 %v2735, 0.015625
  %v2739 = vadd.f32 %v2738, 1e-05
  %v2740 = vrsqrt.pop %v2739
  %2742 = vset.pattern.permute.xlu0 0
  %2743 = vperm.xlu0 %2742, %v2740
  %v2744 = vpop.permute.xlu0 %2743
  %v2746 = vmul.f32 %v2660, %v2744
  %2747 = vset.pattern.permute.xlu0 30
  %2748 = vperm.xlu0 %2747, %v49
  %v2749 = vpop.permute.xlu0 %2748
  %v2751 = vmul.f32 %v2746, %v2749
  %2752 = vset.pattern.permute.xlu0 31
  %2753 = vperm.xlu0 %2752, %v49
  %v2754 = vpop.permute.xlu0 %2753
  %v2756 = vadd.f32 %v2751, %v2754
  %v2757 = vmax.f32 %v2756, 0.0
  %v2758 = vlaneseq
  %v2759 = vshrl.u32 %v2758, 7
  %v2760 = vsub.s32 5, %v2759
  %v2761 = vrot.slane %v47, %v2760
  %2762 = vrot.lane.b32.xlu0 %v35, 117
  %v2763 = vpop.permute.xlu0 %2762
  %2764 = vrot.lane.b32.xlu0 %v36, 117
  %v2765 = vpop.permute.xlu0 %2764
  %2766 = vrot.lane.b32.xlu0 %v37, 117
  %v2767 = vpop.permute.xlu0 %2766
  %2768 = vrot.lane.b32.xlu0 %v38, 117
  %v2769 = vpop.permute.xlu0 %2768
  %v2775 = vsel %vm162, %v2757, 0
  %2777 = vmatprep.subr.mxu0 0.0
  %2778 = vmatpush1.msra.mxu0 %v2763
  %2779 = vmatprep.subr.mxu0 0.0
  %2780 = vmatpush1.msra.mxu0 %v2765
  %2781 = vmatprep.subr.mxu0 0.0
  %2782 = vmatpush1.msra.mxu0 %v2767
  %2783 = vmatprep.subr.mxu0 0.0
  %2784 = vmatpush1.msra.mxu0 %v2769
  %2785 = vmatprep.subr.mxu0 0.0
  %2786 = vmatpush1.msra.mxu0 0.0
  %2787 = vmatprep.subr.mxu0 0.0
  %2788 = vmatpush1.msra.mxu0 0.0
  %2789 = vmatprep.subr.mxu0 0.0
  %2790 = vmatpush1.msra.mxu0 0.0
  %2791 = vmatprep.subr.mxu0 0.0
  %2792 = vmatpush1.msra.mxu0 0.0
  %2793 = vmatprep.subr.mxu0 0.0
  %2794 = vmatpush1.msra.mxu0 0.0
  %2795 = vmatprep.subr.mxu0 0.0
  %2796 = vmatpush1.msra.mxu0 0.0
  %2797 = vmatprep.subr.mxu0 0.0
  %2798 = vmatpush1.msra.mxu0 0.0
  %2799 = vmatprep.subr.mxu0 0.0
  %2800 = vmatpush1.msra.mxu0 0.0
  %2801 = vmatprep.subr.mxu0 0.0
  %2802 = vmatpush1.msra.mxu0 0.0
  %2803 = vmatprep.subr.mxu0 0.0
  %2804 = vmatpush1.msra.mxu0 0.0
  %2805 = vmatprep.subr.mxu0 0.0
  %2806 = vmatpush1.msra.mxu0 0.0
  %2807 = vmatprep.subr.mxu0 0.0
  %2808 = vmatpush1.msra.mxu0 0.0
  %2809 = vmatprep.subr.mxu0 0.0
  %2810 = vmatpush1.msra.mxu0 0.0
  %2811 = vmatprep.subr.mxu0 0.0
  %2812 = vmatpush1.msra.mxu0 0.0
  %2813 = vmatprep.subr.mxu0 0.0
  %2814 = vmatpush1.msra.mxu0 0.0
  %2815 = vmatprep.subr.mxu0 0.0
  %2816 = vmatpush1.msra.mxu0 0.0
  %2817 = vmatprep.subr.mxu0 0.0
  %2818 = vmatpush1.msra.mxu0 0.0
  %2819 = vmatprep.subr.mxu0 0.0
  %2820 = vmatpush1.msra.mxu0 0.0
  %2821 = vmatprep.subr.mxu0 0.0
  %2822 = vmatpush1.msra.mxu0 0.0
  %2823 = vmatprep.subr.mxu0 0.0
  %2824 = vmatpush1.msra.mxu0 0.0
  %2825 = vmatprep.subr.mxu0 0.0
  %2826 = vmatpush1.msra.mxu0 0.0
  %2827 = vmatprep.subr.mxu0 0.0
  %2828 = vmatpush1.msra.mxu0 0.0
  %2829 = vmatprep.subr.mxu0 0.0
  %2830 = vmatpush1.msra.mxu0 0.0
  %2831 = vmatprep.subr.mxu0 0.0
  %2832 = vmatpush1.msra.mxu0 0.0
  %2833 = vmatprep.subr.mxu0 0.0
  %2834 = vmatpush1.msra.mxu0 0.0
  %2835 = vmatprep.subr.mxu0 0.0
  %2836 = vmatpush1.msra.mxu0 0.0
  %2837 = vmatprep.subr.mxu0 0.0
  %2838 = vmatpush1.msra.mxu0 0.0
  %2839 = vmatprep.subr.mxu0 0.0
  %2840 = vmatpush1.msra.mxu0 0.0
  %2841 = vmatprep.mubr.f32.mxu0 0.0
  %2842 = vmatmul.mubr.f32.gmra.mrb[0].mxu0 %v2775
  %v2843 = vpop.f32.mrb[0].mxu0
  %v2844 = vadd.f32 %v2761, %v2843
  %v2845 = vpop.f32.mrb[0].mxu0
  %2846 = vdwg.mxu0
  %v2847 = vsub.f32 %v2844, %v2844
  %v2848 = vmul.f32 %v2847, 1.442695
  %v2849 = vpow.pop %v2848
  %v2850 = vadd.f32 %v2849, 0.0
  %v2851 = vrcp.pop %v2850
  %v2852 = vmul.f32 %v2849, %v2851
  %2854 = vrot.lane.b32.xlu0 %v2852, 1
  %v2855 = vpop.permute.xlu0 %2854
  %vm2857 = vcmask 7168
  %v2858 = vsel %vm2857, %v2852, %v2855
  %2859 = vrot.lane.b32.xlu0 %v49, 116
  %v2860 = vpop.permute.xlu0 %2859
  %v2862 = vmul.f32 %v2858, %v2860
  %2863 = vxpose.xlu0.b32.start [1/16] %v2862, 128
  %2864 = vxpose.xlu0.b32.cont [2/16] 0.0, 128
  %2865 = vxpose.xlu0.b32.cont [3/16] 0.0, 128
  %2866 = vxpose.xlu0.b32.cont [4/16] 0.0, 128
  %2867 = vxpose.xlu0.b32.cont [5/16] 0.0, 128
  %2868 = vxpose.xlu0.b32.cont [6/16] 0.0, 128
  %2869 = vxpose.xlu0.b32.cont [7/16] 0.0, 128
  %2870 = vxpose.xlu0.b32.cont [8/16] 0.0, 128
  %2871 = vxpose.xlu0.b32.cont [9/16] 0.0, 128
  %2872 = vxpose.xlu0.b32.cont [10/16] 0.0, 128
  %2873 = vxpose.xlu0.b32.cont [11/16] 0.0, 128
  %2874 = vxpose.xlu0.b32.cont [12/16] 0.0, 128
  %2875 = vxpose.xlu0.b32.cont [13/16] 0.0, 128
  %2876 = vxpose.xlu0.b32.cont [14/16] 0.0, 128
  %2877 = vxpose.xlu0.b32.cont [15/16] 0.0, 128
  %2878 = vxpose.xlu0.b32.end [16/16] 0.0, 128
  %v2879 = vpop.trf.xlu0
  %v2880 = vpop.trf.xlu0
  %v2881 = vpop.trf.xlu0
  %v2882 = vpop.trf.xlu0
  %v2883 = vpop.trf.xlu0
  %v2884 = vpop.trf.xlu0
  %v2885 = vpop.trf.xlu0
  %v2886 = vpop.trf.xlu0
  %v2887 = vpop.trf.xlu0
  %v2888 = vpop.trf.xlu0
  %v2889 = vpop.trf.xlu0
  %v2890 = vpop.trf.xlu0
  %v2891 = vpop.trf.xlu0
  %v2892 = vpop.trf.xlu0
  %v2893 = vpop.trf.xlu0
  %v2894 = vpop.trf.xlu0
  %v2896 = vsel %vm1422, %v2879, 0
  %v2898 = vsel %vm2387, %v2757, 0
  %2900 = vmatprep.subr.mxu0 0.0
  %2901 = vmatpush1.msra.mxu0 %v2898
  %2902 = vmatprep.subr.mxu0 0.0
  %2903 = vmatpush1.msra.mxu0 0.0
  %2904 = vmatprep.subr.mxu0 0.0
  %2905 = vmatpush1.msra.mxu0 0.0
  %2906 = vmatprep.subr.mxu0 0.0
  %2907 = vmatpush1.msra.mxu0 0.0
  %2908 = vmatprep.subr.mxu0 0.0
  %2909 = vmatpush1.msra.mxu0 0.0
  %2910 = vmatprep.subr.mxu0 0.0
  %2911 = vmatpush1.msra.mxu0 0.0
  %2912 = vmatprep.subr.mxu0 0.0
  %2913 = vmatpush1.msra.mxu0 0.0
  %2914 = vmatprep.subr.mxu0 0.0
  %2915 = vmatpush1.msra.mxu0 0.0
  %2916 = vmatprep.subr.mxu0 0.0
  %2917 = vmatpush1.msra.mxu0 0.0
  %2918 = vmatprep.subr.mxu0 0.0
  %2919 = vmatpush1.msra.mxu0 0.0
  %2920 = vmatprep.subr.mxu0 0.0
  %2921 = vmatpush1.msra.mxu0 0.0
  %2922 = vmatprep.subr.mxu0 0.0
  %2923 = vmatpush1.msra.mxu0 0.0
  %2924 = vmatprep.subr.mxu0 0.0
  %2925 = vmatpush1.msra.mxu0 0.0
  %2926 = vmatprep.subr.mxu0 0.0
  %2927 = vmatpush1.msra.mxu0 0.0
  %2928 = vmatprep.subr.mxu0 0.0
  %2929 = vmatpush1.msra.mxu0 0.0
  %2930 = vmatprep.subr.mxu0 0.0
  %2931 = vmatpush1.msra.mxu0 0.0
  %2932 = vmatprep.subr.mxu0 0.0
  %2933 = vmatpush1.msra.mxu0 0.0
  %2934 = vmatprep.subr.mxu0 0.0
  %2935 = vmatpush1.msra.mxu0 0.0
  %2936 = vmatprep.subr.mxu0 0.0
  %2937 = vmatpush1.msra.mxu0 0.0
  %2938 = vmatprep.subr.mxu0 0.0
  %2939 = vmatpush1.msra.mxu0 0.0
  %2940 = vmatprep.subr.mxu0 0.0
  %2941 = vmatpush1.msra.mxu0 0.0
  %2942 = vmatprep.subr.mxu0 0.0
  %2943 = vmatpush1.msra.mxu0 0.0
  %2944 = vmatprep.subr.mxu0 0.0
  %2945 = vmatpush1.msra.mxu0 0.0
  %2946 = vmatprep.subr.mxu0 0.0
  %2947 = vmatpush1.msra.mxu0 0.0
  %2948 = vmatprep.subr.mxu0 0.0
  %2949 = vmatpush1.msra.mxu0 0.0
  %2950 = vmatprep.subr.mxu0 0.0
  %2951 = vmatpush1.msra.mxu0 0.0
  %2952 = vmatprep.subr.mxu0 0.0
  %2953 = vmatpush1.msra.mxu0 0.0
  %2954 = vmatprep.subr.mxu0 0.0
  %2955 = vmatpush1.msra.mxu0 0.0
  %2956 = vmatprep.subr.mxu0 0.0
  %2957 = vmatpush1.msra.mxu0 0.0
  %2958 = vmatprep.subr.mxu0 0.0
  %2959 = vmatpush1.msra.mxu0 0.0
  %2960 = vmatprep.subr.mxu0 0.0
  %2961 = vmatpush1.msra.mxu0 0.0
  %2962 = vmatprep.subr.mxu0 0.0
  %2963 = vmatpush1.msra.mxu0 0.0
  %2964 = vmatprep.mubr.f32.mxu0 0.0
  %2965 = vmatmul.mubr.f32.gmra.mrb[0].mxu0 %v2896
  %v2966 = vpop.f32.mrb[0].mxu0
  %v2967 = vadd.f32 0.0, %v2966
  %v2968 = vpop.f32.mrb[0].mxu0
  %2969 = vdwg.mxu0
  %2970 = vrot.lane.b32.xlu0 %v49, 102
  %v2971 = vpop.permute.xlu0 %2970
  %v2972 = vsel %vm2126, %v2971, 0
  %vm2974 = vcmask 1041408
  %v2976 = vsel %vm2974, %v2967, 0
  %2978 = vmatprep.subr.mxu0 0.0
  %2979 = vmatpush1.msra.mxu0 %v2976
  %2980 = vmatprep.subr.mxu0 0.0
  %2981 = vmatpush1.msra.mxu0 0.0
  %2982 = vmatprep.subr.mxu0 0.0
  %2983 = vmatpush1.msra.mxu0 0.0
  %2984 = vmatprep.subr.mxu0 0.0
  %2985 = vmatpush1.msra.mxu0 0.0
  %2986 = vmatprep.subr.mxu0 0.0
  %2987 = vmatpush1.msra.mxu0 0.0
  %2988 = vmatprep.subr.mxu0 0.0
  %2989 = vmatpush1.msra.mxu0 0.0
  %2990 = vmatprep.subr.mxu0 0.0
  %2991 = vmatpush1.msra.mxu0 0.0
  %2992 = vmatprep.subr.mxu0 0.0
  %2993 = vmatpush1.msra.mxu0 0.0
  %2994 = vmatprep.subr.mxu0 0.0
  %2995 = vmatpush1.msra.mxu0 0.0
  %2996 = vmatprep.subr.mxu0 0.0
  %2997 = vmatpush1.msra.mxu0 0.0
  %2998 = vmatprep.subr.mxu0 0.0
  %2999 = vmatpush1.msra.mxu0 0.0
  %3000 = vmatprep.subr.mxu0 0.0
  %3001 = vmatpush1.msra.mxu0 0.0
  %3002 = vmatprep.subr.mxu0 0.0
  %3003 = vmatpush1.msra.mxu0 0.0
  %3004 = vmatprep.subr.mxu0 0.0
  %3005 = vmatpush1.msra.mxu0 0.0
  %3006 = vmatprep.subr.mxu0 0.0
  %3007 = vmatpush1.msra.mxu0 0.0
  %3008 = vmatprep.subr.mxu0 0.0
  %3009 = vmatpush1.msra.mxu0 0.0
  %3010 = vmatprep.subr.mxu0 0.0
  %3011 = vmatpush1.msra.mxu0 0.0
  %3012 = vmatprep.subr.mxu0 0.0
  %3013 = vmatpush1.msra.mxu0 0.0
  %3014 = vmatprep.subr.mxu0 0.0
  %3015 = vmatpush1.msra.mxu0 0.0
  %3016 = vmatprep.subr.mxu0 0.0
  %3017 = vmatpush1.msra.mxu0 0.0
  %3018 = vmatprep.subr.mxu0 0.0
  %3019 = vmatpush1.msra.mxu0 0.0
  %3020 = vmatprep.subr.mxu0 0.0
  %3021 = vmatpush1.msra.mxu0 0.0
  %3022 = vmatprep.subr.mxu0 0.0
  %3023 = vmatpush1.msra.mxu0 0.0
  %3024 = vmatprep.subr.mxu0 0.0
  %3025 = vmatpush1.msra.mxu0 0.0
  %3026 = vmatprep.subr.mxu0 0.0
  %3027 = vmatpush1.msra.mxu0 0.0
  %3028 = vmatprep.subr.mxu0 0.0
  %3029 = vmatpush1.msra.mxu0 0.0
  %3030 = vmatprep.subr.mxu0 0.0
  %3031 = vmatpush1.msra.mxu0 0.0
  %3032 = vmatprep.subr.mxu0 0.0
  %3033 = vmatpush1.msra.mxu0 0.0
  %3034 = vmatprep.subr.mxu0 0.0
  %3035 = vmatpush1.msra.mxu0 0.0
  %3036 = vmatprep.subr.mxu0 0.0
  %3037 = vmatpush1.msra.mxu0 0.0
  %3038 = vmatprep.subr.mxu0 0.0
  %3039 = vmatpush1.msra.mxu0 0.0
  %3040 = vmatprep.subr.mxu0 0.0
  %3041 = vmatpush1.msra.mxu0 0.0
  %3042 = vmatprep.mubr.f32.mxu0 0.0
  %3043 = vmatmul.mubr.f32.gmra.mrb[0].mxu0 %v2972
  %v3044 = vpop.f32.mrb[0].mxu0
  %v3045 = vadd.f32 0.0, %v3044
  %v3046 = vpop.f32.mrb[0].mxu0
  %3047 = vdwg.mxu0
  %v3048 = vlaneseq
  %v3049 = vshrl.u32 %v3048, 7
  %v3050 = vsub.s32 0, %v3049
  %v3051 = vrot.slane %v48, %v3050
  %3052 = vrot.lane.b32.xlu0 %v35, 116
  %v3053 = vpop.permute.xlu0 %3052
  %3054 = vrot.lane.b32.xlu0 %v36, 116
  %v3055 = vpop.permute.xlu0 %3054
  %3056 = vrot.lane.b32.xlu0 %v37, 116
  %v3057 = vpop.permute.xlu0 %3056
  %3058 = vrot.lane.b32.xlu0 %v38, 116
  %v3059 = vpop.permute.xlu0 %3058
  %v3065 = vsel %vm162, %v3045, 0
  %3067 = vmatprep.subr.mxu0 0.0
  %3068 = vmatpush1.msra.mxu0 %v3053
  %3069 = vmatprep.subr.mxu0 0.0
  %3070 = vmatpush1.msra.mxu0 %v3055
  %3071 = vmatprep.subr.mxu0 0.0
  %3072 = vmatpush1.msra.mxu0 %v3057
  %3073 = vmatprep.subr.mxu0 0.0
  %3074 = vmatpush1.msra.mxu0 %v3059
  %3075 = vmatprep.subr.mxu0 0.0
  %3076 = vmatpush1.msra.mxu0 0.0
  %3077 = vmatprep.subr.mxu0 0.0
  %3078 = vmatpush1.msra.mxu0 0.0
  %3079 = vmatprep.subr.mxu0 0.0
  %3080 = vmatpush1.msra.mxu0 0.0
  %3081 = vmatprep.subr.mxu0 0.0
  %3082 = vmatpush1.msra.mxu0 0.0
  %3083 = vmatprep.subr.mxu0 0.0
  %3084 = vmatpush1.msra.mxu0 0.0
  %3085 = vmatprep.subr.mxu0 0.0
  %3086 = vmatpush1.msra.mxu0 0.0
  %3087 = vmatprep.subr.mxu0 0.0
  %3088 = vmatpush1.msra.mxu0 0.0
  %3089 = vmatprep.subr.mxu0 0.0
  %3090 = vmatpush1.msra.mxu0 0.0
  %3091 = vmatprep.subr.mxu0 0.0
  %3092 = vmatpush1.msra.mxu0 0.0
  %3093 = vmatprep.subr.mxu0 0.0
  %3094 = vmatpush1.msra.mxu0 0.0
  %3095 = vmatprep.subr.mxu0 0.0
  %3096 = vmatpush1.msra.mxu0 0.0
  %3097 = vmatprep.subr.mxu0 0.0
  %3098 = vmatpush1.msra.mxu0 0.0
  %3099 = vmatprep.subr.mxu0 0.0
  %3100 = vmatpush1.msra.mxu0 0.0
  %3101 = vmatprep.subr.mxu0 0.0
  %3102 = vmatpush1.msra.mxu0 0.0
  %3103 = vmatprep.subr.mxu0 0.0
  %3104 = vmatpush1.msra.mxu0 0.0
  %3105 = vmatprep.subr.mxu0 0.0
  %3106 = vmatpush1.msra.mxu0 0.0
  %3107 = vmatprep.subr.mxu0 0.0
  %3108 = vmatpush1.msra.mxu0 0.0
  %3109 = vmatprep.subr.mxu0 0.0
  %3110 = vmatpush1.msra.mxu0 0.0
  %3111 = vmatprep.subr.mxu0 0.0
  %3112 = vmatpush1.msra.mxu0 0.0
  %3113 = vmatprep.subr.mxu0 0.0
  %3114 = vmatpush1.msra.mxu0 0.0
  %3115 = vmatprep.subr.mxu0 0.0
  %3116 = vmatpush1.msra.mxu0 0.0
  %3117 = vmatprep.subr.mxu0 0.0
  %3118 = vmatpush1.msra.mxu0 0.0
  %3119 = vmatprep.subr.mxu0 0.0
  %3120 = vmatpush1.msra.mxu0 0.0
  %3121 = vmatprep.subr.mxu0 0.0
  %3122 = vmatpush1.msra.mxu0 0.0
  %3123 = vmatprep.subr.mxu0 0.0
  %3124 = vmatpush1.msra.mxu0 0.0
  %3125 = vmatprep.subr.mxu0 0.0
  %3126 = vmatpush1.msra.mxu0 0.0
  %3127 = vmatprep.subr.mxu0 0.0
  %3128 = vmatpush1.msra.mxu0 0.0
  %3129 = vmatprep.subr.mxu0 0.0
  %3130 = vmatpush1.msra.mxu0 0.0
  %3131 = vmatprep.mubr.f32.mxu0 0.0
  %3132 = vmatmul.mubr.f32.gmra.mrb[0].mxu0 %v3065
  %v3133 = vpop.f32.mrb[0].mxu0
  %v3134 = vadd.f32 %v3051, %v3133
  %v3135 = vpop.f32.mrb[0].mxu0
  %3136 = vdwg.mxu0
  %v3137 = vmax.f32 %v3134, 0.0
  %v3138 = vlaneseq
  %v3139 = vshrl.u32 %v3138, 7
  %v3140 = vsub.s32 1, %v3139
  %v3141 = vrot.slane %v48, %v3140
  %3142 = vrot.lane.b32.xlu0 %v35, 84
  %v3143 = vpop.permute.xlu0 %3142
  %3144 = vrot.lane.b32.xlu0 %v36, 84
  %v3145 = vpop.permute.xlu0 %3144
  %3146 = vrot.lane.b32.xlu0 %v37, 84
  %v3147 = vpop.permute.xlu0 %3146
  %3148 = vrot.lane.b32.xlu0 %v38, 84
  %v3149 = vpop.permute.xlu0 %3148
  %v3155 = vsel %vm162, %v3137, 0
  %3157 = vmatprep.subr.mxu0 0.0
  %3158 = vmatpush1.msra.mxu0 %v3143
  %3159 = vmatprep.subr.mxu0 0.0
  %3160 = vmatpush1.msra.mxu0 %v3145
  %3161 = vmatprep.subr.mxu0 0.0
  %3162 = vmatpush1.msra.mxu0 %v3147
  %3163 = vmatprep.subr.mxu0 0.0
  %3164 = vmatpush1.msra.mxu0 %v3149
  %3165 = vmatprep.subr.mxu0 0.0
  %3166 = vmatpush1.msra.mxu0 0.0
  %3167 = vmatprep.subr.mxu0 0.0
  %3168 = vmatpush1.msra.mxu0 0.0
  %3169 = vmatprep.subr.mxu0 0.0
  %3170 = vmatpush1.msra.mxu0 0.0
  %3171 = vmatprep.subr.mxu0 0.0
  %3172 = vmatpush1.msra.mxu0 0.0
  %3173 = vmatprep.subr.mxu0 0.0
  %3174 = vmatpush1.msra.mxu0 0.0
  %3175 = vmatprep.subr.mxu0 0.0
  %3176 = vmatpush1.msra.mxu0 0.0
  %3177 = vmatprep.subr.mxu0 0.0
  %3178 = vmatpush1.msra.mxu0 0.0
  %3179 = vmatprep.subr.mxu0 0.0
  %3180 = vmatpush1.msra.mxu0 0.0
  %3181 = vmatprep.subr.mxu0 0.0
  %3182 = vmatpush1.msra.mxu0 0.0
  %3183 = vmatprep.subr.mxu0 0.0
  %3184 = vmatpush1.msra.mxu0 0.0
  %3185 = vmatprep.subr.mxu0 0.0
  %3186 = vmatpush1.msra.mxu0 0.0
  %3187 = vmatprep.subr.mxu0 0.0
  %3188 = vmatpush1.msra.mxu0 0.0
  %3189 = vmatprep.subr.mxu0 0.0
  %3190 = vmatpush1.msra.mxu0 0.0
  %3191 = vmatprep.subr.mxu0 0.0
  %3192 = vmatpush1.msra.mxu0 0.0
  %3193 = vmatprep.subr.mxu0 0.0
  %3194 = vmatpush1.msra.mxu0 0.0
  %3195 = vmatprep.subr.mxu0 0.0
  %3196 = vmatpush1.msra.mxu0 0.0
  %3197 = vmatprep.subr.mxu0 0.0
  %3198 = vmatpush1.msra.mxu0 0.0
  %3199 = vmatprep.subr.mxu0 0.0
  %3200 = vmatpush1.msra.mxu0 0.0
  %3201 = vmatprep.subr.mxu0 0.0
  %3202 = vmatpush1.msra.mxu0 0.0
  %3203 = vmatprep.subr.mxu0 0.0
  %3204 = vmatpush1.msra.mxu0 0.0
  %3205 = vmatprep.subr.mxu0 0.0
  %3206 = vmatpush1.msra.mxu0 0.0
  %3207 = vmatprep.subr.mxu0 0.0
  %3208 = vmatpush1.msra.mxu0 0.0
  %3209 = vmatprep.subr.mxu0 0.0
  %3210 = vmatpush1.msra.mxu0 0.0
  %3211 = vmatprep.subr.mxu0 0.0
  %3212 = vmatpush1.msra.mxu0 0.0
  %3213 = vmatprep.subr.mxu0 0.0
  %3214 = vmatpush1.msra.mxu0 0.0
  %3215 = vmatprep.subr.mxu0 0.0
  %3216 = vmatpush1.msra.mxu0 0.0
  %3217 = vmatprep.subr.mxu0 0.0
  %3218 = vmatpush1.msra.mxu0 0.0
  %3219 = vmatprep.subr.mxu0 0.0
  %3220 = vmatpush1.msra.mxu0 0.0
  %3221 = vmatprep.mubr.f32.mxu0 0.0
  %3222 = vmatmul.mubr.f32.gmra.mrb[0].mxu0 %v3155
  %v3223 = vpop.f32.mrb[0].mxu0
  %v3224 = vadd.f32 %v3141, %v3223
  %v3225 = vpop.f32.mrb[0].mxu0
  %3226 = vdwg.mxu0
  %v3227 = vsub.f32 0.0, %v3224
  %v3228 = vmul.f32 %v3227, 1.442695
  %v3229 = vpow.pop %v3228
  %v3230 = vadd.f32 %v3229, 1.0
  %v3231 = vrcp.pop %v3230
  %v3232 = vmul.f32 1.0, %v3231
  %vm3233 = vcmask 1024
  %3234 = vst.msk [vmem:[%s10] sm:$0x3] %vm3233, %v3232
  // Predicated region
  $region42: #{model_forward.1} parent=0 // pred_check
    _
  $region43: #{model_forward.1} parent=0 // pred_check_branch
    %3236 = sbr.rel (0) target = $region45
  $region44: #{model_forward.1} parent=0 // pred_region
    _
  $region45: #{model_forward.1} parent=0 // pred_fallthru
    _
  // Predicated region
  $region46: #{model_forward.1} parent=0 // pred_check
    _
  $region47: #{model_forward.1} parent=0 // pred_check_branch
    %3238 = sbr.rel (0) target = $region49
  $region48: #{model_forward.1} parent=0 // pred_region
    _
  $region49: #{model_forward.1} parent=0 // pred_fallthru
    _

</llo_original>
